<compile_context>
chip_gen: v6e
topology: v6e:2x2x1
jax: 0.10.0
libtpu: 0.0.40
codegen_flags: <defaults>
</compile_context>

<pallas_src>
import functools

import jax
import jax.numpy as jnp
from jax.experimental import pallas as pl
from jax.experimental.pallas import tpu as pltpu

EPS = 1e-8


def _l2norm_regions(x3):
    # Matches PyTorch l2norm(X, dim=1): X / (sqrt(sum(X^2, dim=1)) + eps)
    return x3 * (1.0 / (jnp.sqrt(jnp.sum(x3 * x3, axis=1, keepdims=True)) + EPS))


def img_camera_kernel(head, n_regions, x_ref, wfc_ref, bfc_ref, wqkv_ref,
                      bqkv_ref, wo_ref, bo_ref, wg1_ref, wg2_ref, bg_ref,
                      out_ref):
    Bb, Np, img_dim = x_ref.shape
    D = wfc_ref.shape[1]
    dk = D // head
    cdt = wfc_ref.dtype                     # MXU input dtype (f32 or bf16)
    M = Bb * Np
    padded = Np != n_regions
    if padded:
        row_valid = (jax.lax.broadcasted_iota(jnp.int32, (Bb, Np, 1), 1)
                     < n_regions)

    # ---- fc: Linear(img_dim, emb_dim) on a (Bb*Np, img_dim) slab ------------
    x2 = x_ref[...].reshape(M, img_dim)
    emb = (jnp.dot(x2, wfc_ref[...], preferred_element_type=jnp.float32)
           + bfc_ref[...].astype(jnp.float32))

    # l2norm over the region axis (dim=1 of the (B, N, D) tensor).
    emb3 = emb.reshape(Bb, Np, D)
    if padded:
        emb3 = jnp.where(row_valid, emb3, 0.0)     # keep pad rows out of the norm
    emb3 = _l2norm_regions(emb3)
    emb = emb3.reshape(M, D)
    emb_c = emb.astype(cdt)

    # ---- GatedAttnLayer (single layer, mask=None) ---------------------------
    # Fused Q/K/V projection: one (M, D) x (D, 3D) matmul. 1/sqrt(dk) is already
    # folded into the Q columns/bias at prepare_params() time.
    qkv = (jnp.dot(emb_c, wqkv_ref[...], preferred_element_type=jnp.float32)
           + bqkv_ref[...].astype(jnp.float32))

    def split_heads(t2d):                    # (M, D) -> (Bb*head, Np, dk)
        t4 = jnp.transpose(t2d.reshape(Bb, Np, head, dk), (0, 2, 1, 3))
        return t4.reshape(Bb * head, Np, dk)

    q = split_heads(qkv[:, 0 * D:1 * D]).astype(cdt)
    k = split_heads(qkv[:, 1 * D:2 * D]).astype(cdt)
    v = split_heads(qkv[:, 2 * D:3 * D]).astype(cdt)

    # Head-batched scores: contraction over dk, batch over (Bb*head).
    s = jax.lax.dot_general(q, k, (((2,), (2,)), ((0,), (0,))),
                            preferred_element_type=jnp.float32)  # (Bb*h,Np,Np)
    if padded:
        key_valid = (jax.lax.broadcasted_iota(jnp.int32, (1, 1, Np), 2)
                     < n_regions)
        s = jnp.where(key_valid, s, jnp.float32(-1e30))
    s = s - jnp.max(s, axis=-1, keepdims=True)
    e = jnp.exp(s)
    p = e * pl.reciprocal(jnp.sum(e, axis=-1, keepdims=True), approx=True)

    o = jax.lax.dot_general(p.astype(cdt), v, (((2,), (1,)), ((0,), (0,))),
                            preferred_element_type=jnp.float32)  # (Bb*h,Np,dk)
    attn = jnp.transpose(o.reshape(Bb, head, Np, dk), (0, 2, 1, 3)).reshape(M, D)

    o_proj = (jnp.dot(attn.astype(cdt), wo_ref[...],
                      preferred_element_type=jnp.float32)
              + bo_ref[...].astype(jnp.float32))

    # Gate: sigmoid(emb @ wg1 + o @ wg2 + bg) -- no lane-axis concat.
    gate = jax.nn.sigmoid(
        jnp.dot(emb_c, wg1_ref[...], preferred_element_type=jnp.float32)
        + jnp.dot(o_proj.astype(cdt), wg2_ref[...],
                  preferred_element_type=jnp.float32)
        + bg_ref[...].astype(jnp.float32))
    ga_out = gate * o_proj                   # dropout identity (dp_rate=0)
    # -------------------------------------------------------------------------

    out3 = (emb + ga_out).reshape(Bb, Np, D)           # img_emb += GALayer(...)
    if padded:
        out3 = jnp.where(row_valid, out3, 0.0)
    out3 = _l2norm_regions(out3)                        # final l2norm(dim=1)
    out_ref[...] = out3.astype(out_ref.dtype)


def prepare_params(params, head, param_dtype=jnp.bfloat16):
    """One-time parameter prep: fuse Q/K/V, fold the attention scale, cast."""
    D = params["wfc"].shape[1]
    assert D % head == 0, "emb_dim must be divisible by head"
    scale = 1.0 / (float(D // head) ** 0.5)
    wqkv = jnp.concatenate(
        [params["wq"] * scale, params["wk"], params["wv"]], axis=1)
    bqkv = jnp.concatenate(
        [params["bq"] * scale, params["bk"], params["bv"]], axis=1)
    weights = {
        "wfc": params["wfc"], "wqkv": wqkv, "wo": params["wo"],
        "wg1": params["wg1"], "wg2": params["wg2"],
    }
    biases = {                                # biases stay f32 (tiny, added post-acc)
        "bfc": params["bfc"], "bqkv": bqkv, "bo": params["bo"],
        "bg": params["bg"],
    }
    out = {k: v.astype(param_dtype) for k, v in weights.items()}
    out.update({k: v.astype(jnp.float32) for k, v in biases.items()})
    return out


def _default_vmem_limit():
    try:
        cap = int(pltpu.get_tpu_info().vmem_capacity_bytes)
    except Exception:
        cap = 64 * 1024 * 1024
    return max(32 * 1024 * 1024, min((cap * 3) // 4, 112 * 1024 * 1024))


def img_camera_forward(x, prepped, head, *, batch_block=None):
    B, N, img_dim = x.shape
    D = prepped["wfc"].shape[1]
    cdt = prepped["wfc"].dtype

    # Cast the input once (halves the x block DMA for bf16) and pad the region
    # axis to a multiple of 8 so in-kernel reshapes are sublane-aligned.
    x = x.astype(cdt)
    Np = ((N + 7) // 8) * 8
    if Np != N:
        x = jnp.pad(x, ((0, 0), (0, Np - N), (0, 0)))

    # Batch blocking: target MXU M ~= 512 while keeping >= 4 grid steps
    # (2 per v7x TensorCore) when the batch allows it.
    if batch_block is None:
        bb_for_m = max(1, -(-512 // Np))
        bb_for_steps = max(1, B // 4)
        batch_block = max(1, min(bb_for_m, bb_for_steps, B))
    batch_block = max(1, min(batch_block, B))
    Bp = -(-B // batch_block) * batch_block
    if Bp != B:
        x = jnp.pad(x, ((0, Bp - B), (0, 0), (0, 0)))
    nblk = Bp // batch_block

    weight_names = ("wfc", "bfc", "wqkv", "bqkv", "wo", "bo", "wg1", "wg2", "bg")
    weights = [prepped[k] for k in weight_names]

    in_specs = [pl.BlockSpec((batch_block, Np, img_dim), lambda b: (b, 0, 0))]
    # Grid-invariant weights/biases: whole-array VMEM residents (no per-step
    # re-DMA, no double buffering).
    in_specs += [pl.BlockSpec(memory_space=pltpu.MemorySpace.VMEM)
                 for _ in weights]

    M = Bp * Np
    flops = int(2 * M * D * (img_dim + 6 * D) + 4 * Bp * Np * Np * D)
    transcendentals = int(Bp * head * Np * Np + M * D)
    bytes_accessed = int(
        x.size * x.dtype.itemsize
        + sum(int(w.size) * w.dtype.itemsize for w in weights)
        + M * D * 4)

    out = pl.pallas_call(
        functools.partial(img_camera_kernel, head, N),
        out_shape=jax.ShapeDtypeStruct((Bp, Np, D), jnp.float32),
        grid=(nblk,),
        in_specs=in_specs,
        out_specs=pl.BlockSpec((batch_block, Np, D), lambda b: (b, 0, 0)),
        compiler_params=pltpu.CompilerParams(
            dimension_semantics=("parallel",),
            vmem_limit_bytes=_default_vmem_limit(),
        ),
        cost_estimate=pl.CostEstimate(
            flops=flops,
            transcendentals=transcendentals,
            bytes_accessed=bytes_accessed),
    )(x, *weights)
    return out[:B, :N]


def init_params(key, img_dim, emb_dim):
    ks = jax.random.split(key, 13)

    def nrm(k, shape, scale):
        return scale * jax.random.normal(k, shape, dtype=jnp.float32)

    return {
        "wfc": nrm(ks[0], (img_dim, emb_dim), (2.0 / (img_dim + emb_dim)) ** 0.5),
        "bfc": nrm(ks[1], (1, emb_dim), 0.01),
        "wq":  nrm(ks[2], (emb_dim, emb_dim), (1.0 / emb_dim) ** 0.5),
        "bq":  nrm(ks[3], (1, emb_dim), 0.01),
        "wk":  nrm(ks[4], (emb_dim, emb_dim), (1.0 / emb_dim) ** 0.5),
        "bk":  nrm(ks[5], (1, emb_dim), 0.01),
        "wv":  nrm(ks[6], (emb_dim, emb_dim), (1.0 / emb_dim) ** 0.5),
        "bv":  nrm(ks[7], (1, emb_dim), 0.01),
        "wo":  nrm(ks[8], (emb_dim, emb_dim), (1.0 / emb_dim) ** 0.5),
        "bo":  nrm(ks[9], (1, emb_dim), 0.01),
        "wg1": nrm(ks[10], (emb_dim, emb_dim), (1.0 / emb_dim) ** 0.5),
        "wg2": nrm(ks[11], (emb_dim, emb_dim), (1.0 / emb_dim) ** 0.5),
        "bg":  nrm(ks[12], (1, emb_dim), 0.01),
    }


# ---------------------- pure-JAX reference (for checking) ----------------------
def _l2norm_ref(X, dim):
    norm = jnp.sqrt(jnp.sum(X * X, axis=dim, keepdims=True)) + EPS
    return X / norm


def reference_forward(x, p, head):
    emb = jnp.einsum("bni,ie->bne", x, p["wfc"]) + p["bfc"][0]
    emb = _l2norm_ref(emb, 1)
    q = emb @ p["wq"] + p["bq"][0]
    k = emb @ p["wk"] + p["bk"][0]
    v = emb @ p["wv"] + p["bv"][0]
    B, N, D = emb.shape
    dk = D // head
    qh = q.reshape(B, N, head, dk)
    kh = k.reshape(B, N, head, dk)
    vh = v.reshape(B, N, head, dk)
    s = jnp.einsum("bnhd,bmhd->bhnm", qh, kh) / (dk ** 0.5)
    a = jax.nn.softmax(s, axis=-1)
    o = jnp.einsum("bhnm,bmhd->bnhd", a, vh).reshape(B, N, D)
    o = o @ p["wo"] + p["bo"][0]
    gate = jax.nn.sigmoid(emb @ p["wg1"] + o @ p["wg2"] + p["bg"][0])
    emb = emb + gate * o
    emb = _l2norm_ref(emb, 1)
    return emb
# -------------------------------------------------------------------------------


if __name__ == "__main__":
    # Small synthetic shapes (lane-dense feature dims, multi-step grid).
    B, N, IMG_DIM, EMB_DIM, HEAD = 8, 8, 128, 128, 4

    key = jax.random.PRNGKey(0)
    kx, kx2, kp = jax.random.split(key, 3)
    images = jax.random.normal(kx, (B, N, IMG_DIM), dtype=jnp.float32)
    params = init_params(kp, IMG_DIM, EMB_DIM)

    ref = reference_forward(images, params, HEAD)

    # f32 weights (accuracy check) and bf16 weights (deployment-style compute).
    for dtype, tol in ((jnp.float32, 5e-2), (jnp.bfloat16, 5e-2)):
        prepped = prepare_params(params, HEAD, param_dtype=dtype)
        out = jax.block_until_ready(img_camera_forward(images, prepped, HEAD))
        assert out.shape == (B, N, EMB_DIM)
        assert bool(jnp.all(jnp.isfinite(out)))
        max_err = float(jnp.max(jnp.abs(out - ref)))
        assert max_err < tol, f"kernel/reference mismatch ({dtype}): {max_err}"

    # Ragged case (N not a multiple of 8, B not a multiple of the block):
    # exercises the region padding + softmax/l2norm masking path.
    B2, N2 = 5, 6
    images2 = jax.random.normal(kx2, (B2, N2, IMG_DIM), dtype=jnp.float32)
    ref2 = reference_forward(images2, params, HEAD)
    prepped32 = prepare_params(params, HEAD, param_dtype=jnp.float32)
    out2 = jax.block_until_ready(img_camera_forward(images2, prepped32, HEAD))
    assert out2.shape == (B2, N2, EMB_DIM)
    assert bool(jnp.all(jnp.isfinite(out2)))
    max_err2 = float(jnp.max(jnp.abs(out2 - ref2)))
    assert max_err2 < 5e-2, f"padded-path mismatch: {max_err2}"

    print("KERNEL_OK")
</pallas_src>

<mosaic_0001>
module attributes {stable_mosaic.version = 11 : i64} {
  func.func @img_camera_kernel(%arg0: i32, %arg1: memref<2x8x128xf32, #tpu.memory_space<vmem>>, %arg2: memref<128x128xf32, #tpu.memory_space<vmem>>, %arg3: memref<1x128xf32, #tpu.memory_space<vmem>>, %arg4: memref<128x384xf32, #tpu.memory_space<vmem>>, %arg5: memref<1x384xf32, #tpu.memory_space<vmem>>, %arg6: memref<128x128xf32, #tpu.memory_space<vmem>>, %arg7: memref<1x128xf32, #tpu.memory_space<vmem>>, %arg8: memref<128x128xf32, #tpu.memory_space<vmem>>, %arg9: memref<128x128xf32, #tpu.memory_space<vmem>>, %arg10: memref<1x128xf32, #tpu.memory_space<vmem>>, %arg11: memref<2x8x128xf32, #tpu.memory_space<vmem>>) attributes {dimension_semantics = [#tpu.dimension_semantics<parallel>], iteration_bounds = array<i64: 4>, scalar_prefetch = 0 : i64, scratch_operands = 0 : i64, tpu.core_type = #tpu.core_type<tc>, window_params = [{transform_indices = @transform_0, window_bounds = array<i64: 2, 8, 128>}, {pipeline_mode = #tpu.pipeline_mode<synchronous>, transform_indices = @transform_1, window_bounds = array<i64: 128, 128>}, {pipeline_mode = #tpu.pipeline_mode<synchronous>, transform_indices = @transform_2, window_bounds = array<i64: 1, 128>}, {pipeline_mode = #tpu.pipeline_mode<synchronous>, transform_indices = @transform_3, window_bounds = array<i64: 128, 384>}, {pipeline_mode = #tpu.pipeline_mode<synchronous>, transform_indices = @transform_4, window_bounds = array<i64: 1, 384>}, {pipeline_mode = #tpu.pipeline_mode<synchronous>, transform_indices = @transform_5, window_bounds = array<i64: 128, 128>}, {pipeline_mode = #tpu.pipeline_mode<synchronous>, transform_indices = @transform_6, window_bounds = array<i64: 1, 128>}, {pipeline_mode = #tpu.pipeline_mode<synchronous>, transform_indices = @transform_7, window_bounds = array<i64: 128, 128>}, {pipeline_mode = #tpu.pipeline_mode<synchronous>, transform_indices = @transform_8, window_bounds = array<i64: 128, 128>}, {pipeline_mode = #tpu.pipeline_mode<synchronous>, transform_indices = @transform_9, window_bounds = array<i64: 1, 128>}, {transform_indices = @transform_10, window_bounds = array<i64: 2, 8, 128>}]} {
    %c0 = arith.constant 0 : index
    %c0_0 = arith.constant 0 : index
    %c0_1 = arith.constant 0 : index
    %0 = vector.load %arg1[%c0, %c0_0, %c0_1] : memref<2x8x128xf32, #tpu.memory_space<vmem>>, vector<2x8x128xf32>
    %1 = vector.shape_cast %0 : vector<2x8x128xf32> to vector<16x128xf32>
    %c0_2 = arith.constant 0 : index
    %c0_3 = arith.constant 0 : index
    %2 = vector.load %arg2[%c0_2, %c0_3] : memref<128x128xf32, #tpu.memory_space<vmem>>, vector<128x128xf32>
    %cst = arith.constant dense<0.000000e+00> : vector<16x128xf32>
    %3 = tpu.matmul %1, %2, %cst {dimension_numbers = #tpu.dot_dimension_numbers<[1], [0], [0], [1], [0, 0, 1, 1], [], []>} : vector<16x128xf32>, vector<128x128xf32>, vector<16x128xf32> -> vector<16x128xf32>
    %c0_4 = arith.constant 0 : index
    %c0_5 = arith.constant 0 : index
    %4 = vector.load %arg3[%c0_4, %c0_5] : memref<1x128xf32, #tpu.memory_space<vmem>>, vector<1x128xf32>
    %5 = vector.broadcast %4 : vector<1x128xf32> to vector<16x128xf32>
    %6 = arith.addf %3, %5 : vector<16x128xf32>
    %7 = vector.shape_cast %6 : vector<16x128xf32> to vector<2x8x128xf32>
    %8 = arith.mulf %7, %7 : vector<2x8x128xf32>
    %cst_6 = arith.constant dense<0.000000e+00> : vector<2x128xf32>
    %9 = vector.multi_reduction <add>, %8, %cst_6 [1] : vector<2x8x128xf32> to vector<2x128xf32>
    %10 = vector.shape_cast %9 : vector<2x128xf32> to vector<2x1x128xf32>
    %11 = math.sqrt %10 : vector<2x1x128xf32>
    %cst_7 = arith.constant 9.99999993E-9 : f32
    %12 = vector.broadcast %cst_7 : f32 to vector<2x1x128xf32>
    %13 = arith.addf %11, %12 : vector<2x1x128xf32>
    %cst_8 = arith.constant 1.000000e+00 : f32
    %14 = vector.broadcast %cst_8 : f32 to vector<2x1x128xf32>
    %15 = arith.divf %14, %13 : vector<2x1x128xf32>
    %16 = vector.broadcast %15 : vector<2x1x128xf32> to vector<2x8x128xf32>
    %17 = arith.mulf %7, %16 : vector<2x8x128xf32>
    %18 = vector.shape_cast %17 : vector<2x8x128xf32> to vector<16x128xf32>
    %c0_9 = arith.constant 0 : index
    %c0_10 = arith.constant 0 : index
    %19 = vector.load %arg4[%c0_9, %c0_10] : memref<128x384xf32, #tpu.memory_space<vmem>>, vector<128x384xf32>
    %cst_11 = arith.constant dense<0.000000e+00> : vector<16x384xf32>
    %20 = tpu.matmul %18, %19, %cst_11 {dimension_numbers = #tpu.dot_dimension_numbers<[1], [0], [0], [1], [0, 0, 1, 1], [], []>} : vector<16x128xf32>, vector<128x384xf32>, vector<16x384xf32> -> vector<16x384xf32>
    %c0_12 = arith.constant 0 : index
    %c0_13 = arith.constant 0 : index
    %21 = vector.load %arg5[%c0_12, %c0_13] : memref<1x384xf32, #tpu.memory_space<vmem>>, vector<1x384xf32>
    %22 = vector.broadcast %21 : vector<1x384xf32> to vector<16x384xf32>
    %23 = arith.addf %20, %22 : vector<16x384xf32>
    %24 = vector.extract_strided_slice %23 {offsets = [0, 0], sizes = [16, 128], strides = [1, 1]} : vector<16x384xf32> to vector<16x128xf32>
    %25 = vector.shape_cast %24 : vector<16x128xf32> to vector<2x8x4x32xf32>
    %26 = tpu.transpose %25, [0, 2, 1, 3] : vector<2x8x4x32xf32> -> vector<2x4x8x32xf32>
    %27 = vector.shape_cast %26 : vector<2x4x8x32xf32> to vector<8x8x32xf32>
    %28 = vector.extract_strided_slice %23 {offsets = [0, 128], sizes = [16, 128], strides = [1, 1]} : vector<16x384xf32> to vector<16x128xf32>
    %29 = vector.shape_cast %28 : vector<16x128xf32> to vector<2x8x4x32xf32>
    %30 = tpu.transpose %29, [0, 2, 1, 3] : vector<2x8x4x32xf32> -> vector<2x4x8x32xf32>
    %31 = vector.shape_cast %30 : vector<2x4x8x32xf32> to vector<8x8x32xf32>
    %32 = vector.extract_strided_slice %23 {offsets = [0, 256], sizes = [16, 128], strides = [1, 1]} : vector<16x384xf32> to vector<16x128xf32>
    %33 = vector.shape_cast %32 : vector<16x128xf32> to vector<2x8x4x32xf32>
    %34 = tpu.transpose %33, [0, 2, 1, 3] : vector<2x8x4x32xf32> -> vector<2x4x8x32xf32>
    %35 = vector.shape_cast %34 : vector<2x4x8x32xf32> to vector<8x8x32xf32>
    %cst_14 = arith.constant dense<0.000000e+00> : vector<8x8x8xf32>
    %36 = tpu.matmul %27, %31, %cst_14 {dimension_numbers = #tpu.dot_dimension_numbers<[2], [2], [1], [1], [0, 0, 0, 1, 1, 1], [0], [0]>} : vector<8x8x32xf32>, vector<8x8x32xf32>, vector<8x8x8xf32> -> vector<8x8x8xf32>
    %cst_15 = arith.constant dense<0xFF800000> : vector<8x8xf32>
    %37 = vector.multi_reduction <maximumf>, %36, %cst_15 [2] : vector<8x8x8xf32> to vector<8x8xf32>
    %38 = vector.shape_cast %37 : vector<8x8xf32> to vector<8x8x1xf32>
    %39 = vector.broadcast %38 : vector<8x8x1xf32> to vector<8x8x8xf32>
    %40 = arith.subf %36, %39 : vector<8x8x8xf32>
    %41 = math.exp %40 : vector<8x8x8xf32>
    %cst_16 = arith.constant dense<0.000000e+00> : vector<8x8xf32>
    %42 = vector.multi_reduction <add>, %41, %cst_16 [2] : vector<8x8x8xf32> to vector<8x8xf32>
    %43 = vector.shape_cast %42 : vector<8x8xf32> to vector<8x8x1xf32>
    %44 = tpu.reciprocal %43 {approx = true} : vector<8x8x1xf32> -> vector<8x8x1xf32>
    %45 = vector.broadcast %44 : vector<8x8x1xf32> to vector<8x8x8xf32>
    %46 = arith.mulf %41, %45 : vector<8x8x8xf32>
    %cst_17 = arith.constant dense<0.000000e+00> : vector<8x8x32xf32>
    %47 = tpu.matmul %46, %35, %cst_17 {dimension_numbers = #tpu.dot_dimension_numbers<[2], [1], [1], [2], [0, 0, 0, 1, 1, 2], [0], [0]>} : vector<8x8x8xf32>, vector<8x8x32xf32>, vector<8x8x32xf32> -> vector<8x8x32xf32>
    %48 = vector.shape_cast %47 : vector<8x8x32xf32> to vector<2x4x8x32xf32>
    %49 = tpu.transpose %48, [0, 2, 1, 3] : vector<2x4x8x32xf32> -> vector<2x8x4x32xf32>
    %50 = vector.shape_cast %49 : vector<2x8x4x32xf32> to vector<16x128xf32>
    %c0_18 = arith.constant 0 : index
    %c0_19 = arith.constant 0 : index
    %51 = vector.load %arg6[%c0_18, %c0_19] : memref<128x128xf32, #tpu.memory_space<vmem>>, vector<128x128xf32>
    %cst_20 = arith.constant dense<0.000000e+00> : vector<16x128xf32>
    %52 = tpu.matmul %50, %51, %cst_20 {dimension_numbers = #tpu.dot_dimension_numbers<[1], [0], [0], [1], [0, 0, 1, 1], [], []>} : vector<16x128xf32>, vector<128x128xf32>, vector<16x128xf32> -> vector<16x128xf32>
    %c0_21 = arith.constant 0 : index
    %c0_22 = arith.constant 0 : index
    %53 = vector.load %arg7[%c0_21, %c0_22] : memref<1x128xf32, #tpu.memory_space<vmem>>, vector<1x128xf32>
    %54 = vector.broadcast %53 : vector<1x128xf32> to vector<16x128xf32>
    %55 = arith.addf %52, %54 : vector<16x128xf32>
    %c0_23 = arith.constant 0 : index
    %c0_24 = arith.constant 0 : index
    %56 = vector.load %arg8[%c0_23, %c0_24] : memref<128x128xf32, #tpu.memory_space<vmem>>, vector<128x128xf32>
    %cst_25 = arith.constant dense<0.000000e+00> : vector<16x128xf32>
    %57 = tpu.matmul %18, %56, %cst_25 {dimension_numbers = #tpu.dot_dimension_numbers<[1], [0], [0], [1], [0, 0, 1, 1], [], []>} : vector<16x128xf32>, vector<128x128xf32>, vector<16x128xf32> -> vector<16x128xf32>
    %c0_26 = arith.constant 0 : index
    %c0_27 = arith.constant 0 : index
    %58 = vector.load %arg9[%c0_26, %c0_27] : memref<128x128xf32, #tpu.memory_space<vmem>>, vector<128x128xf32>
    %cst_28 = arith.constant dense<0.000000e+00> : vector<16x128xf32>
    %59 = tpu.matmul %55, %58, %cst_28 {dimension_numbers = #tpu.dot_dimension_numbers<[1], [0], [0], [1], [0, 0, 1, 1], [], []>} : vector<16x128xf32>, vector<128x128xf32>, vector<16x128xf32> -> vector<16x128xf32>
    %60 = arith.addf %57, %59 : vector<16x128xf32>
    %c0_29 = arith.constant 0 : index
    %c0_30 = arith.constant 0 : index
    %61 = vector.load %arg10[%c0_29, %c0_30] : memref<1x128xf32, #tpu.memory_space<vmem>>, vector<1x128xf32>
    %62 = vector.broadcast %61 : vector<1x128xf32> to vector<16x128xf32>
    %63 = arith.addf %60, %62 : vector<16x128xf32>
    %64 = arith.negf %63 : vector<16x128xf32>
    %65 = math.exp %64 : vector<16x128xf32>
    %cst_31 = arith.constant 1.000000e+00 : f32
    %66 = vector.broadcast %cst_31 : f32 to vector<16x128xf32>
    %67 = arith.addf %66, %65 : vector<16x128xf32>
    %68 = arith.divf %66, %67 : vector<16x128xf32>
    %69 = arith.mulf %68, %55 : vector<16x128xf32>
    %70 = arith.addf %18, %69 : vector<16x128xf32>
    %71 = vector.shape_cast %70 : vector<16x128xf32> to vector<2x8x128xf32>
    %72 = arith.mulf %71, %71 : vector<2x8x128xf32>
    %cst_32 = arith.constant dense<0.000000e+00> : vector<2x128xf32>
    %73 = vector.multi_reduction <add>, %72, %cst_32 [1] : vector<2x8x128xf32> to vector<2x128xf32>
    %74 = vector.shape_cast %73 : vector<2x128xf32> to vector<2x1x128xf32>
    %75 = math.sqrt %74 : vector<2x1x128xf32>
    %cst_33 = arith.constant 9.99999993E-9 : f32
    %76 = vector.broadcast %cst_33 : f32 to vector<2x1x128xf32>
    %77 = arith.addf %75, %76 : vector<2x1x128xf32>
    %cst_34 = arith.constant 1.000000e+00 : f32
    %78 = vector.broadcast %cst_34 : f32 to vector<2x1x128xf32>
    %79 = arith.divf %78, %77 : vector<2x1x128xf32>
    %80 = vector.broadcast %79 : vector<2x1x128xf32> to vector<2x8x128xf32>
    %81 = arith.mulf %71, %80 : vector<2x8x128xf32>
    %c0_35 = arith.constant 0 : index
    %c0_36 = arith.constant 0 : index
    %c0_37 = arith.constant 0 : index
    %82 = vector.load %arg11[%c0_35, %c0_36, %c0_37] : memref<2x8x128xf32, #tpu.memory_space<vmem>>, vector<2x8x128xf32>
    tpu.vector_store %arg11[%c0_35, %c0_36, %c0_37], %81 {strides = array<i32>} : memref<2x8x128xf32, #tpu.memory_space<vmem>>, vector<2x8x128xf32>,
    return
  }
  func.func @transform_0(%arg0: i32) -> (i32, i32, i32) {
    %c0_i32 = arith.constant 0 : i32
    %c0_i32_0 = arith.constant 0 : i32
    %c0_i32_1 = arith.constant 0 : i32
    return %arg0, %c0_i32, %c0_i32_0 : i32, i32, i32
  }
  func.func @transform_1(%arg0: i32) -> (i32, i32) {
    %c0_i32 = arith.constant 0 : i32
    %c0_i32_0 = arith.constant 0 : i32
    %c0_i32_1 = arith.constant 0 : i32
    return %c0_i32, %c0_i32_0 : i32, i32
  }
  func.func @transform_2(%arg0: i32) -> (i32, i32) {
    %c0_i32 = arith.constant 0 : i32
    %c0_i32_0 = arith.constant 0 : i32
    %c0_i32_1 = arith.constant 0 : i32
    return %c0_i32, %c0_i32_0 : i32, i32
  }
  func.func @transform_3(%arg0: i32) -> (i32, i32) {
    %c0_i32 = arith.constant 0 : i32
    %c0_i32_0 = arith.constant 0 : i32
    %c0_i32_1 = arith.constant 0 : i32
    return %c0_i32, %c0_i32_0 : i32, i32
  }
  func.func @transform_4(%arg0: i32) -> (i32, i32) {
    %c0_i32 = arith.constant 0 : i32
    %c0_i32_0 = arith.constant 0 : i32
    %c0_i32_1 = arith.constant 0 : i32
    return %c0_i32, %c0_i32_0 : i32, i32
  }
  func.func @transform_5(%arg0: i32) -> (i32, i32) {
    %c0_i32 = arith.constant 0 : i32
    %c0_i32_0 = arith.constant 0 : i32
    %c0_i32_1 = arith.constant 0 : i32
    return %c0_i32, %c0_i32_0 : i32, i32
  }
  func.func @transform_6(%arg0: i32) -> (i32, i32) {
    %c0_i32 = arith.constant 0 : i32
    %c0_i32_0 = arith.constant 0 : i32
    %c0_i32_1 = arith.constant 0 : i32
    return %c0_i32, %c0_i32_0 : i32, i32
  }
  func.func @transform_7(%arg0: i32) -> (i32, i32) {
    %c0_i32 = arith.constant 0 : i32
    %c0_i32_0 = arith.constant 0 : i32
    %c0_i32_1 = arith.constant 0 : i32
    return %c0_i32, %c0_i32_0 : i32, i32
  }
  func.func @transform_8(%arg0: i32) -> (i32, i32) {
    %c0_i32 = arith.constant 0 : i32
    %c0_i32_0 = arith.constant 0 : i32
    %c0_i32_1 = arith.constant 0 : i32
    return %c0_i32, %c0_i32_0 : i32, i32
  }
  func.func @transform_9(%arg0: i32) -> (i32, i32) {
    %c0_i32 = arith.constant 0 : i32
    %c0_i32_0 = arith.constant 0 : i32
    %c0_i32_1 = arith.constant 0 : i32
    return %c0_i32, %c0_i32_0 : i32, i32
  }
  func.func @transform_10(%arg0: i32) -> (i32, i32, i32) {
    %c0_i32 = arith.constant 0 : i32
    %c0_i32_0 = arith.constant 0 : i32
    %c0_i32_1 = arith.constant 0 : i32
    return %arg0, %c0_i32, %c0_i32_0 : i32, i32, i32
  }
}

</mosaic_0001>

<llo_original>
// kernel: tpu_custom_call.1
$region0: #{tpu_custom_call.1}
  #allocation0 [shape = 'u32[]', space=smem, size = 0x4, offset = 0x4, fixed_abs, tag = 'smem constant byte address 0x4 - core index']
  #allocation1 [shape = 'u32[144,128]{1,0:T(1,128)}', space=vmem, size = 0x12000, scoped, tag = 'internal scratch']
  %s0 = inlined_call_operand.hbm [shape: f32[8,8,128], index: 0, kind: input, shape index: {}]
  %s1 = inlined_call_operand.hbm [shape: f32[128,128], index: 1, kind: input, shape index: {}]
  %s2 = inlined_call_operand.vmem [shape: f32[1,128], index: 2, kind: input, shape index: {}]
  %s3 = inlined_call_operand.hbm [shape: f32[128,384], index: 3, kind: input, shape index: {}]
  %s4 = inlined_call_operand.vmem [shape: f32[1,384], index: 4, kind: input, shape index: {}]
  %s5 = inlined_call_operand.hbm [shape: f32[128,128], index: 5, kind: input, shape index: {}]
  %s6 = inlined_call_operand.vmem [shape: f32[1,128], index: 6, kind: input, shape index: {}]
  %s7 = inlined_call_operand.hbm [shape: f32[128,128], index: 7, kind: input, shape index: {}]
  %s8 = inlined_call_operand.hbm [shape: f32[128,128], index: 8, kind: input, shape index: {}]
  %s9 = inlined_call_operand.vmem [shape: f32[1,128], index: 9, kind: input, shape index: {}]
  %s10 = inlined_call_operand.hbm [shape: f32[8,8,128], index: 10, kind: output, shape index: {}]
  %s11 = sld [smem:[#allocation0]]
  $region97: #{tpu_custom_call.1} parent=0
    _
  %s13 = ssub.s32 1, %s11
  %s14 = scalar_select 0, %s13, %s11
  $region1: #{tpu_custom_call.1} parent=0
    #allocation2 [shape = 'u8[16384]{0}', space=vmem, size = 0x4000, scoped, tag = 'input window, operand 0']
    #allocation3 [shape = 's32[2]{0}', space=sflag, size = 0x8, scoped, tag = 'scoped memory for tpu_custom_call.1']
    #allocation4 [shape = 's32[2]{0}', space=sflag, size = 0x8, scoped, tag = 'scoped memory for tpu_custom_call.1']
    #allocation5 [shape = 'u8[65536]{0}', space=vmem, size = 0x10000, scoped, tag = 'input window, operand 1, single buffered']
    #allocation6 [shape = 's32[1]{0}', space=sflag, size = 0x4, scoped, tag = 'scoped memory for tpu_custom_call.1']
    #allocation7 [shape = 'u8[196608]{0}', space=vmem, size = 0x30000, scoped, tag = 'input window, operand 3, single buffered']
    #allocation8 [shape = 'u8[65536]{0}', space=vmem, size = 0x10000, scoped, tag = 'input window, operand 5, single buffered']
    #allocation9 [shape = 's32[1]{0}', space=sflag, size = 0x4, scoped, tag = 'scoped memory for tpu_custom_call.1']
    #allocation10 [shape = 'u8[65536]{0}', space=vmem, size = 0x10000, scoped, tag = 'input window, operand 7, single buffered']
    #allocation11 [shape = 'u8[65536]{0}', space=vmem, size = 0x10000, scoped, tag = 'input window, operand 8, single buffered']
    #allocation12 [shape = 's32[1]{0}', space=sflag, size = 0x4, scoped, tag = 'scoped memory for tpu_custom_call.1']
    #allocation13 [shape = 'u8[16384]{0}', space=vmem, size = 0x4000, scoped, tag = 'output window, operand 0']
    %15 = vsyncpa [#allocation3], 0
    %s16 = scalar_lea.sflag [#allocation3], 1
    %17 = vsyncpa %s16, 0
    %18 = vsyncpa [#allocation6], 0
    %19 = vsyncpa [#allocation9], 0
    %20 = vsyncpa [#allocation12], 0
    %21 = vsyncpa [#allocation4], 0
    %s22 = scalar_lea.sflag [#allocation4], 1
    %23 = vsyncpa %s22, 0
    loop: start=0, step=1, limit=6
    $region2: #{tpu_custom_call.1} parent=1 // loop_pre_header
      _
    $region3: #{tpu_custom_call.1} parent=1 // loop_header
      %s25 = sphi 0, %s29
      %p26 = scmp.ge.s32.totalorder %s25, 6
      %s35 = sphi 0, %s37
      %s38 = sphi 0, %s35
      %s39 = sphi 0, %s38
      %s55 = sphi 0, %s39
      %s59 = sphi 0, %s59
      %s61 = sphi 0, %s59
      %s62 = sphi 0, %s61
      %s76 = sphi 0, %s62
      %s80 = sphi 0, %s80
      %s82 = sphi 0, %s80
      %s83 = sphi 0, %s82
      %s97 = sphi 0, %s83
      %s101 = sphi 0, %s101
      %s103 = sphi 0, %s101
      %s104 = sphi 0, %s103
      %s118 = sphi 0, %s104
      %s122 = sphi 0, %s122
      %s124 = sphi 0, %s122
      %s125 = sphi 0, %s124
      %s139 = sphi 0, %s125
      %s143 = sphi 0, %s143
      %s145 = sphi 0, %s143
      %s146 = sphi 0, %s145
      %s160 = sphi 0, %s146
      %s164 = sphi 0, %s164
      %s166 = sphi 0, %s164
      %s167 = sphi 0, %s166
      %s181 = sphi 0, %s167
      %s185 = sphi 0, %s185
      %s187 = sphi 0, %s185
      %s188 = sphi 0, %s187
      %s202 = sphi 0, %s188
      %s206 = sphi 0, %s206
      %s208 = sphi 0, %s206
      %s209 = sphi 0, %s208
      %s223 = sphi 0, %s209
      %s227 = sphi 0, %s227
      %s229 = sphi 0, %s227
      %s230 = sphi 0, %s229
      %s244 = sphi 0, %s230
      %s250 = sphi 0, %s252
      %s253 = sphi 0, %s250
      %s254 = sphi 0, %s253
      %s270 = sphi 0, %s254
    $region4: #{tpu_custom_call.1} parent=1 // loop_header_branch
      %28 = sbr.rel (%p26) target = $region8
    $region5: #{tpu_custom_call.1} parent=1 // loop_body
      %s30 = ssub.s32 %s25, 1
      %s31 = ssub.s32 %s25, 2
      %s32 = sadd.s32 %s25, 1
      %s33 = ssub.s32 %s25, %s32
      %p34 = scmp.eq.s32.totalorder %s33, 0
      %s36 = sadd.s32 %s35, 1
      %s37 = scalar_select %p34, %s35, %s36
      %p40 = pneg %p34
      %p41 = scmp.eq.s32.totalorder %s25, 3
      %p42 = por %p40, %p41
      %p43 = scmp.ne.s32.totalorder %s35, %s38
      %p44 = scmp.eq.s32.totalorder %s25, 0
      %p45 = por %p43, %p44
      %p46 = scmp.ne.s32.totalorder %s35, %s38
      %p47 = scmp.eq.s32.totalorder %s30, 3
      %p48 = por %p46, %p47
      %p49 = scmp.ne.s32.totalorder %s38, %s39
      %p50 = scmp.eq.s32.totalorder %s30, 0
      %p51 = por %p49, %p50
      %p52 = scmp.ne.s32.totalorder %s38, %s39
      %p53 = scmp.eq.s32.totalorder %s31, 3
      %p54 = por %p52, %p53
      %p56 = scmp.ne.s32.totalorder %s39, %s55
      %p57 = scmp.eq.s32.totalorder %s31, 0
      %p58 = por %p56, %p57
      %s60 = sadd.s32 %s59, 1
      %p63 = scmp.eq.s32.totalorder %s25, 3
      %p64 = scmp.ne.s32.totalorder %s59, %s61
      %p65 = scmp.eq.s32.totalorder %s25, 0
      %p66 = por %p64, %p65
      %p67 = scmp.ne.s32.totalorder %s59, %s61
      %p68 = scmp.eq.s32.totalorder %s30, 3
      %p69 = por %p67, %p68
      %p70 = scmp.ne.s32.totalorder %s61, %s62
      %p71 = scmp.eq.s32.totalorder %s30, 0
      %p72 = por %p70, %p71
      %p73 = scmp.ne.s32.totalorder %s61, %s62
      %p74 = scmp.eq.s32.totalorder %s31, 3
      %p75 = por %p73, %p74
      %p77 = scmp.ne.s32.totalorder %s62, %s76
      %p78 = scmp.eq.s32.totalorder %s31, 0
      %p79 = por %p77, %p78
      %s81 = sadd.s32 %s80, 1
      %p84 = scmp.eq.s32.totalorder %s25, 3
      %p85 = scmp.ne.s32.totalorder %s80, %s82
      %p86 = scmp.eq.s32.totalorder %s25, 0
      %p87 = por %p85, %p86
      %p88 = scmp.ne.s32.totalorder %s80, %s82
      %p89 = scmp.eq.s32.totalorder %s30, 3
      %p90 = por %p88, %p89
      %p91 = scmp.ne.s32.totalorder %s82, %s83
      %p92 = scmp.eq.s32.totalorder %s30, 0
      %p93 = por %p91, %p92
      %p94 = scmp.ne.s32.totalorder %s82, %s83
      %p95 = scmp.eq.s32.totalorder %s31, 3
      %p96 = por %p94, %p95
      %p98 = scmp.ne.s32.totalorder %s83, %s97
      %p99 = scmp.eq.s32.totalorder %s31, 0
      %p100 = por %p98, %p99
      %s102 = sadd.s32 %s101, 1
      %p105 = scmp.eq.s32.totalorder %s25, 3
      %p106 = scmp.ne.s32.totalorder %s101, %s103
      %p107 = scmp.eq.s32.totalorder %s25, 0
      %p108 = por %p106, %p107
      %p109 = scmp.ne.s32.totalorder %s101, %s103
      %p110 = scmp.eq.s32.totalorder %s30, 3
      %p111 = por %p109, %p110
      %p112 = scmp.ne.s32.totalorder %s103, %s104
      %p113 = scmp.eq.s32.totalorder %s30, 0
      %p114 = por %p112, %p113
      %p115 = scmp.ne.s32.totalorder %s103, %s104
      %p116 = scmp.eq.s32.totalorder %s31, 3
      %p117 = por %p115, %p116
      %p119 = scmp.ne.s32.totalorder %s104, %s118
      %p120 = scmp.eq.s32.totalorder %s31, 0
      %p121 = por %p119, %p120
      %s123 = sadd.s32 %s122, 1
      %p126 = scmp.eq.s32.totalorder %s25, 3
      %p127 = scmp.ne.s32.totalorder %s122, %s124
      %p128 = scmp.eq.s32.totalorder %s25, 0
      %p129 = por %p127, %p128
      %p130 = scmp.ne.s32.totalorder %s122, %s124
      %p131 = scmp.eq.s32.totalorder %s30, 3
      %p132 = por %p130, %p131
      %p133 = scmp.ne.s32.totalorder %s124, %s125
      %p134 = scmp.eq.s32.totalorder %s30, 0
      %p135 = por %p133, %p134
      %p136 = scmp.ne.s32.totalorder %s124, %s125
      %p137 = scmp.eq.s32.totalorder %s31, 3
      %p138 = por %p136, %p137
      %p140 = scmp.ne.s32.totalorder %s125, %s139
      %p141 = scmp.eq.s32.totalorder %s31, 0
      %p142 = por %p140, %p141
      %s144 = sadd.s32 %s143, 1
      %p147 = scmp.eq.s32.totalorder %s25, 3
      %p148 = scmp.ne.s32.totalorder %s143, %s145
      %p149 = scmp.eq.s32.totalorder %s25, 0
      %p150 = por %p148, %p149
      %p151 = scmp.ne.s32.totalorder %s143, %s145
      %p152 = scmp.eq.s32.totalorder %s30, 3
      %p153 = por %p151, %p152
      %p154 = scmp.ne.s32.totalorder %s145, %s146
      %p155 = scmp.eq.s32.totalorder %s30, 0
      %p156 = por %p154, %p155
      %p157 = scmp.ne.s32.totalorder %s145, %s146
      %p158 = scmp.eq.s32.totalorder %s31, 3
      %p159 = por %p157, %p158
      %p161 = scmp.ne.s32.totalorder %s146, %s160
      %p162 = scmp.eq.s32.totalorder %s31, 0
      %p163 = por %p161, %p162
      %s165 = sadd.s32 %s164, 1
      %p168 = scmp.eq.s32.totalorder %s25, 3
      %p169 = scmp.ne.s32.totalorder %s164, %s166
      %p170 = scmp.eq.s32.totalorder %s25, 0
      %p171 = por %p169, %p170
      %p172 = scmp.ne.s32.totalorder %s164, %s166
      %p173 = scmp.eq.s32.totalorder %s30, 3
      %p174 = por %p172, %p173
      %p175 = scmp.ne.s32.totalorder %s166, %s167
      %p176 = scmp.eq.s32.totalorder %s30, 0
      %p177 = por %p175, %p176
      %p178 = scmp.ne.s32.totalorder %s166, %s167
      %p179 = scmp.eq.s32.totalorder %s31, 3
      %p180 = por %p178, %p179
      %p182 = scmp.ne.s32.totalorder %s167, %s181
      %p183 = scmp.eq.s32.totalorder %s31, 0
      %p184 = por %p182, %p183
      %s186 = sadd.s32 %s185, 1
      %p189 = scmp.eq.s32.totalorder %s25, 3
      %p190 = scmp.ne.s32.totalorder %s185, %s187
      %p191 = scmp.eq.s32.totalorder %s25, 0
      %p192 = por %p190, %p191
      %p193 = scmp.ne.s32.totalorder %s185, %s187
      %p194 = scmp.eq.s32.totalorder %s30, 3
      %p195 = por %p193, %p194
      %p196 = scmp.ne.s32.totalorder %s187, %s188
      %p197 = scmp.eq.s32.totalorder %s30, 0
      %p198 = por %p196, %p197
      %p199 = scmp.ne.s32.totalorder %s187, %s188
      %p200 = scmp.eq.s32.totalorder %s31, 3
      %p201 = por %p199, %p200
      %p203 = scmp.ne.s32.totalorder %s188, %s202
      %p204 = scmp.eq.s32.totalorder %s31, 0
      %p205 = por %p203, %p204
      %s207 = sadd.s32 %s206, 1
      %p210 = scmp.eq.s32.totalorder %s25, 3
      %p211 = scmp.ne.s32.totalorder %s206, %s208
      %p212 = scmp.eq.s32.totalorder %s25, 0
      %p213 = por %p211, %p212
      %p214 = scmp.ne.s32.totalorder %s206, %s208
      %p215 = scmp.eq.s32.totalorder %s30, 3
      %p216 = por %p214, %p215
      %p217 = scmp.ne.s32.totalorder %s208, %s209
      %p218 = scmp.eq.s32.totalorder %s30, 0
      %p219 = por %p217, %p218
      %p220 = scmp.ne.s32.totalorder %s208, %s209
      %p221 = scmp.eq.s32.totalorder %s31, 3
      %p222 = por %p220, %p221
      %p224 = scmp.ne.s32.totalorder %s209, %s223
      %p225 = scmp.eq.s32.totalorder %s31, 0
      %p226 = por %p224, %p225
      %s228 = sadd.s32 %s227, 1
      %p231 = scmp.eq.s32.totalorder %s25, 3
      %p232 = scmp.ne.s32.totalorder %s227, %s229
      %p233 = scmp.eq.s32.totalorder %s25, 0
      %p234 = por %p232, %p233
      %p235 = scmp.ne.s32.totalorder %s227, %s229
      %p236 = scmp.eq.s32.totalorder %s30, 3
      %p237 = por %p235, %p236
      %p238 = scmp.ne.s32.totalorder %s229, %s230
      %p239 = scmp.eq.s32.totalorder %s30, 0
      %p240 = por %p238, %p239
      %p241 = scmp.ne.s32.totalorder %s229, %s230
      %p242 = scmp.eq.s32.totalorder %s31, 3
      %p243 = por %p241, %p242
      %p245 = scmp.ne.s32.totalorder %s230, %s244
      %p246 = scmp.eq.s32.totalorder %s31, 0
      %p247 = por %p245, %p246
      %s248 = ssub.s32 %s25, %s32
      %p249 = scmp.eq.s32.totalorder %s248, 0
      %s251 = sadd.s32 %s250, 1
      %s252 = scalar_select %p249, %s250, %s251
      %p255 = pneg %p249
      %p256 = scmp.eq.s32.totalorder %s25, 3
      %p257 = por %p255, %p256
      %p258 = scmp.ne.s32.totalorder %s250, %s253
      %p259 = scmp.eq.s32.totalorder %s25, 0
      %p260 = por %p258, %p259
      %p261 = scmp.ne.s32.totalorder %s250, %s253
      %p262 = scmp.eq.s32.totalorder %s30, 3
      %p263 = por %p261, %p262
      %p264 = scmp.ne.s32.totalorder %s253, %s254
      %p265 = scmp.eq.s32.totalorder %s30, 0
      %p266 = por %p264, %p265
      %p267 = scmp.ne.s32.totalorder %s253, %s254
      %p268 = scmp.eq.s32.totalorder %s31, 3
      %p269 = por %p267, %p268
      %p271 = scmp.ne.s32.totalorder %s254, %s270
      %p272 = scmp.eq.s32.totalorder %s31, 0
      %p273 = por %p271, %p272
      %p274 = scmp.le.s32.totalorder 1, %s25
      %p275 = scmp.lt.s32.totalorder %s25, 5
      %p276 = pnand %p274, %p275
      %p277 = pneg %p276
      // Predicated region
      $region9: #{tpu_custom_call.1} parent=5 // pred_check
        _
      $region10: #{tpu_custom_call.1} parent=5 // pred_check_branch
        %279 = sbr.rel (%p276) target = $region12
      $region11: #{tpu_custom_call.1} parent=5 // pred_region
        %s280 = ssub.s32 %s25, 1
        // Predicated region
        $region13: #{tpu_custom_call.1} parent=11 // pred_check
          %p281 = pneg %p72
        $region14: #{tpu_custom_call.1} parent=11 // pred_check_branch
          %283 = sbr.rel (%p281) target = $region16
        $region15: #{tpu_custom_call.1} parent=11 // pred_region
          %s285 = ssub.s32 2048, 2048
          %286 = vsyncadd [#allocation6], %s285
          %s287 = sshll.u32 [#allocation5], 4
          %s288 = int_to_ptr.vmem [resolvable:$true] %s287
          %293 = dma.hbm_to_vmem [thread:$0]  %s1, 2048, %s288, [#allocation6], 128, 128, 8
        $region16: #{tpu_custom_call.1} parent=11 // pred_fallthru
          _
        // Predicated region
        $region17: #{tpu_custom_call.1} parent=11 // pred_check
          %p294 = pneg %p93
        $region18: #{tpu_custom_call.1} parent=11 // pred_check_branch
          %296 = sbr.rel (%p294) target = $region20
        $region19: #{tpu_custom_call.1} parent=11 // pred_region
          _
        $region20: #{tpu_custom_call.1} parent=11 // pred_fallthru
          _
        // Predicated region
        $region21: #{tpu_custom_call.1} parent=11 // pred_check
          %p297 = pneg %p114
        $region22: #{tpu_custom_call.1} parent=11 // pred_check_branch
          %299 = sbr.rel (%p297) target = $region24
        $region23: #{tpu_custom_call.1} parent=11 // pred_region
          %s301 = ssub.s32 6144, 6144
          %302 = vsyncadd [#allocation6], %s301
          %s303 = sshll.u32 [#allocation7], 4
          %s304 = int_to_ptr.vmem [resolvable:$true] %s303
          %309 = dma.hbm_to_vmem [thread:$0]  %s3, 6144, %s304, [#allocation6], 384, 384, 24
        $region24: #{tpu_custom_call.1} parent=11 // pred_fallthru
          _
        // Predicated region
        $region25: #{tpu_custom_call.1} parent=11 // pred_check
          %p310 = pneg %p135
        $region26: #{tpu_custom_call.1} parent=11 // pred_check_branch
          %312 = sbr.rel (%p310) target = $region28
        $region27: #{tpu_custom_call.1} parent=11 // pred_region
          _
        $region28: #{tpu_custom_call.1} parent=11 // pred_fallthru
          _
        // Predicated region
        $region29: #{tpu_custom_call.1} parent=11 // pred_check
          %p313 = pneg %p156
        $region30: #{tpu_custom_call.1} parent=11 // pred_check_branch
          %315 = sbr.rel (%p313) target = $region32
        $region31: #{tpu_custom_call.1} parent=11 // pred_region
          %s317 = ssub.s32 2048, 2048
          %318 = vsyncadd [#allocation9], %s317
          %s319 = sshll.u32 [#allocation8], 4
          %s320 = int_to_ptr.vmem [resolvable:$true] %s319
          %325 = dma.hbm_to_vmem [thread:$0]  %s5, 2048, %s320, [#allocation9], 128, 128, 8
        $region32: #{tpu_custom_call.1} parent=11 // pred_fallthru
          _
        // Predicated region
        $region33: #{tpu_custom_call.1} parent=11 // pred_check
          %p326 = pneg %p177
        $region34: #{tpu_custom_call.1} parent=11 // pred_check_branch
          %328 = sbr.rel (%p326) target = $region36
        $region35: #{tpu_custom_call.1} parent=11 // pred_region
          _
        $region36: #{tpu_custom_call.1} parent=11 // pred_fallthru
          _
        // Predicated region
        $region37: #{tpu_custom_call.1} parent=11 // pred_check
          %p329 = pneg %p198
        $region38: #{tpu_custom_call.1} parent=11 // pred_check_branch
          %331 = sbr.rel (%p329) target = $region40
        $region39: #{tpu_custom_call.1} parent=11 // pred_region
          %s333 = ssub.s32 2048, 2048
          %334 = vsyncadd [#allocation9], %s333
          %s335 = sshll.u32 [#allocation10], 4
          %s336 = int_to_ptr.vmem [resolvable:$true] %s335
          %341 = dma.hbm_to_vmem [thread:$0]  %s7, 2048, %s336, [#allocation9], 128, 128, 8
        $region40: #{tpu_custom_call.1} parent=11 // pred_fallthru
          _
        // Predicated region
        $region41: #{tpu_custom_call.1} parent=11 // pred_check
          %p342 = pneg %p219
        $region42: #{tpu_custom_call.1} parent=11 // pred_check_branch
          %344 = sbr.rel (%p342) target = $region44
        $region43: #{tpu_custom_call.1} parent=11 // pred_region
          %s346 = ssub.s32 2048, 2048
          %347 = vsyncadd [#allocation12], %s346
          %s348 = sshll.u32 [#allocation11], 4
          %s349 = int_to_ptr.vmem [resolvable:$true] %s348
          %354 = dma.hbm_to_vmem [thread:$0]  %s8, 2048, %s349, [#allocation12], 128, 128, 8
        $region44: #{tpu_custom_call.1} parent=11 // pred_fallthru
          _
        // Predicated region
        $region45: #{tpu_custom_call.1} parent=11 // pred_check
          %p355 = pneg %p240
        $region46: #{tpu_custom_call.1} parent=11 // pred_check_branch
          %357 = sbr.rel (%p355) target = $region48
        $region47: #{tpu_custom_call.1} parent=11 // pred_region
          _
        $region48: #{tpu_custom_call.1} parent=11 // pred_fallthru
          _
      $region12: #{tpu_custom_call.1} parent=5 // pred_fallthru
        _
      %p358 = scmp.lt.s32.totalorder %s25, 4
      // Predicated region
      $region49: #{tpu_custom_call.1} parent=5 // pred_check
        %p359 = pneg %p358
      $region50: #{tpu_custom_call.1} parent=5 // pred_check_branch
        %361 = sbr.rel (%p359) target = $region52
      $region51: #{tpu_custom_call.1} parent=5 // pred_region
        // Predicated region
        $region53: #{tpu_custom_call.1} parent=51 // pred_check
          %p362 = pneg %p45
        $region54: #{tpu_custom_call.1} parent=51 // pred_check_branch
          %364 = sbr.rel (%p362) target = $region56
        $region55: #{tpu_custom_call.1} parent=51 // pred_region
          %s365 = sand.u32 %s35, 1
          %s366 = scalar_lea.sflag [#allocation3], %s365
          %s367 = sand.u32 %s35, 1
          %s368 = smul.addr %s367, 16
          %s369 = scalar_lea.vmem [#allocation2], %s368
          %s370 = smul.u32 2, %s25
          %s372 = ssub.s32 256, 256
          %373 = vsyncadd %s366, %s372
          %s374 = smul.addr %s370, 128
          %s375 = scalar_lea.hbm %s0, %s374
          %s376 = sshll.u32 %s369, 4
          %s377 = int_to_ptr.vmem [resolvable:$true] %s376
          %382 = dma.hbm_to_vmem [thread:$0]  %s375, 256, %s377, %s366, 128, 128, 8
        $region56: #{tpu_custom_call.1} parent=51 // pred_fallthru
          _
      $region52: #{tpu_custom_call.1} parent=5 // pred_fallthru
        _
      %p383 = scmp.le.s32.totalorder 1, %s25
      %p384 = scmp.lt.s32.totalorder %s25, 5
      %p385 = pnand %p383, %p384
      %p386 = pneg %p385
      // Predicated region
      $region57: #{tpu_custom_call.1} parent=5 // pred_check
        _
      $region58: #{tpu_custom_call.1} parent=5 // pred_check_branch
        %388 = sbr.rel (%p385) target = $region60
      $region59: #{tpu_custom_call.1} parent=5 // pred_region
        %s389 = ssub.s32 %s25, 1
        %s390 = sand.u32 %s38, 1
        %s391 = scalar_lea.sflag [#allocation3], %s390
        %s392 = sand.u32 %s38, 1
        %s393 = smul.addr %s392, 16
        %s394 = scalar_lea.vmem [#allocation2], %s393
        // Predicated region
        $region61: #{tpu_custom_call.1} parent=59 // pred_check
          %p395 = pneg %p51
        $region62: #{tpu_custom_call.1} parent=59 // pred_check_branch
          %397 = sbr.rel (%p395) target = $region64
        $region63: #{tpu_custom_call.1} parent=59 // pred_region
          %398 = dma.done %s391, 256
        $region64: #{tpu_custom_call.1} parent=59 // pred_fallthru
          _
        // Predicated region
        $region65: #{tpu_custom_call.1} parent=59 // pred_check
          %p399 = pneg %p72
        $region66: #{tpu_custom_call.1} parent=59 // pred_check_branch
          %401 = sbr.rel (%p399) target = $region68
        $region67: #{tpu_custom_call.1} parent=59 // pred_region
          %402 = dma.done [#allocation6], 2048
        $region68: #{tpu_custom_call.1} parent=59 // pred_fallthru
          _
        // Predicated region
        $region69: #{tpu_custom_call.1} parent=59 // pred_check
          %p403 = pneg %p114
        $region70: #{tpu_custom_call.1} parent=59 // pred_check_branch
          %405 = sbr.rel (%p403) target = $region72
        $region71: #{tpu_custom_call.1} parent=59 // pred_region
          %406 = dma.done [#allocation6], 6144
        $region72: #{tpu_custom_call.1} parent=59 // pred_fallthru
          _
        // Predicated region
        $region73: #{tpu_custom_call.1} parent=59 // pred_check
          %p407 = pneg %p156
        $region74: #{tpu_custom_call.1} parent=59 // pred_check_branch
          %409 = sbr.rel (%p407) target = $region76
        $region75: #{tpu_custom_call.1} parent=59 // pred_region
          %410 = dma.done [#allocation9], 2048
        $region76: #{tpu_custom_call.1} parent=59 // pred_fallthru
          _
        // Predicated region
        $region77: #{tpu_custom_call.1} parent=59 // pred_check
          %p411 = pneg %p198
        $region78: #{tpu_custom_call.1} parent=59 // pred_check_branch
          %413 = sbr.rel (%p411) target = $region80
        $region79: #{tpu_custom_call.1} parent=59 // pred_region
          %414 = dma.done [#allocation9], 2048
        $region80: #{tpu_custom_call.1} parent=59 // pred_fallthru
          _
        // Predicated region
        $region81: #{tpu_custom_call.1} parent=59 // pred_check
          %p415 = pneg %p219
        $region82: #{tpu_custom_call.1} parent=59 // pred_check_branch
          %417 = sbr.rel (%p415) target = $region84
        $region83: #{tpu_custom_call.1} parent=59 // pred_region
          %418 = dma.done [#allocation12], 2048
        $region84: #{tpu_custom_call.1} parent=59 // pred_fallthru
          _
        %s419 = sand.u32 %s38, 1
        %s420 = scalar_lea.sflag [#allocation3], %s419
        %s421 = sand.u32 %s38, 1
        %s422 = smul.addr %s421, 16
        %s423 = scalar_lea.vmem [#allocation2], %s422
        %p424 = pneg %p51
        %p425 = pneg %p48
        %p426 = pneg %p72
        %p427 = pneg %p69
        %p428 = pneg %p93
        %p429 = pneg %p90
        %p430 = pneg %p114
        %p431 = pneg %p111
        %p432 = pneg %p135
        %p433 = pneg %p132
        %p434 = pneg %p156
        %p435 = pneg %p153
        %p436 = pneg %p177
        %p437 = pneg %p174
        %p438 = pneg %p198
        %p439 = pneg %p195
        %p440 = pneg %p219
        %p441 = pneg %p216
        %p442 = pneg %p240
        %p443 = pneg %p237
        %p444 = pneg %p266
        %p445 = pneg %p263
        %s446 = sand.u32 %s253, 1
        %s447 = scalar_lea.sflag [#allocation4], %s446
        %s448 = sand.u32 %s253, 1
        %s449 = smul.addr %s448, 16
        %s450 = scalar_lea.vmem [#allocation13], %s449
        %s451 = smul.u32 2, %s30
        %s452 = smul.u32 2, %s30
        %v453 = vld [vmem:[%s394] sm:$0xff]
        %v454 = vld [vmem:[%s394 + $0x8] sm:$0xff]
        %v455 = vld [vmem:[#allocation5] sm:$0xff]
        %v456 = vld [vmem:[#allocation5 + $0x8] sm:$0xff]
        %v457 = vld [vmem:[#allocation5 + $0x10] sm:$0xff]
        %v458 = vld [vmem:[#allocation5 + $0x18] sm:$0xff]
        %v459 = vld [vmem:[#allocation5 + $0x20] sm:$0xff]
        %v460 = vld [vmem:[#allocation5 + $0x28] sm:$0xff]
        %v461 = vld [vmem:[#allocation5 + $0x30] sm:$0xff]
        %v462 = vld [vmem:[#allocation5 + $0x38] sm:$0xff]
        %v463 = vld [vmem:[#allocation5 + $0x40] sm:$0xff]
        %v464 = vld [vmem:[#allocation5 + $0x48] sm:$0xff]
        %v465 = vld [vmem:[#allocation5 + $0x50] sm:$0xff]
        %v466 = vld [vmem:[#allocation5 + $0x58] sm:$0xff]
        %v467 = vld [vmem:[#allocation5 + $0x60] sm:$0xff]
        %v468 = vld [vmem:[#allocation5 + $0x68] sm:$0xff]
        %v469 = vld [vmem:[#allocation5 + $0x70] sm:$0xff]
        %v470 = vld [vmem:[#allocation5 + $0x78] sm:$0xff]
        %v471 = vld [vmem:[%s2] sm:$0x1]
        %v473 = vlaneseq
        %v474 = vshrl.u32 %v473, 7
        %v475 = vsub.s32 0, %v474
        %v476 = vrot.slane %v471, %v475
        %478 = vmatprep.subr.mxu0 0.0
        %479 = vmatpush1.msra.mxu0 %v470
        %480 = vmatprep.subr.mxu0 0.0
        %481 = vmatpush1.msra.mxu0 %v469
        %482 = vmatprep.subr.mxu0 0.0
        %483 = vmatpush1.msra.mxu0 %v468
        %484 = vmatprep.subr.mxu0 0.0
        %485 = vmatpush1.msra.mxu0 %v467
        %486 = vmatprep.subr.mxu0 0.0
        %487 = vmatpush1.msra.mxu0 %v466
        %488 = vmatprep.subr.mxu0 0.0
        %489 = vmatpush1.msra.mxu0 %v465
        %490 = vmatprep.subr.mxu0 0.0
        %491 = vmatpush1.msra.mxu0 %v464
        %492 = vmatprep.subr.mxu0 0.0
        %493 = vmatpush1.msra.mxu0 %v463
        %494 = vmatprep.subr.mxu0 0.0
        %495 = vmatpush1.msra.mxu0 %v462
        %496 = vmatprep.subr.mxu0 0.0
        %497 = vmatpush1.msra.mxu0 %v461
        %498 = vmatprep.subr.mxu0 0.0
        %499 = vmatpush1.msra.mxu0 %v460
        %500 = vmatprep.subr.mxu0 0.0
        %501 = vmatpush1.msra.mxu0 %v459
        %502 = vmatprep.subr.mxu0 0.0
        %503 = vmatpush1.msra.mxu0 %v458
        %504 = vmatprep.subr.mxu0 0.0
        %505 = vmatpush1.msra.mxu0 %v457
        %506 = vmatprep.subr.mxu0 0.0
        %507 = vmatpush1.msra.mxu0 %v456
        %508 = vmatprep.subr.mxu0 0.0
        %509 = vmatpush1.msra.mxu0 %v455
        %510 = vmatprep.subr.mxu0 0.0
        %511 = vmatpush2.msra.mxu0 0.0
        %512 = vmatprep.subr.mxu0 0.0
        %513 = vmatpush2.msra.mxu0 0.0
        %514 = vmatprep.subr.mxu0 0.0
        %515 = vmatpush2.msra.mxu0 0.0
        %516 = vmatprep.subr.mxu0 0.0
        %517 = vmatpush2.msra.mxu0 0.0
        %518 = vmatprep.subr.mxu0 0.0
        %519 = vmatpush2.msra.mxu0 0.0
        %520 = vmatprep.subr.mxu0 0.0
        %521 = vmatpush2.msra.mxu0 0.0
        %522 = vmatprep.subr.mxu0 0.0
        %523 = vmatpush2.msra.mxu0 0.0
        %524 = vmatprep.subr.mxu0 0.0
        %525 = vmatpush2.msra.mxu0 0.0
        %526 = vmatprep.subr.mxu0 0.0
        %527 = vmatpush2.msra.mxu0 0.0
        %528 = vmatprep.subr.mxu0 0.0
        %529 = vmatpush2.msra.mxu0 0.0
        %530 = vmatprep.subr.mxu0 0.0
        %531 = vmatpush2.msra.mxu0 0.0
        %532 = vmatprep.subr.mxu0 0.0
        %533 = vmatpush2.msra.mxu0 0.0
        %534 = vmatprep.subr.mxu0 0.0
        %535 = vmatpush2.msra.mxu0 0.0
        %536 = vmatprep.subr.mxu0 0.0
        %537 = vmatpush2.msra.mxu0 0.0
        %538 = vmatprep.subr.mxu0 0.0
        %539 = vmatpush2.msra.mxu0 0.0
        %540 = vmatprep.subr.mxu0 0.0
        %541 = vmatpush2.msra.mxu0 0.0
        %542 = vmatprep.mubr.f32.mxu0 0.0
        %543 = vmatmul.mubr.f32.gmra.mxu0 %v453
        %v544 = vpop.f32.mrf.mxu0
        %v545 = vadd.f32 %v476, %v544
        %v546 = vpop.f32.mrf.mxu0
        %547 = vmatprep.mubr.f32.mxu0 0.0
        %548 = vmatmul.mubr.f32.gmra.mxu0 %v454
        %v549 = vpop.f32.mrf.mxu0
        %v550 = vadd.f32 %v476, %v549
        %v551 = vpop.f32.mrf.mxu0
        %552 = vdwg.mxu0
        %v553 = vmul.f32 %v545, %v545
        %v554 = vmul.f32 %v550, %v550
        %v555 = vrot.slane %v553, 4
        %v556 = vadd.f32 %v553, %v555
        %v557 = vrot.slane %v556, 2
        %v558 = vadd.f32 %v556, %v557
        %v559 = vrot.slane %v558, 1
        %v560 = vadd.f32 %v558, %v559
        %v561 = vrot.slane %v554, 4
        %v562 = vadd.f32 %v554, %v561
        %v563 = vrot.slane %v562, 2
        %v564 = vadd.f32 %v562, %v563
        %v565 = vrot.slane %v564, 1
        %v566 = vadd.f32 %v564, %v565
        %v567 = vrsqrt.pop %v560
        %v568 = vmul.f32 %v560, %v567
        %vm569 = vcmp.eq.f32.partialorder %v560, inf
        %v570 = vsel %vm569, %v560, %v568
        %vm571 = vcmp.eq.f32.partialorder %v560, 0.0
        %v572 = vand.u32 %v560, 2147483648
        %v573 = vsel %vm571, %v572, %v570
        %v574 = vrsqrt.pop %v566
        %v575 = vmul.f32 %v566, %v574
        %vm576 = vcmp.eq.f32.partialorder %v566, inf
        %v577 = vsel %vm576, %v566, %v575
        %vm578 = vcmp.eq.f32.partialorder %v566, 0.0
        %v579 = vand.u32 %v566, 2147483648
        %v580 = vsel %vm578, %v579, %v577
        %v581 = vadd.f32 %v573, 1e-08
        %v582 = vadd.f32 %v580, 1e-08
        %v583 = vrcp.pop %v581
        %v584 = vmul.f32 1.0, %v583
        %v585 = vrcp.pop %v582
        %v586 = vmul.f32 1.0, %v585
        %v587 = vmul.f32 %v545, %v584
        %v588 = vmul.f32 %v550, %v586
        %v589 = vld [vmem:[#allocation7] sm:$0xff]
        %v590 = vld [vmem:[#allocation7 + $0x8] sm:$0xff]
        %v591 = vld [vmem:[#allocation7 + $0x10] sm:$0xff]
        %v592 = vld [vmem:[#allocation7 + $0x18] sm:$0xff]
        %v593 = vld [vmem:[#allocation7 + $0x20] sm:$0xff]
        %v594 = vld [vmem:[#allocation7 + $0x28] sm:$0xff]
        %v595 = vld [vmem:[#allocation7 + $0x30] sm:$0xff]
        %v596 = vld [vmem:[#allocation7 + $0x38] sm:$0xff]
        %v597 = vld [vmem:[#allocation7 + $0x40] sm:$0xff]
        %v598 = vld [vmem:[#allocation7 + $0x48] sm:$0xff]
        %v599 = vld [vmem:[#allocation7 + $0x50] sm:$0xff]
        %v600 = vld [vmem:[#allocation7 + $0x58] sm:$0xff]
        %v601 = vld [vmem:[#allocation7 + $0x60] sm:$0xff]
        %v602 = vld [vmem:[#allocation7 + $0x68] sm:$0xff]
        %v603 = vld [vmem:[#allocation7 + $0x70] sm:$0xff]
        %v604 = vld [vmem:[#allocation7 + $0x78] sm:$0xff]
        %v605 = vld [vmem:[#allocation7 + $0x80] sm:$0xff]
        %v606 = vld [vmem:[#allocation7 + $0x88] sm:$0xff]
        %v607 = vld [vmem:[#allocation7 + $0x90] sm:$0xff]
        %v608 = vld [vmem:[#allocation7 + $0x98] sm:$0xff]
        %v609 = vld [vmem:[#allocation7 + $0xa0] sm:$0xff]
        %v610 = vld [vmem:[#allocation7 + $0xa8] sm:$0xff]
        %v611 = vld [vmem:[#allocation7 + $0xb0] sm:$0xff]
        %v612 = vld [vmem:[#allocation7 + $0xb8] sm:$0xff]
        %v613 = vld [vmem:[#allocation7 + $0xc0] sm:$0xff]
        %v614 = vld [vmem:[#allocation7 + $0xc8] sm:$0xff]
        %v615 = vld [vmem:[#allocation7 + $0xd0] sm:$0xff]
        %v616 = vld [vmem:[#allocation7 + $0xd8] sm:$0xff]
        %v617 = vld [vmem:[#allocation7 + $0xe0] sm:$0xff]
        %v618 = vld [vmem:[#allocation7 + $0xe8] sm:$0xff]
        %v619 = vld [vmem:[#allocation7 + $0xf0] sm:$0xff]
        %v620 = vld [vmem:[#allocation7 + $0xf8] sm:$0xff]
        %v621 = vld [vmem:[#allocation7 + $0x100] sm:$0xff]
        %v622 = vld [vmem:[#allocation7 + $0x108] sm:$0xff]
        %v623 = vld [vmem:[#allocation7 + $0x110] sm:$0xff]
        %v624 = vld [vmem:[#allocation7 + $0x118] sm:$0xff]
        %v625 = vld [vmem:[#allocation7 + $0x120] sm:$0xff]
        %v626 = vld [vmem:[#allocation7 + $0x128] sm:$0xff]
        %v627 = vld [vmem:[#allocation7 + $0x130] sm:$0xff]
        %v628 = vld [vmem:[#allocation7 + $0x138] sm:$0xff]
        %v629 = vld [vmem:[#allocation7 + $0x140] sm:$0xff]
        %v630 = vld [vmem:[#allocation7 + $0x148] sm:$0xff]
        %v631 = vld [vmem:[#allocation7 + $0x150] sm:$0xff]
        %v632 = vld [vmem:[#allocation7 + $0x158] sm:$0xff]
        %v633 = vld [vmem:[#allocation7 + $0x160] sm:$0xff]
        %v634 = vld [vmem:[#allocation7 + $0x168] sm:$0xff]
        %v635 = vld [vmem:[#allocation7 + $0x170] sm:$0xff]
        %v636 = vld [vmem:[#allocation7 + $0x178] sm:$0xff]
        %v637 = vld [vmem:[%s4] sm:$0x7]
        %v639 = vlaneseq
        %v640 = vshrl.u32 %v639, 7
        %v641 = vsub.s32 0, %v640
        %v642 = vrot.slane %v637, %v641
        %v643 = vlaneseq
        %v644 = vshrl.u32 %v643, 7
        %v645 = vsub.s32 1, %v644
        %v646 = vrot.slane %v637, %v645
        %v647 = vlaneseq
        %v648 = vshrl.u32 %v647, 7
        %v649 = vsub.s32 2, %v648
        %v650 = vrot.slane %v637, %v649
        %654 = vmatprep.subr.mxu0 %v635
        %655 = vmatpush1.msra.mxu0 %v634
        %656 = vmatprep.subr.mxu0 %v632
        %657 = vmatpush1.msra.mxu0 %v631
        %658 = vmatprep.subr.mxu0 %v629
        %659 = vmatpush1.msra.mxu0 %v628
        %660 = vmatprep.subr.mxu0 %v626
        %661 = vmatpush1.msra.mxu0 %v625
        %662 = vmatprep.subr.mxu0 %v623
        %663 = vmatpush1.msra.mxu0 %v622
        %664 = vmatprep.subr.mxu0 %v620
        %665 = vmatpush1.msra.mxu0 %v619
        %666 = vmatprep.subr.mxu0 %v617
        %667 = vmatpush1.msra.mxu0 %v616
        %668 = vmatprep.subr.mxu0 %v614
        %669 = vmatpush1.msra.mxu0 %v613
        %670 = vmatprep.subr.mxu0 %v611
        %671 = vmatpush1.msra.mxu0 %v610
        %672 = vmatprep.subr.mxu0 %v608
        %673 = vmatpush1.msra.mxu0 %v607
        %674 = vmatprep.subr.mxu0 %v605
        %675 = vmatpush1.msra.mxu0 %v604
        %676 = vmatprep.subr.mxu0 %v602
        %677 = vmatpush1.msra.mxu0 %v601
        %678 = vmatprep.subr.mxu0 %v599
        %679 = vmatpush1.msra.mxu0 %v598
        %680 = vmatprep.subr.mxu0 %v596
        %681 = vmatpush1.msra.mxu0 %v595
        %682 = vmatprep.subr.mxu0 %v593
        %683 = vmatpush1.msra.mxu0 %v592
        %684 = vmatprep.subr.mxu0 %v590
        %685 = vmatpush1.msra.mxu0 %v589
        %686 = vmatprep.subr.mxu0 0.0
        %687 = vmatpush2.msra.mxu0 0.0
        %688 = vmatprep.subr.mxu0 0.0
        %689 = vmatpush2.msra.mxu0 0.0
        %690 = vmatprep.subr.mxu0 0.0
        %691 = vmatpush2.msra.mxu0 0.0
        %692 = vmatprep.subr.mxu0 0.0
        %693 = vmatpush2.msra.mxu0 0.0
        %694 = vmatprep.subr.mxu0 0.0
        %695 = vmatpush2.msra.mxu0 0.0
        %696 = vmatprep.subr.mxu0 0.0
        %697 = vmatpush2.msra.mxu0 0.0
        %698 = vmatprep.subr.mxu0 0.0
        %699 = vmatpush2.msra.mxu0 0.0
        %700 = vmatprep.subr.mxu0 0.0
        %701 = vmatpush2.msra.mxu0 0.0
        %702 = vmatprep.subr.mxu0 0.0
        %703 = vmatpush2.msra.mxu0 0.0
        %704 = vmatprep.subr.mxu0 0.0
        %705 = vmatpush2.msra.mxu0 0.0
        %706 = vmatprep.subr.mxu0 0.0
        %707 = vmatpush2.msra.mxu0 0.0
        %708 = vmatprep.subr.mxu0 0.0
        %709 = vmatpush2.msra.mxu0 0.0
        %710 = vmatprep.subr.mxu0 0.0
        %711 = vmatpush2.msra.mxu0 0.0
        %712 = vmatprep.subr.mxu0 0.0
        %713 = vmatpush2.msra.mxu0 0.0
        %714 = vmatprep.subr.mxu0 0.0
        %715 = vmatpush2.msra.mxu0 0.0
        %716 = vmatprep.subr.mxu0 0.0
        %717 = vmatpush2.msra.mxu0 0.0
        %718 = vmatprep.mubr.f32.mxu0 0.0
        %719 = vmatmul.mubr.f32.gmra.mxu0 %v587
        %v720 = vpop.f32.mrf.mxu0
        %v721 = vadd.f32 %v642, %v720
        %v722 = vpop.f32.mrf.mxu0
        %v723 = vadd.f32 %v646, %v722
        %724 = vmatprep.mubr.f32.mxu0 0.0
        %725 = vmatmul.mubr.f32.gmra.mxu0 %v588
        %v726 = vpop.f32.mrf.mxu0
        %v727 = vadd.f32 %v642, %v726
        %v728 = vpop.f32.mrf.mxu0
        %v729 = vadd.f32 %v646, %v728
        %730 = vdwg.mxu0
        %731 = vmatprep.subr.mxu0 0.0
        %732 = vmatpush1.msra.mxu0 %v636
        %733 = vmatprep.subr.mxu0 0.0
        %734 = vmatpush1.msra.mxu0 %v633
        %735 = vmatprep.subr.mxu0 0.0
        %736 = vmatpush1.msra.mxu0 %v630
        %737 = vmatprep.subr.mxu0 0.0
        %738 = vmatpush1.msra.mxu0 %v627
        %739 = vmatprep.subr.mxu0 0.0
        %740 = vmatpush1.msra.mxu0 %v624
        %741 = vmatprep.subr.mxu0 0.0
        %742 = vmatpush1.msra.mxu0 %v621
        %743 = vmatprep.subr.mxu0 0.0
        %744 = vmatpush1.msra.mxu0 %v618
        %745 = vmatprep.subr.mxu0 0.0
        %746 = vmatpush1.msra.mxu0 %v615
        %747 = vmatprep.subr.mxu0 0.0
        %748 = vmatpush1.msra.mxu0 %v612
        %749 = vmatprep.subr.mxu0 0.0
        %750 = vmatpush1.msra.mxu0 %v609
        %751 = vmatprep.subr.mxu0 0.0
        %752 = vmatpush1.msra.mxu0 %v606
        %753 = vmatprep.subr.mxu0 0.0
        %754 = vmatpush1.msra.mxu0 %v603
        %755 = vmatprep.subr.mxu0 0.0
        %756 = vmatpush1.msra.mxu0 %v600
        %757 = vmatprep.subr.mxu0 0.0
        %758 = vmatpush1.msra.mxu0 %v597
        %759 = vmatprep.subr.mxu0 0.0
        %760 = vmatpush1.msra.mxu0 %v594
        %761 = vmatprep.subr.mxu0 0.0
        %762 = vmatpush1.msra.mxu0 %v591
        %763 = vmatprep.subr.mxu0 0.0
        %764 = vmatpush2.msra.mxu0 0.0
        %765 = vmatprep.subr.mxu0 0.0
        %766 = vmatpush2.msra.mxu0 0.0
        %767 = vmatprep.subr.mxu0 0.0
        %768 = vmatpush2.msra.mxu0 0.0
        %769 = vmatprep.subr.mxu0 0.0
        %770 = vmatpush2.msra.mxu0 0.0
        %771 = vmatprep.subr.mxu0 0.0
        %772 = vmatpush2.msra.mxu0 0.0
        %773 = vmatprep.subr.mxu0 0.0
        %774 = vmatpush2.msra.mxu0 0.0
        %775 = vmatprep.subr.mxu0 0.0
        %776 = vmatpush2.msra.mxu0 0.0
        %777 = vmatprep.subr.mxu0 0.0
        %778 = vmatpush2.msra.mxu0 0.0
        %779 = vmatprep.subr.mxu0 0.0
        %780 = vmatpush2.msra.mxu0 0.0
        %781 = vmatprep.subr.mxu0 0.0
        %782 = vmatpush2.msra.mxu0 0.0
        %783 = vmatprep.subr.mxu0 0.0
        %784 = vmatpush2.msra.mxu0 0.0
        %785 = vmatprep.subr.mxu0 0.0
        %786 = vmatpush2.msra.mxu0 0.0
        %787 = vmatprep.subr.mxu0 0.0
        %788 = vmatpush2.msra.mxu0 0.0
        %789 = vmatprep.subr.mxu0 0.0
        %790 = vmatpush2.msra.mxu0 0.0
        %791 = vmatprep.subr.mxu0 0.0
        %792 = vmatpush2.msra.mxu0 0.0
        %793 = vmatprep.subr.mxu0 0.0
        %794 = vmatpush2.msra.mxu0 0.0
        %795 = vmatprep.mubr.f32.mxu0 0.0
        %796 = vmatmul.mubr.f32.gmra.mxu0 %v587
        %v797 = vpop.f32.mrf.mxu0
        %v798 = vadd.f32 %v650, %v797
        %v799 = vpop.f32.mrf.mxu0
        %800 = vmatprep.mubr.f32.mxu0 0.0
        %801 = vmatmul.mubr.f32.gmra.mxu0 %v588
        %v802 = vpop.f32.mrf.mxu0
        %v803 = vadd.f32 %v650, %v802
        %v804 = vpop.f32.mrf.mxu0
        %805 = vdwg.mxu0
        %808 = vrot.lane.b32.xlu0 %v721, 96
        %v809 = vpop.permute.xlu0 %808
        %810 = vrot.lane.b32.xlu0 %v727, 96
        %v811 = vpop.permute.xlu0 %810
        %814 = vrot.lane.b32.xlu0 %v721, 64
        %v815 = vpop.permute.xlu0 %814
        %816 = vrot.lane.b32.xlu0 %v727, 64
        %v817 = vpop.permute.xlu0 %816
        %820 = vrot.lane.b32.xlu0 %v721, 32
        %v821 = vpop.permute.xlu0 %820
        %822 = vrot.lane.b32.xlu0 %v727, 32
        %v823 = vpop.permute.xlu0 %822
        %v826 = vcombine.low %v721, %v815
        %v827 = vcombine.high %v721, %v815
        %v829 = vunpack.c.l.s4 1983009808
        %v830 = vunpack.c.0.s8 %v829
        %v831 = vlaneseq
        %v832 = vshrl.u32 %v831, 7
        %v833 = vsub.s32 %v830, %v832
        %v834 = vrot.slane %v826, %v833
        %v836 = vunpack.c.l.s4 1983009808
        %v837 = vunpack.c.0.s8 %v836
        %v838 = vlaneseq
        %v839 = vshrl.u32 %v838, 7
        %v840 = vsub.s32 %v837, %v839
        %v841 = vrot.slane %v827, %v840
        %v842 = vcombine.low %v809, %v821
        %v843 = vcombine.high %v809, %v821
        %v845 = vunpack.c.l.s4 1983009808
        %v846 = vunpack.c.0.s8 %v845
        %v847 = vlaneseq
        %v848 = vshrl.u32 %v847, 7
        %v849 = vsub.s32 %v846, %v848
        %v850 = vrot.slane %v842, %v849
        %v852 = vunpack.c.l.s4 1983009808
        %v853 = vunpack.c.0.s8 %v852
        %v854 = vlaneseq
        %v855 = vshrl.u32 %v854, 7
        %v856 = vsub.s32 %v853, %v855
        %v857 = vrot.slane %v843, %v856
        %v858 = vcombine.low %v834, %v850
        %v859 = vcombine.high %v834, %v850
        %v861 = vunpack.c.l.s4 1934713408
        %v862 = vunpack.c.0.s8 %v861
        %v863 = vlaneseq
        %v864 = vshrl.u32 %v863, 7
        %v865 = vsub.s32 %v862, %v864
        %v866 = vrot.slane %v858, %v865
        %v868 = vunpack.c.l.s4 1934713408
        %v869 = vunpack.c.0.s8 %v868
        %v870 = vlaneseq
        %v871 = vshrl.u32 %v870, 7
        %v872 = vsub.s32 %v869, %v871
        %v873 = vrot.slane %v859, %v872
        %v874 = vcombine.low %v841, %v857
        %v875 = vcombine.high %v841, %v857
        %v877 = vunpack.c.l.s4 1934713408
        %v878 = vunpack.c.0.s8 %v877
        %v879 = vlaneseq
        %v880 = vshrl.u32 %v879, 7
        %v881 = vsub.s32 %v878, %v880
        %v882 = vrot.slane %v874, %v881
        %v884 = vunpack.c.l.s4 1934713408
        %v885 = vunpack.c.0.s8 %v884
        %v886 = vlaneseq
        %v887 = vshrl.u32 %v886, 7
        %v888 = vsub.s32 %v885, %v887
        %v889 = vrot.slane %v875, %v888
        %v890 = vcombine.high %v866, 0.0
        %v891 = vcombine.high %v873, 0.0
        %v892 = vcombine.high %v882, 0.0
        %v893 = vcombine.high %v889, 0.0
        %v894 = vcombine.low %v727, %v817
        %v895 = vcombine.high %v727, %v817
        %v897 = vunpack.c.l.s4 1983009808
        %v898 = vunpack.c.0.s8 %v897
        %v899 = vlaneseq
        %v900 = vshrl.u32 %v899, 7
        %v901 = vsub.s32 %v898, %v900
        %v902 = vrot.slane %v894, %v901
        %v904 = vunpack.c.l.s4 1983009808
        %v905 = vunpack.c.0.s8 %v904
        %v906 = vlaneseq
        %v907 = vshrl.u32 %v906, 7
        %v908 = vsub.s32 %v905, %v907
        %v909 = vrot.slane %v895, %v908
        %v910 = vcombine.low %v811, %v823
        %v911 = vcombine.high %v811, %v823
        %v913 = vunpack.c.l.s4 1983009808
        %v914 = vunpack.c.0.s8 %v913
        %v915 = vlaneseq
        %v916 = vshrl.u32 %v915, 7
        %v917 = vsub.s32 %v914, %v916
        %v918 = vrot.slane %v910, %v917
        %v920 = vunpack.c.l.s4 1983009808
        %v921 = vunpack.c.0.s8 %v920
        %v922 = vlaneseq
        %v923 = vshrl.u32 %v922, 7
        %v924 = vsub.s32 %v921, %v923
        %v925 = vrot.slane %v911, %v924
        %v926 = vcombine.low %v902, %v918
        %v927 = vcombine.high %v902, %v918
        %v929 = vunpack.c.l.s4 1934713408
        %v930 = vunpack.c.0.s8 %v929
        %v931 = vlaneseq
        %v932 = vshrl.u32 %v931, 7
        %v933 = vsub.s32 %v930, %v932
        %v934 = vrot.slane %v926, %v933
        %v936 = vunpack.c.l.s4 1934713408
        %v937 = vunpack.c.0.s8 %v936
        %v938 = vlaneseq
        %v939 = vshrl.u32 %v938, 7
        %v940 = vsub.s32 %v937, %v939
        %v941 = vrot.slane %v927, %v940
        %v942 = vcombine.low %v909, %v925
        %v943 = vcombine.high %v909, %v925
        %v945 = vunpack.c.l.s4 1934713408
        %v946 = vunpack.c.0.s8 %v945
        %v947 = vlaneseq
        %v948 = vshrl.u32 %v947, 7
        %v949 = vsub.s32 %v946, %v948
        %v950 = vrot.slane %v942, %v949
        %v952 = vunpack.c.l.s4 1934713408
        %v953 = vunpack.c.0.s8 %v952
        %v954 = vlaneseq
        %v955 = vshrl.u32 %v954, 7
        %v956 = vsub.s32 %v953, %v955
        %v957 = vrot.slane %v943, %v956
        %v958 = vcombine.high %v934, 0.0
        %v959 = vcombine.high %v941, 0.0
        %v960 = vcombine.high %v950, 0.0
        %v961 = vcombine.high %v957, 0.0
        %v962 = vcombine.low %v866, %v873
        %v964 = vunpack.c.l.s4 1983009808
        %v965 = vunpack.c.0.s8 %v964
        %v966 = vlaneseq
        %v967 = vshrl.u32 %v966, 7
        %v968 = vsub.s32 %v965, %v967
        %v969 = vrot.slane %v962, %v968
        %v970 = vcombine.low %v890, %v891
        %v972 = vunpack.c.l.s4 1983009808
        %v973 = vunpack.c.0.s8 %v972
        %v974 = vlaneseq
        %v975 = vshrl.u32 %v974, 7
        %v976 = vsub.s32 %v973, %v975
        %v977 = vrot.slane %v970, %v976
        %v978 = vcombine.low %v882, %v889
        %v980 = vunpack.c.l.s4 1983009808
        %v981 = vunpack.c.0.s8 %v980
        %v982 = vlaneseq
        %v983 = vshrl.u32 %v982, 7
        %v984 = vsub.s32 %v981, %v983
        %v985 = vrot.slane %v978, %v984
        %v986 = vcombine.low %v892, %v893
        %v988 = vunpack.c.l.s4 1983009808
        %v989 = vunpack.c.0.s8 %v988
        %v990 = vlaneseq
        %v991 = vshrl.u32 %v990, 7
        %v992 = vsub.s32 %v989, %v991
        %v993 = vrot.slane %v986, %v992
        %v994 = vcombine.low %v969, %v977
        %v995 = vcombine.high %v969, %v977
        %v997 = vunpack.c.l.s4 1934713408
        %v998 = vunpack.c.0.s8 %v997
        %v999 = vlaneseq
        %v1000 = vshrl.u32 %v999, 7
        %v1001 = vsub.s32 %v998, %v1000
        %v1002 = vrot.slane %v994, %v1001
        %v1004 = vunpack.c.l.s4 1934713408
        %v1005 = vunpack.c.0.s8 %v1004
        %v1006 = vlaneseq
        %v1007 = vshrl.u32 %v1006, 7
        %v1008 = vsub.s32 %v1005, %v1007
        %v1009 = vrot.slane %v995, %v1008
        %v1010 = vcombine.low %v985, %v993
        %v1011 = vcombine.high %v985, %v993
        %v1013 = vunpack.c.l.s4 1934713408
        %v1014 = vunpack.c.0.s8 %v1013
        %v1015 = vlaneseq
        %v1016 = vshrl.u32 %v1015, 7
        %v1017 = vsub.s32 %v1014, %v1016
        %v1018 = vrot.slane %v1010, %v1017
        %v1020 = vunpack.c.l.s4 1934713408
        %v1021 = vunpack.c.0.s8 %v1020
        %v1022 = vlaneseq
        %v1023 = vshrl.u32 %v1022, 7
        %v1024 = vsub.s32 %v1021, %v1023
        %v1025 = vrot.slane %v1011, %v1024
        %v1026 = vcombine.low %v1002, %v1018
        %v1027 = vcombine.high %v1002, %v1018
        %v1028 = vcombine.low %v1009, %v1025
        %v1029 = vcombine.high %v1009, %v1025
        %v1030 = vcombine.low %v934, %v941
        %v1032 = vunpack.c.l.s4 1983009808
        %v1033 = vunpack.c.0.s8 %v1032
        %v1034 = vlaneseq
        %v1035 = vshrl.u32 %v1034, 7
        %v1036 = vsub.s32 %v1033, %v1035
        %v1037 = vrot.slane %v1030, %v1036
        %v1038 = vcombine.low %v958, %v959
        %v1040 = vunpack.c.l.s4 1983009808
        %v1041 = vunpack.c.0.s8 %v1040
        %v1042 = vlaneseq
        %v1043 = vshrl.u32 %v1042, 7
        %v1044 = vsub.s32 %v1041, %v1043
        %v1045 = vrot.slane %v1038, %v1044
        %v1046 = vcombine.low %v950, %v957
        %v1048 = vunpack.c.l.s4 1983009808
        %v1049 = vunpack.c.0.s8 %v1048
        %v1050 = vlaneseq
        %v1051 = vshrl.u32 %v1050, 7
        %v1052 = vsub.s32 %v1049, %v1051
        %v1053 = vrot.slane %v1046, %v1052
        %v1054 = vcombine.low %v960, %v961
        %v1056 = vunpack.c.l.s4 1983009808
        %v1057 = vunpack.c.0.s8 %v1056
        %v1058 = vlaneseq
        %v1059 = vshrl.u32 %v1058, 7
        %v1060 = vsub.s32 %v1057, %v1059
        %v1061 = vrot.slane %v1054, %v1060
        %v1062 = vcombine.low %v1037, %v1045
        %v1063 = vcombine.high %v1037, %v1045
        %v1065 = vunpack.c.l.s4 1934713408
        %v1066 = vunpack.c.0.s8 %v1065
        %v1067 = vlaneseq
        %v1068 = vshrl.u32 %v1067, 7
        %v1069 = vsub.s32 %v1066, %v1068
        %v1070 = vrot.slane %v1062, %v1069
        %v1072 = vunpack.c.l.s4 1934713408
        %v1073 = vunpack.c.0.s8 %v1072
        %v1074 = vlaneseq
        %v1075 = vshrl.u32 %v1074, 7
        %v1076 = vsub.s32 %v1073, %v1075
        %v1077 = vrot.slane %v1063, %v1076
        %v1078 = vcombine.low %v1053, %v1061
        %v1079 = vcombine.high %v1053, %v1061
        %v1081 = vunpack.c.l.s4 1934713408
        %v1082 = vunpack.c.0.s8 %v1081
        %v1083 = vlaneseq
        %v1084 = vshrl.u32 %v1083, 7
        %v1085 = vsub.s32 %v1082, %v1084
        %v1086 = vrot.slane %v1078, %v1085
        %v1088 = vunpack.c.l.s4 1934713408
        %v1089 = vunpack.c.0.s8 %v1088
        %v1090 = vlaneseq
        %v1091 = vshrl.u32 %v1090, 7
        %v1092 = vsub.s32 %v1089, %v1091
        %v1093 = vrot.slane %v1079, %v1092
        %v1094 = vcombine.low %v1070, %v1086
        %v1095 = vcombine.high %v1070, %v1086
        %v1096 = vcombine.low %v1077, %v1093
        %v1097 = vcombine.high %v1077, %v1093
        %1100 = vrot.lane.b32.xlu0 %v723, 96
        %v1101 = vpop.permute.xlu0 %1100
        %1102 = vrot.lane.b32.xlu0 %v729, 96
        %v1103 = vpop.permute.xlu0 %1102
        %1106 = vrot.lane.b32.xlu0 %v723, 64
        %v1107 = vpop.permute.xlu0 %1106
        %1108 = vrot.lane.b32.xlu0 %v729, 64
        %v1109 = vpop.permute.xlu0 %1108
        %1112 = vrot.lane.b32.xlu0 %v723, 32
        %v1113 = vpop.permute.xlu0 %1112
        %1114 = vrot.lane.b32.xlu0 %v729, 32
        %v1115 = vpop.permute.xlu0 %1114
        %v1118 = vcombine.low %v723, %v1107
        %v1119 = vcombine.high %v723, %v1107
        %v1121 = vunpack.c.l.s4 1983009808
        %v1122 = vunpack.c.0.s8 %v1121
        %v1123 = vlaneseq
        %v1124 = vshrl.u32 %v1123, 7
        %v1125 = vsub.s32 %v1122, %v1124
        %v1126 = vrot.slane %v1118, %v1125
        %v1128 = vunpack.c.l.s4 1983009808
        %v1129 = vunpack.c.0.s8 %v1128
        %v1130 = vlaneseq
        %v1131 = vshrl.u32 %v1130, 7
        %v1132 = vsub.s32 %v1129, %v1131
        %v1133 = vrot.slane %v1119, %v1132
        %v1134 = vcombine.low %v1101, %v1113
        %v1135 = vcombine.high %v1101, %v1113
        %v1137 = vunpack.c.l.s4 1983009808
        %v1138 = vunpack.c.0.s8 %v1137
        %v1139 = vlaneseq
        %v1140 = vshrl.u32 %v1139, 7
        %v1141 = vsub.s32 %v1138, %v1140
        %v1142 = vrot.slane %v1134, %v1141
        %v1144 = vunpack.c.l.s4 1983009808
        %v1145 = vunpack.c.0.s8 %v1144
        %v1146 = vlaneseq
        %v1147 = vshrl.u32 %v1146, 7
        %v1148 = vsub.s32 %v1145, %v1147
        %v1149 = vrot.slane %v1135, %v1148
        %v1150 = vcombine.low %v1126, %v1142
        %v1151 = vcombine.high %v1126, %v1142
        %v1153 = vunpack.c.l.s4 1934713408
        %v1154 = vunpack.c.0.s8 %v1153
        %v1155 = vlaneseq
        %v1156 = vshrl.u32 %v1155, 7
        %v1157 = vsub.s32 %v1154, %v1156
        %v1158 = vrot.slane %v1150, %v1157
        %v1160 = vunpack.c.l.s4 1934713408
        %v1161 = vunpack.c.0.s8 %v1160
        %v1162 = vlaneseq
        %v1163 = vshrl.u32 %v1162, 7
        %v1164 = vsub.s32 %v1161, %v1163
        %v1165 = vrot.slane %v1151, %v1164
        %v1166 = vcombine.low %v1133, %v1149
        %v1167 = vcombine.high %v1133, %v1149
        %v1169 = vunpack.c.l.s4 1934713408
        %v1170 = vunpack.c.0.s8 %v1169
        %v1171 = vlaneseq
        %v1172 = vshrl.u32 %v1171, 7
        %v1173 = vsub.s32 %v1170, %v1172
        %v1174 = vrot.slane %v1166, %v1173
        %v1176 = vunpack.c.l.s4 1934713408
        %v1177 = vunpack.c.0.s8 %v1176
        %v1178 = vlaneseq
        %v1179 = vshrl.u32 %v1178, 7
        %v1180 = vsub.s32 %v1177, %v1179
        %v1181 = vrot.slane %v1167, %v1180
        %v1182 = vcombine.high %v1158, 0.0
        %v1183 = vcombine.high %v1165, 0.0
        %v1184 = vcombine.high %v1174, 0.0
        %v1185 = vcombine.high %v1181, 0.0
        %v1186 = vcombine.low %v729, %v1109
        %v1187 = vcombine.high %v729, %v1109
        %v1189 = vunpack.c.l.s4 1983009808
        %v1190 = vunpack.c.0.s8 %v1189
        %v1191 = vlaneseq
        %v1192 = vshrl.u32 %v1191, 7
        %v1193 = vsub.s32 %v1190, %v1192
        %v1194 = vrot.slane %v1186, %v1193
        %v1196 = vunpack.c.l.s4 1983009808
        %v1197 = vunpack.c.0.s8 %v1196
        %v1198 = vlaneseq
        %v1199 = vshrl.u32 %v1198, 7
        %v1200 = vsub.s32 %v1197, %v1199
        %v1201 = vrot.slane %v1187, %v1200
        %v1202 = vcombine.low %v1103, %v1115
        %v1203 = vcombine.high %v1103, %v1115
        %v1205 = vunpack.c.l.s4 1983009808
        %v1206 = vunpack.c.0.s8 %v1205
        %v1207 = vlaneseq
        %v1208 = vshrl.u32 %v1207, 7
        %v1209 = vsub.s32 %v1206, %v1208
        %v1210 = vrot.slane %v1202, %v1209
        %v1212 = vunpack.c.l.s4 1983009808
        %v1213 = vunpack.c.0.s8 %v1212
        %v1214 = vlaneseq
        %v1215 = vshrl.u32 %v1214, 7
        %v1216 = vsub.s32 %v1213, %v1215
        %v1217 = vrot.slane %v1203, %v1216
        %v1218 = vcombine.low %v1194, %v1210
        %v1219 = vcombine.high %v1194, %v1210
        %v1221 = vunpack.c.l.s4 1934713408
        %v1222 = vunpack.c.0.s8 %v1221
        %v1223 = vlaneseq
        %v1224 = vshrl.u32 %v1223, 7
        %v1225 = vsub.s32 %v1222, %v1224
        %v1226 = vrot.slane %v1218, %v1225
        %v1228 = vunpack.c.l.s4 1934713408
        %v1229 = vunpack.c.0.s8 %v1228
        %v1230 = vlaneseq
        %v1231 = vshrl.u32 %v1230, 7
        %v1232 = vsub.s32 %v1229, %v1231
        %v1233 = vrot.slane %v1219, %v1232
        %v1234 = vcombine.low %v1201, %v1217
        %v1235 = vcombine.high %v1201, %v1217
        %v1237 = vunpack.c.l.s4 1934713408
        %v1238 = vunpack.c.0.s8 %v1237
        %v1239 = vlaneseq
        %v1240 = vshrl.u32 %v1239, 7
        %v1241 = vsub.s32 %v1238, %v1240
        %v1242 = vrot.slane %v1234, %v1241
        %v1244 = vunpack.c.l.s4 1934713408
        %v1245 = vunpack.c.0.s8 %v1244
        %v1246 = vlaneseq
        %v1247 = vshrl.u32 %v1246, 7
        %v1248 = vsub.s32 %v1245, %v1247
        %v1249 = vrot.slane %v1235, %v1248
        %v1250 = vcombine.high %v1226, 0.0
        %v1251 = vcombine.high %v1233, 0.0
        %v1252 = vcombine.high %v1242, 0.0
        %v1253 = vcombine.high %v1249, 0.0
        %v1254 = vcombine.low %v1158, %v1165
        %v1256 = vunpack.c.l.s4 1983009808
        %v1257 = vunpack.c.0.s8 %v1256
        %v1258 = vlaneseq
        %v1259 = vshrl.u32 %v1258, 7
        %v1260 = vsub.s32 %v1257, %v1259
        %v1261 = vrot.slane %v1254, %v1260
        %v1262 = vcombine.low %v1182, %v1183
        %v1264 = vunpack.c.l.s4 1983009808
        %v1265 = vunpack.c.0.s8 %v1264
        %v1266 = vlaneseq
        %v1267 = vshrl.u32 %v1266, 7
        %v1268 = vsub.s32 %v1265, %v1267
        %v1269 = vrot.slane %v1262, %v1268
        %v1270 = vcombine.low %v1174, %v1181
        %v1272 = vunpack.c.l.s4 1983009808
        %v1273 = vunpack.c.0.s8 %v1272
        %v1274 = vlaneseq
        %v1275 = vshrl.u32 %v1274, 7
        %v1276 = vsub.s32 %v1273, %v1275
        %v1277 = vrot.slane %v1270, %v1276
        %v1278 = vcombine.low %v1184, %v1185
        %v1280 = vunpack.c.l.s4 1983009808
        %v1281 = vunpack.c.0.s8 %v1280
        %v1282 = vlaneseq
        %v1283 = vshrl.u32 %v1282, 7
        %v1284 = vsub.s32 %v1281, %v1283
        %v1285 = vrot.slane %v1278, %v1284
        %v1286 = vcombine.low %v1261, %v1269
        %v1287 = vcombine.high %v1261, %v1269
        %v1289 = vunpack.c.l.s4 1934713408
        %v1290 = vunpack.c.0.s8 %v1289
        %v1291 = vlaneseq
        %v1292 = vshrl.u32 %v1291, 7
        %v1293 = vsub.s32 %v1290, %v1292
        %v1294 = vrot.slane %v1286, %v1293
        %v1296 = vunpack.c.l.s4 1934713408
        %v1297 = vunpack.c.0.s8 %v1296
        %v1298 = vlaneseq
        %v1299 = vshrl.u32 %v1298, 7
        %v1300 = vsub.s32 %v1297, %v1299
        %v1301 = vrot.slane %v1287, %v1300
        %v1302 = vcombine.low %v1277, %v1285
        %v1303 = vcombine.high %v1277, %v1285
        %v1305 = vunpack.c.l.s4 1934713408
        %v1306 = vunpack.c.0.s8 %v1305
        %v1307 = vlaneseq
        %v1308 = vshrl.u32 %v1307, 7
        %v1309 = vsub.s32 %v1306, %v1308
        %v1310 = vrot.slane %v1302, %v1309
        %v1312 = vunpack.c.l.s4 1934713408
        %v1313 = vunpack.c.0.s8 %v1312
        %v1314 = vlaneseq
        %v1315 = vshrl.u32 %v1314, 7
        %v1316 = vsub.s32 %v1313, %v1315
        %v1317 = vrot.slane %v1303, %v1316
        %v1318 = vcombine.low %v1294, %v1310
        %v1319 = vcombine.high %v1294, %v1310
        %v1320 = vcombine.low %v1301, %v1317
        %v1321 = vcombine.high %v1301, %v1317
        %v1322 = vcombine.low %v1226, %v1233
        %v1324 = vunpack.c.l.s4 1983009808
        %v1325 = vunpack.c.0.s8 %v1324
        %v1326 = vlaneseq
        %v1327 = vshrl.u32 %v1326, 7
        %v1328 = vsub.s32 %v1325, %v1327
        %v1329 = vrot.slane %v1322, %v1328
        %v1330 = vcombine.low %v1250, %v1251
        %v1332 = vunpack.c.l.s4 1983009808
        %v1333 = vunpack.c.0.s8 %v1332
        %v1334 = vlaneseq
        %v1335 = vshrl.u32 %v1334, 7
        %v1336 = vsub.s32 %v1333, %v1335
        %v1337 = vrot.slane %v1330, %v1336
        %v1338 = vcombine.low %v1242, %v1249
        %v1340 = vunpack.c.l.s4 1983009808
        %v1341 = vunpack.c.0.s8 %v1340
        %v1342 = vlaneseq
        %v1343 = vshrl.u32 %v1342, 7
        %v1344 = vsub.s32 %v1341, %v1343
        %v1345 = vrot.slane %v1338, %v1344
        %v1346 = vcombine.low %v1252, %v1253
        %v1348 = vunpack.c.l.s4 1983009808
        %v1349 = vunpack.c.0.s8 %v1348
        %v1350 = vlaneseq
        %v1351 = vshrl.u32 %v1350, 7
        %v1352 = vsub.s32 %v1349, %v1351
        %v1353 = vrot.slane %v1346, %v1352
        %v1354 = vcombine.low %v1329, %v1337
        %v1355 = vcombine.high %v1329, %v1337
        %v1357 = vunpack.c.l.s4 1934713408
        %v1358 = vunpack.c.0.s8 %v1357
        %v1359 = vlaneseq
        %v1360 = vshrl.u32 %v1359, 7
        %v1361 = vsub.s32 %v1358, %v1360
        %v1362 = vrot.slane %v1354, %v1361
        %v1364 = vunpack.c.l.s4 1934713408
        %v1365 = vunpack.c.0.s8 %v1364
        %v1366 = vlaneseq
        %v1367 = vshrl.u32 %v1366, 7
        %v1368 = vsub.s32 %v1365, %v1367
        %v1369 = vrot.slane %v1355, %v1368
        %v1370 = vcombine.low %v1345, %v1353
        %v1371 = vcombine.high %v1345, %v1353
        %v1373 = vunpack.c.l.s4 1934713408
        %v1374 = vunpack.c.0.s8 %v1373
        %v1375 = vlaneseq
        %v1376 = vshrl.u32 %v1375, 7
        %v1377 = vsub.s32 %v1374, %v1376
        %v1378 = vrot.slane %v1370, %v1377
        %v1380 = vunpack.c.l.s4 1934713408
        %v1381 = vunpack.c.0.s8 %v1380
        %v1382 = vlaneseq
        %v1383 = vshrl.u32 %v1382, 7
        %v1384 = vsub.s32 %v1381, %v1383
        %v1385 = vrot.slane %v1371, %v1384
        %v1386 = vcombine.low %v1362, %v1378
        %v1387 = vcombine.high %v1362, %v1378
        %v1388 = vcombine.low %v1369, %v1385
        %v1389 = vcombine.high %v1369, %v1385
        %1392 = vrot.lane.b32.xlu0 %v798, 96
        %v1393 = vpop.permute.xlu0 %1392
        %1394 = vrot.lane.b32.xlu0 %v803, 96
        %v1395 = vpop.permute.xlu0 %1394
        %1398 = vrot.lane.b32.xlu0 %v798, 64
        %v1399 = vpop.permute.xlu0 %1398
        %1400 = vrot.lane.b32.xlu0 %v803, 64
        %v1401 = vpop.permute.xlu0 %1400
        %1404 = vrot.lane.b32.xlu0 %v798, 32
        %v1405 = vpop.permute.xlu0 %1404
        %1406 = vrot.lane.b32.xlu0 %v803, 32
        %v1407 = vpop.permute.xlu0 %1406
        %v1410 = vcombine.low %v798, %v1399
        %v1411 = vcombine.high %v798, %v1399
        %v1413 = vunpack.c.l.s4 1983009808
        %v1414 = vunpack.c.0.s8 %v1413
        %v1415 = vlaneseq
        %v1416 = vshrl.u32 %v1415, 7
        %v1417 = vsub.s32 %v1414, %v1416
        %v1418 = vrot.slane %v1410, %v1417
        %v1420 = vunpack.c.l.s4 1983009808
        %v1421 = vunpack.c.0.s8 %v1420
        %v1422 = vlaneseq
        %v1423 = vshrl.u32 %v1422, 7
        %v1424 = vsub.s32 %v1421, %v1423
        %v1425 = vrot.slane %v1411, %v1424
        %v1426 = vcombine.low %v1393, %v1405
        %v1427 = vcombine.high %v1393, %v1405
        %v1429 = vunpack.c.l.s4 1983009808
        %v1430 = vunpack.c.0.s8 %v1429
        %v1431 = vlaneseq
        %v1432 = vshrl.u32 %v1431, 7
        %v1433 = vsub.s32 %v1430, %v1432
        %v1434 = vrot.slane %v1426, %v1433
        %v1436 = vunpack.c.l.s4 1983009808
        %v1437 = vunpack.c.0.s8 %v1436
        %v1438 = vlaneseq
        %v1439 = vshrl.u32 %v1438, 7
        %v1440 = vsub.s32 %v1437, %v1439
        %v1441 = vrot.slane %v1427, %v1440
        %v1442 = vcombine.low %v1418, %v1434
        %v1443 = vcombine.high %v1418, %v1434
        %v1445 = vunpack.c.l.s4 1934713408
        %v1446 = vunpack.c.0.s8 %v1445
        %v1447 = vlaneseq
        %v1448 = vshrl.u32 %v1447, 7
        %v1449 = vsub.s32 %v1446, %v1448
        %v1450 = vrot.slane %v1442, %v1449
        %v1452 = vunpack.c.l.s4 1934713408
        %v1453 = vunpack.c.0.s8 %v1452
        %v1454 = vlaneseq
        %v1455 = vshrl.u32 %v1454, 7
        %v1456 = vsub.s32 %v1453, %v1455
        %v1457 = vrot.slane %v1443, %v1456
        %v1458 = vcombine.low %v1425, %v1441
        %v1459 = vcombine.high %v1425, %v1441
        %v1461 = vunpack.c.l.s4 1934713408
        %v1462 = vunpack.c.0.s8 %v1461
        %v1463 = vlaneseq
        %v1464 = vshrl.u32 %v1463, 7
        %v1465 = vsub.s32 %v1462, %v1464
        %v1466 = vrot.slane %v1458, %v1465
        %v1468 = vunpack.c.l.s4 1934713408
        %v1469 = vunpack.c.0.s8 %v1468
        %v1470 = vlaneseq
        %v1471 = vshrl.u32 %v1470, 7
        %v1472 = vsub.s32 %v1469, %v1471
        %v1473 = vrot.slane %v1459, %v1472
        %v1474 = vcombine.high %v1450, 0.0
        %v1475 = vcombine.high %v1457, 0.0
        %v1476 = vcombine.high %v1466, 0.0
        %v1477 = vcombine.high %v1473, 0.0
        %v1478 = vcombine.low %v803, %v1401
        %v1479 = vcombine.high %v803, %v1401
        %v1481 = vunpack.c.l.s4 1983009808
        %v1482 = vunpack.c.0.s8 %v1481
        %v1483 = vlaneseq
        %v1484 = vshrl.u32 %v1483, 7
        %v1485 = vsub.s32 %v1482, %v1484
        %v1486 = vrot.slane %v1478, %v1485
        %v1488 = vunpack.c.l.s4 1983009808
        %v1489 = vunpack.c.0.s8 %v1488
        %v1490 = vlaneseq
        %v1491 = vshrl.u32 %v1490, 7
        %v1492 = vsub.s32 %v1489, %v1491
        %v1493 = vrot.slane %v1479, %v1492
        %v1494 = vcombine.low %v1395, %v1407
        %v1495 = vcombine.high %v1395, %v1407
        %v1497 = vunpack.c.l.s4 1983009808
        %v1498 = vunpack.c.0.s8 %v1497
        %v1499 = vlaneseq
        %v1500 = vshrl.u32 %v1499, 7
        %v1501 = vsub.s32 %v1498, %v1500
        %v1502 = vrot.slane %v1494, %v1501
        %v1504 = vunpack.c.l.s4 1983009808
        %v1505 = vunpack.c.0.s8 %v1504
        %v1506 = vlaneseq
        %v1507 = vshrl.u32 %v1506, 7
        %v1508 = vsub.s32 %v1505, %v1507
        %v1509 = vrot.slane %v1495, %v1508
        %v1510 = vcombine.low %v1486, %v1502
        %v1511 = vcombine.high %v1486, %v1502
        %v1513 = vunpack.c.l.s4 1934713408
        %v1514 = vunpack.c.0.s8 %v1513
        %v1515 = vlaneseq
        %v1516 = vshrl.u32 %v1515, 7
        %v1517 = vsub.s32 %v1514, %v1516
        %v1518 = vrot.slane %v1510, %v1517
        %v1520 = vunpack.c.l.s4 1934713408
        %v1521 = vunpack.c.0.s8 %v1520
        %v1522 = vlaneseq
        %v1523 = vshrl.u32 %v1522, 7
        %v1524 = vsub.s32 %v1521, %v1523
        %v1525 = vrot.slane %v1511, %v1524
        %v1526 = vcombine.low %v1493, %v1509
        %v1527 = vcombine.high %v1493, %v1509
        %v1529 = vunpack.c.l.s4 1934713408
        %v1530 = vunpack.c.0.s8 %v1529
        %v1531 = vlaneseq
        %v1532 = vshrl.u32 %v1531, 7
        %v1533 = vsub.s32 %v1530, %v1532
        %v1534 = vrot.slane %v1526, %v1533
        %v1536 = vunpack.c.l.s4 1934713408
        %v1537 = vunpack.c.0.s8 %v1536
        %v1538 = vlaneseq
        %v1539 = vshrl.u32 %v1538, 7
        %v1540 = vsub.s32 %v1537, %v1539
        %v1541 = vrot.slane %v1527, %v1540
        %v1542 = vcombine.high %v1518, 0.0
        %v1543 = vcombine.high %v1525, 0.0
        %v1544 = vcombine.high %v1534, 0.0
        %v1545 = vcombine.high %v1541, 0.0
        %v1546 = vcombine.low %v1450, %v1457
        %v1548 = vunpack.c.l.s4 1983009808
        %v1549 = vunpack.c.0.s8 %v1548
        %v1550 = vlaneseq
        %v1551 = vshrl.u32 %v1550, 7
        %v1552 = vsub.s32 %v1549, %v1551
        %v1553 = vrot.slane %v1546, %v1552
        %v1554 = vcombine.low %v1474, %v1475
        %v1556 = vunpack.c.l.s4 1983009808
        %v1557 = vunpack.c.0.s8 %v1556
        %v1558 = vlaneseq
        %v1559 = vshrl.u32 %v1558, 7
        %v1560 = vsub.s32 %v1557, %v1559
        %v1561 = vrot.slane %v1554, %v1560
        %v1562 = vcombine.low %v1466, %v1473
        %v1564 = vunpack.c.l.s4 1983009808
        %v1565 = vunpack.c.0.s8 %v1564
        %v1566 = vlaneseq
        %v1567 = vshrl.u32 %v1566, 7
        %v1568 = vsub.s32 %v1565, %v1567
        %v1569 = vrot.slane %v1562, %v1568
        %v1570 = vcombine.low %v1476, %v1477
        %v1572 = vunpack.c.l.s4 1983009808
        %v1573 = vunpack.c.0.s8 %v1572
        %v1574 = vlaneseq
        %v1575 = vshrl.u32 %v1574, 7
        %v1576 = vsub.s32 %v1573, %v1575
        %v1577 = vrot.slane %v1570, %v1576
        %v1578 = vcombine.low %v1553, %v1561
        %v1579 = vcombine.high %v1553, %v1561
        %v1581 = vunpack.c.l.s4 1934713408
        %v1582 = vunpack.c.0.s8 %v1581
        %v1583 = vlaneseq
        %v1584 = vshrl.u32 %v1583, 7
        %v1585 = vsub.s32 %v1582, %v1584
        %v1586 = vrot.slane %v1578, %v1585
        %v1588 = vunpack.c.l.s4 1934713408
        %v1589 = vunpack.c.0.s8 %v1588
        %v1590 = vlaneseq
        %v1591 = vshrl.u32 %v1590, 7
        %v1592 = vsub.s32 %v1589, %v1591
        %v1593 = vrot.slane %v1579, %v1592
        %v1594 = vcombine.low %v1569, %v1577
        %v1595 = vcombine.high %v1569, %v1577
        %v1597 = vunpack.c.l.s4 1934713408
        %v1598 = vunpack.c.0.s8 %v1597
        %v1599 = vlaneseq
        %v1600 = vshrl.u32 %v1599, 7
        %v1601 = vsub.s32 %v1598, %v1600
        %v1602 = vrot.slane %v1594, %v1601
        %v1604 = vunpack.c.l.s4 1934713408
        %v1605 = vunpack.c.0.s8 %v1604
        %v1606 = vlaneseq
        %v1607 = vshrl.u32 %v1606, 7
        %v1608 = vsub.s32 %v1605, %v1607
        %v1609 = vrot.slane %v1595, %v1608
        %v1610 = vcombine.low %v1586, %v1602
        %v1611 = vcombine.high %v1586, %v1602
        %v1612 = vcombine.low %v1593, %v1609
        %v1613 = vcombine.high %v1593, %v1609
        %v1614 = vcombine.low %v1518, %v1525
        %v1616 = vunpack.c.l.s4 1983009808
        %v1617 = vunpack.c.0.s8 %v1616
        %v1618 = vlaneseq
        %v1619 = vshrl.u32 %v1618, 7
        %v1620 = vsub.s32 %v1617, %v1619
        %v1621 = vrot.slane %v1614, %v1620
        %v1622 = vcombine.low %v1542, %v1543
        %v1624 = vunpack.c.l.s4 1983009808
        %v1625 = vunpack.c.0.s8 %v1624
        %v1626 = vlaneseq
        %v1627 = vshrl.u32 %v1626, 7
        %v1628 = vsub.s32 %v1625, %v1627
        %v1629 = vrot.slane %v1622, %v1628
        %v1630 = vcombine.low %v1534, %v1541
        %v1632 = vunpack.c.l.s4 1983009808
        %v1633 = vunpack.c.0.s8 %v1632
        %v1634 = vlaneseq
        %v1635 = vshrl.u32 %v1634, 7
        %v1636 = vsub.s32 %v1633, %v1635
        %v1637 = vrot.slane %v1630, %v1636
        %v1638 = vcombine.low %v1544, %v1545
        %v1640 = vunpack.c.l.s4 1983009808
        %v1641 = vunpack.c.0.s8 %v1640
        %v1642 = vlaneseq
        %v1643 = vshrl.u32 %v1642, 7
        %v1644 = vsub.s32 %v1641, %v1643
        %v1645 = vrot.slane %v1638, %v1644
        %v1646 = vcombine.low %v1621, %v1629
        %v1647 = vcombine.high %v1621, %v1629
        %v1649 = vunpack.c.l.s4 1934713408
        %v1650 = vunpack.c.0.s8 %v1649
        %v1651 = vlaneseq
        %v1652 = vshrl.u32 %v1651, 7
        %v1653 = vsub.s32 %v1650, %v1652
        %v1654 = vrot.slane %v1646, %v1653
        %v1656 = vunpack.c.l.s4 1934713408
        %v1657 = vunpack.c.0.s8 %v1656
        %v1658 = vlaneseq
        %v1659 = vshrl.u32 %v1658, 7
        %v1660 = vsub.s32 %v1657, %v1659
        %v1661 = vrot.slane %v1647, %v1660
        %v1662 = vcombine.low %v1637, %v1645
        %v1663 = vcombine.high %v1637, %v1645
        %v1665 = vunpack.c.l.s4 1934713408
        %v1666 = vunpack.c.0.s8 %v1665
        %v1667 = vlaneseq
        %v1668 = vshrl.u32 %v1667, 7
        %v1669 = vsub.s32 %v1666, %v1668
        %v1670 = vrot.slane %v1662, %v1669
        %v1672 = vunpack.c.l.s4 1934713408
        %v1673 = vunpack.c.0.s8 %v1672
        %v1674 = vlaneseq
        %v1675 = vshrl.u32 %v1674, 7
        %v1676 = vsub.s32 %v1673, %v1675
        %v1677 = vrot.slane %v1663, %v1676
        %v1678 = vcombine.low %v1654, %v1670
        %v1679 = vcombine.high %v1654, %v1670
        %v1680 = vcombine.low %v1661, %v1677
        %v1681 = vcombine.high %v1661, %v1677
        %vm1682 = vcmask 261120
        %v1684 = vsel %vm1682, %v1026, 0
        %v1687 = vsel %vm1682, %v1318, 0
        %1689 = vmatprep.subr.mxu0 0.0
        %1690 = vmatpush1.xpose.msra.mxu0 0.0
        %1691 = vmatprep.subr.mxu0 0.0
        %1692 = vmatpush1.xpose.msra.mxu0 0.0
        %1693 = vmatprep.subr.mxu0 0.0
        %1694 = vmatpush1.xpose.msra.mxu0 0.0
        %1695 = vmatprep.subr.mxu0 0.0
        %1696 = vmatpush1.xpose.msra.mxu0 0.0
        %1697 = vmatprep.subr.mxu0 0.0
        %1698 = vmatpush1.xpose.msra.mxu0 0.0
        %1699 = vmatprep.subr.mxu0 0.0
        %1700 = vmatpush1.xpose.msra.mxu0 0.0
        %1701 = vmatprep.subr.mxu0 0.0
        %1702 = vmatpush1.xpose.msra.mxu0 0.0
        %1703 = vmatprep.subr.mxu0 0.0
        %1704 = vmatpush1.xpose.msra.mxu0 0.0
        %1705 = vmatprep.subr.mxu0 0.0
        %1706 = vmatpush1.xpose.msra.mxu0 0.0
        %1707 = vmatprep.subr.mxu0 0.0
        %1708 = vmatpush1.xpose.msra.mxu0 0.0
        %1709 = vmatprep.subr.mxu0 0.0
        %1710 = vmatpush1.xpose.msra.mxu0 0.0
        %1711 = vmatprep.subr.mxu0 0.0
        %1712 = vmatpush1.xpose.msra.mxu0 0.0
        %1713 = vmatprep.subr.mxu0 0.0
        %1714 = vmatpush1.xpose.msra.mxu0 0.0
        %1715 = vmatprep.subr.mxu0 0.0
        %1716 = vmatpush1.xpose.msra.mxu0 0.0
        %1717 = vmatprep.subr.mxu0 0.0
        %1718 = vmatpush1.xpose.msra.mxu0 0.0
        %1719 = vmatprep.subr.mxu0 0.0
        %1720 = vmatpush1.xpose.msra.mxu0 %v1687
        %1721 = vmatprep.subr.mxu0 0.0
        %1722 = vmatpush2.xpose.msra.mxu0 0.0
        %1723 = vmatprep.subr.mxu0 0.0
        %1724 = vmatpush2.xpose.msra.mxu0 0.0
        %1725 = vmatprep.subr.mxu0 0.0
        %1726 = vmatpush2.xpose.msra.mxu0 0.0
        %1727 = vmatprep.subr.mxu0 0.0
        %1728 = vmatpush2.xpose.msra.mxu0 0.0
        %1729 = vmatprep.subr.mxu0 0.0
        %1730 = vmatpush2.xpose.msra.mxu0 0.0
        %1731 = vmatprep.subr.mxu0 0.0
        %1732 = vmatpush2.xpose.msra.mxu0 0.0
        %1733 = vmatprep.subr.mxu0 0.0
        %1734 = vmatpush2.xpose.msra.mxu0 0.0
        %1735 = vmatprep.subr.mxu0 0.0
        %1736 = vmatpush2.xpose.msra.mxu0 0.0
        %1737 = vmatprep.subr.mxu0 0.0
        %1738 = vmatpush2.xpose.msra.mxu0 0.0
        %1739 = vmatprep.subr.mxu0 0.0
        %1740 = vmatpush2.xpose.msra.mxu0 0.0
        %1741 = vmatprep.subr.mxu0 0.0
        %1742 = vmatpush2.xpose.msra.mxu0 0.0
        %1743 = vmatprep.subr.mxu0 0.0
        %1744 = vmatpush2.xpose.msra.mxu0 0.0
        %1745 = vmatprep.subr.mxu0 0.0
        %1746 = vmatpush2.xpose.msra.mxu0 0.0
        %1747 = vmatprep.subr.mxu0 0.0
        %1748 = vmatpush2.xpose.msra.mxu0 0.0
        %1749 = vmatprep.subr.mxu0 0.0
        %1750 = vmatpush2.xpose.msra.mxu0 0.0
        %1751 = vmatprep.subr.mxu0 0.0
        %1752 = vmatpush2.xpose.msra.mxu0 0.0
        %1753 = vmatprep.mubr.f32.mxu0 0.0
        %1754 = vmatmul.mubr.f32.gmra.mxu0 %v1684
        %v1755 = vpop.f32.mrf.mxu0
        %v1756 = vadd.f32 0.0, %v1755
        %v1757 = vpop.f32.mrf.mxu0
        %1758 = vdwg.mxu0
        %v1760 = vsel %vm1682, %v1027, 0
        %v1763 = vsel %vm1682, %v1319, 0
        %1765 = vmatprep.subr.mxu0 0.0
        %1766 = vmatpush1.xpose.msra.mxu0 0.0
        %1767 = vmatprep.subr.mxu0 0.0
        %1768 = vmatpush1.xpose.msra.mxu0 0.0
        %1769 = vmatprep.subr.mxu0 0.0
        %1770 = vmatpush1.xpose.msra.mxu0 0.0
        %1771 = vmatprep.subr.mxu0 0.0
        %1772 = vmatpush1.xpose.msra.mxu0 0.0
        %1773 = vmatprep.subr.mxu0 0.0
        %1774 = vmatpush1.xpose.msra.mxu0 0.0
        %1775 = vmatprep.subr.mxu0 0.0
        %1776 = vmatpush1.xpose.msra.mxu0 0.0
        %1777 = vmatprep.subr.mxu0 0.0
        %1778 = vmatpush1.xpose.msra.mxu0 0.0
        %1779 = vmatprep.subr.mxu0 0.0
        %1780 = vmatpush1.xpose.msra.mxu0 0.0
        %1781 = vmatprep.subr.mxu0 0.0
        %1782 = vmatpush1.xpose.msra.mxu0 0.0
        %1783 = vmatprep.subr.mxu0 0.0
        %1784 = vmatpush1.xpose.msra.mxu0 0.0
        %1785 = vmatprep.subr.mxu0 0.0
        %1786 = vmatpush1.xpose.msra.mxu0 0.0
        %1787 = vmatprep.subr.mxu0 0.0
        %1788 = vmatpush1.xpose.msra.mxu0 0.0
        %1789 = vmatprep.subr.mxu0 0.0
        %1790 = vmatpush1.xpose.msra.mxu0 0.0
        %1791 = vmatprep.subr.mxu0 0.0
        %1792 = vmatpush1.xpose.msra.mxu0 0.0
        %1793 = vmatprep.subr.mxu0 0.0
        %1794 = vmatpush1.xpose.msra.mxu0 0.0
        %1795 = vmatprep.subr.mxu0 0.0
        %1796 = vmatpush1.xpose.msra.mxu0 %v1763
        %1797 = vmatprep.subr.mxu0 0.0
        %1798 = vmatpush2.xpose.msra.mxu0 0.0
        %1799 = vmatprep.subr.mxu0 0.0
        %1800 = vmatpush2.xpose.msra.mxu0 0.0
        %1801 = vmatprep.subr.mxu0 0.0
        %1802 = vmatpush2.xpose.msra.mxu0 0.0
        %1803 = vmatprep.subr.mxu0 0.0
        %1804 = vmatpush2.xpose.msra.mxu0 0.0
        %1805 = vmatprep.subr.mxu0 0.0
        %1806 = vmatpush2.xpose.msra.mxu0 0.0
        %1807 = vmatprep.subr.mxu0 0.0
        %1808 = vmatpush2.xpose.msra.mxu0 0.0
        %1809 = vmatprep.subr.mxu0 0.0
        %1810 = vmatpush2.xpose.msra.mxu0 0.0
        %1811 = vmatprep.subr.mxu0 0.0
        %1812 = vmatpush2.xpose.msra.mxu0 0.0
        %1813 = vmatprep.subr.mxu0 0.0
        %1814 = vmatpush2.xpose.msra.mxu0 0.0
        %1815 = vmatprep.subr.mxu0 0.0
        %1816 = vmatpush2.xpose.msra.mxu0 0.0
        %1817 = vmatprep.subr.mxu0 0.0
        %1818 = vmatpush2.xpose.msra.mxu0 0.0
        %1819 = vmatprep.subr.mxu0 0.0
        %1820 = vmatpush2.xpose.msra.mxu0 0.0
        %1821 = vmatprep.subr.mxu0 0.0
        %1822 = vmatpush2.xpose.msra.mxu0 0.0
        %1823 = vmatprep.subr.mxu0 0.0
        %1824 = vmatpush2.xpose.msra.mxu0 0.0
        %1825 = vmatprep.subr.mxu0 0.0
        %1826 = vmatpush2.xpose.msra.mxu0 0.0
        %1827 = vmatprep.subr.mxu0 0.0
        %1828 = vmatpush2.xpose.msra.mxu0 0.0
        %1829 = vmatprep.mubr.f32.mxu0 0.0
        %1830 = vmatmul.mubr.f32.gmra.mxu0 %v1760
        %v1831 = vpop.f32.mrf.mxu0
        %v1832 = vadd.f32 0.0, %v1831
        %v1833 = vpop.f32.mrf.mxu0
        %1834 = vdwg.mxu0
        %v1836 = vsel %vm1682, %v1028, 0
        %v1839 = vsel %vm1682, %v1320, 0
        %1841 = vmatprep.subr.mxu0 0.0
        %1842 = vmatpush1.xpose.msra.mxu0 0.0
        %1843 = vmatprep.subr.mxu0 0.0
        %1844 = vmatpush1.xpose.msra.mxu0 0.0
        %1845 = vmatprep.subr.mxu0 0.0
        %1846 = vmatpush1.xpose.msra.mxu0 0.0
        %1847 = vmatprep.subr.mxu0 0.0
        %1848 = vmatpush1.xpose.msra.mxu0 0.0
        %1849 = vmatprep.subr.mxu0 0.0
        %1850 = vmatpush1.xpose.msra.mxu0 0.0
        %1851 = vmatprep.subr.mxu0 0.0
        %1852 = vmatpush1.xpose.msra.mxu0 0.0
        %1853 = vmatprep.subr.mxu0 0.0
        %1854 = vmatpush1.xpose.msra.mxu0 0.0
        %1855 = vmatprep.subr.mxu0 0.0
        %1856 = vmatpush1.xpose.msra.mxu0 0.0
        %1857 = vmatprep.subr.mxu0 0.0
        %1858 = vmatpush1.xpose.msra.mxu0 0.0
        %1859 = vmatprep.subr.mxu0 0.0
        %1860 = vmatpush1.xpose.msra.mxu0 0.0
        %1861 = vmatprep.subr.mxu0 0.0
        %1862 = vmatpush1.xpose.msra.mxu0 0.0
        %1863 = vmatprep.subr.mxu0 0.0
        %1864 = vmatpush1.xpose.msra.mxu0 0.0
        %1865 = vmatprep.subr.mxu0 0.0
        %1866 = vmatpush1.xpose.msra.mxu0 0.0
        %1867 = vmatprep.subr.mxu0 0.0
        %1868 = vmatpush1.xpose.msra.mxu0 0.0
        %1869 = vmatprep.subr.mxu0 0.0
        %1870 = vmatpush1.xpose.msra.mxu0 0.0
        %1871 = vmatprep.subr.mxu0 0.0
        %1872 = vmatpush1.xpose.msra.mxu0 %v1839
        %1873 = vmatprep.subr.mxu0 0.0
        %1874 = vmatpush2.xpose.msra.mxu0 0.0
        %1875 = vmatprep.subr.mxu0 0.0
        %1876 = vmatpush2.xpose.msra.mxu0 0.0
        %1877 = vmatprep.subr.mxu0 0.0
        %1878 = vmatpush2.xpose.msra.mxu0 0.0
        %1879 = vmatprep.subr.mxu0 0.0
        %1880 = vmatpush2.xpose.msra.mxu0 0.0
        %1881 = vmatprep.subr.mxu0 0.0
        %1882 = vmatpush2.xpose.msra.mxu0 0.0
        %1883 = vmatprep.subr.mxu0 0.0
        %1884 = vmatpush2.xpose.msra.mxu0 0.0
        %1885 = vmatprep.subr.mxu0 0.0
        %1886 = vmatpush2.xpose.msra.mxu0 0.0
        %1887 = vmatprep.subr.mxu0 0.0
        %1888 = vmatpush2.xpose.msra.mxu0 0.0
        %1889 = vmatprep.subr.mxu0 0.0
        %1890 = vmatpush2.xpose.msra.mxu0 0.0
        %1891 = vmatprep.subr.mxu0 0.0
        %1892 = vmatpush2.xpose.msra.mxu0 0.0
        %1893 = vmatprep.subr.mxu0 0.0
        %1894 = vmatpush2.xpose.msra.mxu0 0.0
        %1895 = vmatprep.subr.mxu0 0.0
        %1896 = vmatpush2.xpose.msra.mxu0 0.0
        %1897 = vmatprep.subr.mxu0 0.0
        %1898 = vmatpush2.xpose.msra.mxu0 0.0
        %1899 = vmatprep.subr.mxu0 0.0
        %1900 = vmatpush2.xpose.msra.mxu0 0.0
        %1901 = vmatprep.subr.mxu0 0.0
        %1902 = vmatpush2.xpose.msra.mxu0 0.0
        %1903 = vmatprep.subr.mxu0 0.0
        %1904 = vmatpush2.xpose.msra.mxu0 0.0
        %1905 = vmatprep.mubr.f32.mxu0 0.0
        %1906 = vmatmul.mubr.f32.gmra.mxu0 %v1836
        %v1907 = vpop.f32.mrf.mxu0
        %v1908 = vadd.f32 0.0, %v1907
        %v1909 = vpop.f32.mrf.mxu0
        %1910 = vdwg.mxu0
        %v1912 = vsel %vm1682, %v1029, 0
        %v1915 = vsel %vm1682, %v1321, 0
        %1917 = vmatprep.subr.mxu0 0.0
        %1918 = vmatpush1.xpose.msra.mxu0 0.0
        %1919 = vmatprep.subr.mxu0 0.0
        %1920 = vmatpush1.xpose.msra.mxu0 0.0
        %1921 = vmatprep.subr.mxu0 0.0
        %1922 = vmatpush1.xpose.msra.mxu0 0.0
        %1923 = vmatprep.subr.mxu0 0.0
        %1924 = vmatpush1.xpose.msra.mxu0 0.0
        %1925 = vmatprep.subr.mxu0 0.0
        %1926 = vmatpush1.xpose.msra.mxu0 0.0
        %1927 = vmatprep.subr.mxu0 0.0
        %1928 = vmatpush1.xpose.msra.mxu0 0.0
        %1929 = vmatprep.subr.mxu0 0.0
        %1930 = vmatpush1.xpose.msra.mxu0 0.0
        %1931 = vmatprep.subr.mxu0 0.0
        %1932 = vmatpush1.xpose.msra.mxu0 0.0
        %1933 = vmatprep.subr.mxu0 0.0
        %1934 = vmatpush1.xpose.msra.mxu0 0.0
        %1935 = vmatprep.subr.mxu0 0.0
        %1936 = vmatpush1.xpose.msra.mxu0 0.0
        %1937 = vmatprep.subr.mxu0 0.0
        %1938 = vmatpush1.xpose.msra.mxu0 0.0
        %1939 = vmatprep.subr.mxu0 0.0
        %1940 = vmatpush1.xpose.msra.mxu0 0.0
        %1941 = vmatprep.subr.mxu0 0.0
        %1942 = vmatpush1.xpose.msra.mxu0 0.0
        %1943 = vmatprep.subr.mxu0 0.0
        %1944 = vmatpush1.xpose.msra.mxu0 0.0
        %1945 = vmatprep.subr.mxu0 0.0
        %1946 = vmatpush1.xpose.msra.mxu0 0.0
        %1947 = vmatprep.subr.mxu0 0.0
        %1948 = vmatpush1.xpose.msra.mxu0 %v1915
        %1949 = vmatprep.subr.mxu0 0.0
        %1950 = vmatpush2.xpose.msra.mxu0 0.0
        %1951 = vmatprep.subr.mxu0 0.0
        %1952 = vmatpush2.xpose.msra.mxu0 0.0
        %1953 = vmatprep.subr.mxu0 0.0
        %1954 = vmatpush2.xpose.msra.mxu0 0.0
        %1955 = vmatprep.subr.mxu0 0.0
        %1956 = vmatpush2.xpose.msra.mxu0 0.0
        %1957 = vmatprep.subr.mxu0 0.0
        %1958 = vmatpush2.xpose.msra.mxu0 0.0
        %1959 = vmatprep.subr.mxu0 0.0
        %1960 = vmatpush2.xpose.msra.mxu0 0.0
        %1961 = vmatprep.subr.mxu0 0.0
        %1962 = vmatpush2.xpose.msra.mxu0 0.0
        %1963 = vmatprep.subr.mxu0 0.0
        %1964 = vmatpush2.xpose.msra.mxu0 0.0
        %1965 = vmatprep.subr.mxu0 0.0
        %1966 = vmatpush2.xpose.msra.mxu0 0.0
        %1967 = vmatprep.subr.mxu0 0.0
        %1968 = vmatpush2.xpose.msra.mxu0 0.0
        %1969 = vmatprep.subr.mxu0 0.0
        %1970 = vmatpush2.xpose.msra.mxu0 0.0
        %1971 = vmatprep.subr.mxu0 0.0
        %1972 = vmatpush2.xpose.msra.mxu0 0.0
        %1973 = vmatprep.subr.mxu0 0.0
        %1974 = vmatpush2.xpose.msra.mxu0 0.0
        %1975 = vmatprep.subr.mxu0 0.0
        %1976 = vmatpush2.xpose.msra.mxu0 0.0
        %1977 = vmatprep.subr.mxu0 0.0
        %1978 = vmatpush2.xpose.msra.mxu0 0.0
        %1979 = vmatprep.subr.mxu0 0.0
        %1980 = vmatpush2.xpose.msra.mxu0 0.0
        %1981 = vmatprep.mubr.f32.mxu0 0.0
        %1982 = vmatmul.mubr.f32.gmra.mxu0 %v1912
        %v1983 = vpop.f32.mrf.mxu0
        %v1984 = vadd.f32 0.0, %v1983
        %v1985 = vpop.f32.mrf.mxu0
        %1986 = vdwg.mxu0
        %v1988 = vsel %vm1682, %v1094, 0
        %v1991 = vsel %vm1682, %v1386, 0
        %1993 = vmatprep.subr.mxu0 0.0
        %1994 = vmatpush1.xpose.msra.mxu0 0.0
        %1995 = vmatprep.subr.mxu0 0.0
        %1996 = vmatpush1.xpose.msra.mxu0 0.0
        %1997 = vmatprep.subr.mxu0 0.0
        %1998 = vmatpush1.xpose.msra.mxu0 0.0
        %1999 = vmatprep.subr.mxu0 0.0
        %2000 = vmatpush1.xpose.msra.mxu0 0.0
        %2001 = vmatprep.subr.mxu0 0.0
        %2002 = vmatpush1.xpose.msra.mxu0 0.0
        %2003 = vmatprep.subr.mxu0 0.0
        %2004 = vmatpush1.xpose.msra.mxu0 0.0
        %2005 = vmatprep.subr.mxu0 0.0
        %2006 = vmatpush1.xpose.msra.mxu0 0.0
        %2007 = vmatprep.subr.mxu0 0.0
        %2008 = vmatpush1.xpose.msra.mxu0 0.0
        %2009 = vmatprep.subr.mxu0 0.0
        %2010 = vmatpush1.xpose.msra.mxu0 0.0
        %2011 = vmatprep.subr.mxu0 0.0
        %2012 = vmatpush1.xpose.msra.mxu0 0.0
        %2013 = vmatprep.subr.mxu0 0.0
        %2014 = vmatpush1.xpose.msra.mxu0 0.0
        %2015 = vmatprep.subr.mxu0 0.0
        %2016 = vmatpush1.xpose.msra.mxu0 0.0
        %2017 = vmatprep.subr.mxu0 0.0
        %2018 = vmatpush1.xpose.msra.mxu0 0.0
        %2019 = vmatprep.subr.mxu0 0.0
        %2020 = vmatpush1.xpose.msra.mxu0 0.0
        %2021 = vmatprep.subr.mxu0 0.0
        %2022 = vmatpush1.xpose.msra.mxu0 0.0
        %2023 = vmatprep.subr.mxu0 0.0
        %2024 = vmatpush1.xpose.msra.mxu0 %v1991
        %2025 = vmatprep.subr.mxu0 0.0
        %2026 = vmatpush2.xpose.msra.mxu0 0.0
        %2027 = vmatprep.subr.mxu0 0.0
        %2028 = vmatpush2.xpose.msra.mxu0 0.0
        %2029 = vmatprep.subr.mxu0 0.0
        %2030 = vmatpush2.xpose.msra.mxu0 0.0
        %2031 = vmatprep.subr.mxu0 0.0
        %2032 = vmatpush2.xpose.msra.mxu0 0.0
        %2033 = vmatprep.subr.mxu0 0.0
        %2034 = vmatpush2.xpose.msra.mxu0 0.0
        %2035 = vmatprep.subr.mxu0 0.0
        %2036 = vmatpush2.xpose.msra.mxu0 0.0
        %2037 = vmatprep.subr.mxu0 0.0
        %2038 = vmatpush2.xpose.msra.mxu0 0.0
        %2039 = vmatprep.subr.mxu0 0.0
        %2040 = vmatpush2.xpose.msra.mxu0 0.0
        %2041 = vmatprep.subr.mxu0 0.0
        %2042 = vmatpush2.xpose.msra.mxu0 0.0
        %2043 = vmatprep.subr.mxu0 0.0
        %2044 = vmatpush2.xpose.msra.mxu0 0.0
        %2045 = vmatprep.subr.mxu0 0.0
        %2046 = vmatpush2.xpose.msra.mxu0 0.0
        %2047 = vmatprep.subr.mxu0 0.0
        %2048 = vmatpush2.xpose.msra.mxu0 0.0
        %2049 = vmatprep.subr.mxu0 0.0
        %2050 = vmatpush2.xpose.msra.mxu0 0.0
        %2051 = vmatprep.subr.mxu0 0.0
        %2052 = vmatpush2.xpose.msra.mxu0 0.0
        %2053 = vmatprep.subr.mxu0 0.0
        %2054 = vmatpush2.xpose.msra.mxu0 0.0
        %2055 = vmatprep.subr.mxu0 0.0
        %2056 = vmatpush2.xpose.msra.mxu0 0.0
        %2057 = vmatprep.mubr.f32.mxu0 0.0
        %2058 = vmatmul.mubr.f32.gmra.mxu0 %v1988
        %v2059 = vpop.f32.mrf.mxu0
        %v2060 = vadd.f32 0.0, %v2059
        %v2061 = vpop.f32.mrf.mxu0
        %2062 = vdwg.mxu0
        %v2064 = vsel %vm1682, %v1095, 0
        %v2067 = vsel %vm1682, %v1387, 0
        %2069 = vmatprep.subr.mxu0 0.0
        %2070 = vmatpush1.xpose.msra.mxu0 0.0
        %2071 = vmatprep.subr.mxu0 0.0
        %2072 = vmatpush1.xpose.msra.mxu0 0.0
        %2073 = vmatprep.subr.mxu0 0.0
        %2074 = vmatpush1.xpose.msra.mxu0 0.0
        %2075 = vmatprep.subr.mxu0 0.0
        %2076 = vmatpush1.xpose.msra.mxu0 0.0
        %2077 = vmatprep.subr.mxu0 0.0
        %2078 = vmatpush1.xpose.msra.mxu0 0.0
        %2079 = vmatprep.subr.mxu0 0.0
        %2080 = vmatpush1.xpose.msra.mxu0 0.0
        %2081 = vmatprep.subr.mxu0 0.0
        %2082 = vmatpush1.xpose.msra.mxu0 0.0
        %2083 = vmatprep.subr.mxu0 0.0
        %2084 = vmatpush1.xpose.msra.mxu0 0.0
        %2085 = vmatprep.subr.mxu0 0.0
        %2086 = vmatpush1.xpose.msra.mxu0 0.0
        %2087 = vmatprep.subr.mxu0 0.0
        %2088 = vmatpush1.xpose.msra.mxu0 0.0
        %2089 = vmatprep.subr.mxu0 0.0
        %2090 = vmatpush1.xpose.msra.mxu0 0.0
        %2091 = vmatprep.subr.mxu0 0.0
        %2092 = vmatpush1.xpose.msra.mxu0 0.0
        %2093 = vmatprep.subr.mxu0 0.0
        %2094 = vmatpush1.xpose.msra.mxu0 0.0
        %2095 = vmatprep.subr.mxu0 0.0
        %2096 = vmatpush1.xpose.msra.mxu0 0.0
        %2097 = vmatprep.subr.mxu0 0.0
        %2098 = vmatpush1.xpose.msra.mxu0 0.0
        %2099 = vmatprep.subr.mxu0 0.0
        %2100 = vmatpush1.xpose.msra.mxu0 %v2067
        %2101 = vmatprep.subr.mxu0 0.0
        %2102 = vmatpush2.xpose.msra.mxu0 0.0
        %2103 = vmatprep.subr.mxu0 0.0
        %2104 = vmatpush2.xpose.msra.mxu0 0.0
        %2105 = vmatprep.subr.mxu0 0.0
        %2106 = vmatpush2.xpose.msra.mxu0 0.0
        %2107 = vmatprep.subr.mxu0 0.0
        %2108 = vmatpush2.xpose.msra.mxu0 0.0
        %2109 = vmatprep.subr.mxu0 0.0
        %2110 = vmatpush2.xpose.msra.mxu0 0.0
        %2111 = vmatprep.subr.mxu0 0.0
        %2112 = vmatpush2.xpose.msra.mxu0 0.0
        %2113 = vmatprep.subr.mxu0 0.0
        %2114 = vmatpush2.xpose.msra.mxu0 0.0
        %2115 = vmatprep.subr.mxu0 0.0
        %2116 = vmatpush2.xpose.msra.mxu0 0.0
        %2117 = vmatprep.subr.mxu0 0.0
        %2118 = vmatpush2.xpose.msra.mxu0 0.0
        %2119 = vmatprep.subr.mxu0 0.0
        %2120 = vmatpush2.xpose.msra.mxu0 0.0
        %2121 = vmatprep.subr.mxu0 0.0
        %2122 = vmatpush2.xpose.msra.mxu0 0.0
        %2123 = vmatprep.subr.mxu0 0.0
        %2124 = vmatpush2.xpose.msra.mxu0 0.0
        %2125 = vmatprep.subr.mxu0 0.0
        %2126 = vmatpush2.xpose.msra.mxu0 0.0
        %2127 = vmatprep.subr.mxu0 0.0
        %2128 = vmatpush2.xpose.msra.mxu0 0.0
        %2129 = vmatprep.subr.mxu0 0.0
        %2130 = vmatpush2.xpose.msra.mxu0 0.0
        %2131 = vmatprep.subr.mxu0 0.0
        %2132 = vmatpush2.xpose.msra.mxu0 0.0
        %2133 = vmatprep.mubr.f32.mxu0 0.0
        %2134 = vmatmul.mubr.f32.gmra.mxu0 %v2064
        %v2135 = vpop.f32.mrf.mxu0
        %v2136 = vadd.f32 0.0, %v2135
        %v2137 = vpop.f32.mrf.mxu0
        %2138 = vdwg.mxu0
        %v2140 = vsel %vm1682, %v1096, 0
        %v2143 = vsel %vm1682, %v1388, 0
        %2145 = vmatprep.subr.mxu0 0.0
        %2146 = vmatpush1.xpose.msra.mxu0 0.0
        %2147 = vmatprep.subr.mxu0 0.0
        %2148 = vmatpush1.xpose.msra.mxu0 0.0
        %2149 = vmatprep.subr.mxu0 0.0
        %2150 = vmatpush1.xpose.msra.mxu0 0.0
        %2151 = vmatprep.subr.mxu0 0.0
        %2152 = vmatpush1.xpose.msra.mxu0 0.0
        %2153 = vmatprep.subr.mxu0 0.0
        %2154 = vmatpush1.xpose.msra.mxu0 0.0
        %2155 = vmatprep.subr.mxu0 0.0
        %2156 = vmatpush1.xpose.msra.mxu0 0.0
        %2157 = vmatprep.subr.mxu0 0.0
        %2158 = vmatpush1.xpose.msra.mxu0 0.0
        %2159 = vmatprep.subr.mxu0 0.0
        %2160 = vmatpush1.xpose.msra.mxu0 0.0
        %2161 = vmatprep.subr.mxu0 0.0
        %2162 = vmatpush1.xpose.msra.mxu0 0.0
        %2163 = vmatprep.subr.mxu0 0.0
        %2164 = vmatpush1.xpose.msra.mxu0 0.0
        %2165 = vmatprep.subr.mxu0 0.0
        %2166 = vmatpush1.xpose.msra.mxu0 0.0
        %2167 = vmatprep.subr.mxu0 0.0
        %2168 = vmatpush1.xpose.msra.mxu0 0.0
        %2169 = vmatprep.subr.mxu0 0.0
        %2170 = vmatpush1.xpose.msra.mxu0 0.0
        %2171 = vmatprep.subr.mxu0 0.0
        %2172 = vmatpush1.xpose.msra.mxu0 0.0
        %2173 = vmatprep.subr.mxu0 0.0
        %2174 = vmatpush1.xpose.msra.mxu0 0.0
        %2175 = vmatprep.subr.mxu0 0.0
        %2176 = vmatpush1.xpose.msra.mxu0 %v2143
        %2177 = vmatprep.subr.mxu0 0.0
        %2178 = vmatpush2.xpose.msra.mxu0 0.0
        %2179 = vmatprep.subr.mxu0 0.0
        %2180 = vmatpush2.xpose.msra.mxu0 0.0
        %2181 = vmatprep.subr.mxu0 0.0
        %2182 = vmatpush2.xpose.msra.mxu0 0.0
        %2183 = vmatprep.subr.mxu0 0.0
        %2184 = vmatpush2.xpose.msra.mxu0 0.0
        %2185 = vmatprep.subr.mxu0 0.0
        %2186 = vmatpush2.xpose.msra.mxu0 0.0
        %2187 = vmatprep.subr.mxu0 0.0
        %2188 = vmatpush2.xpose.msra.mxu0 0.0
        %2189 = vmatprep.subr.mxu0 0.0
        %2190 = vmatpush2.xpose.msra.mxu0 0.0
        %2191 = vmatprep.subr.mxu0 0.0
        %2192 = vmatpush2.xpose.msra.mxu0 0.0
        %2193 = vmatprep.subr.mxu0 0.0
        %2194 = vmatpush2.xpose.msra.mxu0 0.0
        %2195 = vmatprep.subr.mxu0 0.0
        %2196 = vmatpush2.xpose.msra.mxu0 0.0
        %2197 = vmatprep.subr.mxu0 0.0
        %2198 = vmatpush2.xpose.msra.mxu0 0.0
        %2199 = vmatprep.subr.mxu0 0.0
        %2200 = vmatpush2.xpose.msra.mxu0 0.0
        %2201 = vmatprep.subr.mxu0 0.0
        %2202 = vmatpush2.xpose.msra.mxu0 0.0
        %2203 = vmatprep.subr.mxu0 0.0
        %2204 = vmatpush2.xpose.msra.mxu0 0.0
        %2205 = vmatprep.subr.mxu0 0.0
        %2206 = vmatpush2.xpose.msra.mxu0 0.0
        %2207 = vmatprep.subr.mxu0 0.0
        %2208 = vmatpush2.xpose.msra.mxu0 0.0
        %2209 = vmatprep.mubr.f32.mxu0 0.0
        %2210 = vmatmul.mubr.f32.gmra.mxu0 %v2140
        %v2211 = vpop.f32.mrf.mxu0
        %v2212 = vadd.f32 0.0, %v2211
        %v2213 = vpop.f32.mrf.mxu0
        %2214 = vdwg.mxu0
        %v2216 = vsel %vm1682, %v1097, 0
        %v2219 = vsel %vm1682, %v1389, 0
        %2221 = vmatprep.subr.mxu0 0.0
        %2222 = vmatpush1.xpose.msra.mxu0 0.0
        %2223 = vmatprep.subr.mxu0 0.0
        %2224 = vmatpush1.xpose.msra.mxu0 0.0
        %2225 = vmatprep.subr.mxu0 0.0
        %2226 = vmatpush1.xpose.msra.mxu0 0.0
        %2227 = vmatprep.subr.mxu0 0.0
        %2228 = vmatpush1.xpose.msra.mxu0 0.0
        %2229 = vmatprep.subr.mxu0 0.0
        %2230 = vmatpush1.xpose.msra.mxu0 0.0
        %2231 = vmatprep.subr.mxu0 0.0
        %2232 = vmatpush1.xpose.msra.mxu0 0.0
        %2233 = vmatprep.subr.mxu0 0.0
        %2234 = vmatpush1.xpose.msra.mxu0 0.0
        %2235 = vmatprep.subr.mxu0 0.0
        %2236 = vmatpush1.xpose.msra.mxu0 0.0
        %2237 = vmatprep.subr.mxu0 0.0
        %2238 = vmatpush1.xpose.msra.mxu0 0.0
        %2239 = vmatprep.subr.mxu0 0.0
        %2240 = vmatpush1.xpose.msra.mxu0 0.0
        %2241 = vmatprep.subr.mxu0 0.0
        %2242 = vmatpush1.xpose.msra.mxu0 0.0
        %2243 = vmatprep.subr.mxu0 0.0
        %2244 = vmatpush1.xpose.msra.mxu0 0.0
        %2245 = vmatprep.subr.mxu0 0.0
        %2246 = vmatpush1.xpose.msra.mxu0 0.0
        %2247 = vmatprep.subr.mxu0 0.0
        %2248 = vmatpush1.xpose.msra.mxu0 0.0
        %2249 = vmatprep.subr.mxu0 0.0
        %2250 = vmatpush1.xpose.msra.mxu0 0.0
        %2251 = vmatprep.subr.mxu0 0.0
        %2252 = vmatpush1.xpose.msra.mxu0 %v2219
        %2253 = vmatprep.subr.mxu0 0.0
        %2254 = vmatpush2.xpose.msra.mxu0 0.0
        %2255 = vmatprep.subr.mxu0 0.0
        %2256 = vmatpush2.xpose.msra.mxu0 0.0
        %2257 = vmatprep.subr.mxu0 0.0
        %2258 = vmatpush2.xpose.msra.mxu0 0.0
        %2259 = vmatprep.subr.mxu0 0.0
        %2260 = vmatpush2.xpose.msra.mxu0 0.0
        %2261 = vmatprep.subr.mxu0 0.0
        %2262 = vmatpush2.xpose.msra.mxu0 0.0
        %2263 = vmatprep.subr.mxu0 0.0
        %2264 = vmatpush2.xpose.msra.mxu0 0.0
        %2265 = vmatprep.subr.mxu0 0.0
        %2266 = vmatpush2.xpose.msra.mxu0 0.0
        %2267 = vmatprep.subr.mxu0 0.0
        %2268 = vmatpush2.xpose.msra.mxu0 0.0
        %2269 = vmatprep.subr.mxu0 0.0
        %2270 = vmatpush2.xpose.msra.mxu0 0.0
        %2271 = vmatprep.subr.mxu0 0.0
        %2272 = vmatpush2.xpose.msra.mxu0 0.0
        %2273 = vmatprep.subr.mxu0 0.0
        %2274 = vmatpush2.xpose.msra.mxu0 0.0
        %2275 = vmatprep.subr.mxu0 0.0
        %2276 = vmatpush2.xpose.msra.mxu0 0.0
        %2277 = vmatprep.subr.mxu0 0.0
        %2278 = vmatpush2.xpose.msra.mxu0 0.0
        %2279 = vmatprep.subr.mxu0 0.0
        %2280 = vmatpush2.xpose.msra.mxu0 0.0
        %2281 = vmatprep.subr.mxu0 0.0
        %2282 = vmatpush2.xpose.msra.mxu0 0.0
        %2283 = vmatprep.subr.mxu0 0.0
        %2284 = vmatpush2.xpose.msra.mxu0 0.0
        %2285 = vmatprep.mubr.f32.mxu0 0.0
        %2286 = vmatmul.mubr.f32.gmra.mxu0 %v2216
        %v2287 = vpop.f32.mrf.mxu0
        %v2288 = vadd.f32 0.0, %v2287
        %v2289 = vpop.f32.mrf.mxu0
        %2290 = vdwg.mxu0
        %vm2291 = vcmask 64512
        %v2292 = vsel %vm2291, %v1756, -inf
        %2293 = vmax.xlane.f32.xlu0 %v2292
        %v2294 = vpop.xlane.xlu0 %2293
        %v2295 = vsel %vm2291, %v1832, -inf
        %2296 = vmax.xlane.f32.xlu0 %v2295
        %v2297 = vpop.xlane.xlu0 %2296
        %v2298 = vsel %vm2291, %v1908, -inf
        %2299 = vmax.xlane.f32.xlu0 %v2298
        %v2300 = vpop.xlane.xlu0 %2299
        %v2301 = vsel %vm2291, %v1984, -inf
        %2302 = vmax.xlane.f32.xlu0 %v2301
        %v2303 = vpop.xlane.xlu0 %2302
        %v2304 = vsel %vm2291, %v2060, -inf
        %2305 = vmax.xlane.f32.xlu0 %v2304
        %v2306 = vpop.xlane.xlu0 %2305
        %v2307 = vsel %vm2291, %v2136, -inf
        %2308 = vmax.xlane.f32.xlu0 %v2307
        %v2309 = vpop.xlane.xlu0 %2308
        %v2310 = vsel %vm2291, %v2212, -inf
        %2311 = vmax.xlane.f32.xlu0 %v2310
        %v2312 = vpop.xlane.xlu0 %2311
        %v2313 = vsel %vm2291, %v2288, -inf
        %2314 = vmax.xlane.f32.xlu0 %v2313
        %v2315 = vpop.xlane.xlu0 %2314
        %v2316 = vsub.f32 %v1756, %v2294
        %v2317 = vsub.f32 %v1832, %v2297
        %v2318 = vsub.f32 %v1908, %v2300
        %v2319 = vsub.f32 %v1984, %v2303
        %v2320 = vsub.f32 %v2060, %v2306
        %v2321 = vsub.f32 %v2136, %v2309
        %v2322 = vsub.f32 %v2212, %v2312
        %v2323 = vsub.f32 %v2288, %v2315
        %v2324 = vmul.f32 %v2316, 1.442695
        %v2325 = vpow.pop %v2324
        %v2326 = vmul.f32 %v2317, 1.442695
        %v2327 = vpow.pop %v2326
        %v2328 = vmul.f32 %v2318, 1.442695
        %v2329 = vpow.pop %v2328
        %v2330 = vmul.f32 %v2319, 1.442695
        %v2331 = vpow.pop %v2330
        %v2332 = vmul.f32 %v2320, 1.442695
        %v2333 = vpow.pop %v2332
        %v2334 = vmul.f32 %v2321, 1.442695
        %v2335 = vpow.pop %v2334
        %v2336 = vmul.f32 %v2322, 1.442695
        %v2337 = vpow.pop %v2336
        %v2338 = vmul.f32 %v2323, 1.442695
        %v2339 = vpow.pop %v2338
        %v2340 = vsel %vm2291, %v2325, 0.0
        %2341 = vadd.xlane.f32.xlu0 %v2340
        %v2342 = vpop.xlane.xlu0 %2341
        %v2343 = vsel %vm2291, %v2327, 0.0
        %2344 = vadd.xlane.f32.xlu0 %v2343
        %v2345 = vpop.xlane.xlu0 %2344
        %v2346 = vsel %vm2291, %v2329, 0.0
        %2347 = vadd.xlane.f32.xlu0 %v2346
        %v2348 = vpop.xlane.xlu0 %2347
        %v2349 = vsel %vm2291, %v2331, 0.0
        %2350 = vadd.xlane.f32.xlu0 %v2349
        %v2351 = vpop.xlane.xlu0 %2350
        %v2352 = vsel %vm2291, %v2333, 0.0
        %2353 = vadd.xlane.f32.xlu0 %v2352
        %v2354 = vpop.xlane.xlu0 %2353
        %v2355 = vsel %vm2291, %v2335, 0.0
        %2356 = vadd.xlane.f32.xlu0 %v2355
        %v2357 = vpop.xlane.xlu0 %2356
        %v2358 = vsel %vm2291, %v2337, 0.0
        %2359 = vadd.xlane.f32.xlu0 %v2358
        %v2360 = vpop.xlane.xlu0 %2359
        %v2361 = vsel %vm2291, %v2339, 0.0
        %2362 = vadd.xlane.f32.xlu0 %v2361
        %v2363 = vpop.xlane.xlu0 %2362
        %v2364 = vrcp.pop %v2342
        %v2365 = vrcp.pop %v2345
        %v2366 = vrcp.pop %v2348
        %v2367 = vrcp.pop %v2351
        %v2368 = vrcp.pop %v2354
        %v2369 = vrcp.pop %v2357
        %v2370 = vrcp.pop %v2360
        %v2371 = vrcp.pop %v2363
        %v2372 = vmul.f32 %v2325, %v2364
        %v2373 = vmul.f32 %v2327, %v2365
        %v2374 = vmul.f32 %v2329, %v2366
        %v2375 = vmul.f32 %v2331, %v2367
        %v2376 = vmul.f32 %v2333, %v2368
        %v2377 = vmul.f32 %v2335, %v2369
        %v2378 = vmul.f32 %v2337, %v2370
        %v2379 = vmul.f32 %v2339, %v2371
        %v2381 = vsel %vm2291, %v2372, 0
        %2383 = vmatprep.subr.mxu0 0.0
        %2384 = vmatpush1.msra.mxu0 0.0
        %2385 = vmatprep.subr.mxu0 0.0
        %2386 = vmatpush1.msra.mxu0 0.0
        %2387 = vmatprep.subr.mxu0 0.0
        %2388 = vmatpush1.msra.mxu0 0.0
        %2389 = vmatprep.subr.mxu0 0.0
        %2390 = vmatpush1.msra.mxu0 0.0
        %2391 = vmatprep.subr.mxu0 0.0
        %2392 = vmatpush1.msra.mxu0 0.0
        %2393 = vmatprep.subr.mxu0 0.0
        %2394 = vmatpush1.msra.mxu0 0.0
        %2395 = vmatprep.subr.mxu0 0.0
        %2396 = vmatpush1.msra.mxu0 0.0
        %2397 = vmatprep.subr.mxu0 0.0
        %2398 = vmatpush1.msra.mxu0 0.0
        %2399 = vmatprep.subr.mxu0 0.0
        %2400 = vmatpush1.msra.mxu0 0.0
        %2401 = vmatprep.subr.mxu0 0.0
        %2402 = vmatpush1.msra.mxu0 0.0
        %2403 = vmatprep.subr.mxu0 0.0
        %2404 = vmatpush1.msra.mxu0 0.0
        %2405 = vmatprep.subr.mxu0 0.0
        %2406 = vmatpush1.msra.mxu0 0.0
        %2407 = vmatprep.subr.mxu0 0.0
        %2408 = vmatpush1.msra.mxu0 0.0
        %2409 = vmatprep.subr.mxu0 0.0
        %2410 = vmatpush1.msra.mxu0 0.0
        %2411 = vmatprep.subr.mxu0 0.0
        %2412 = vmatpush1.msra.mxu0 0.0
        %2413 = vmatprep.subr.mxu0 0.0
        %2414 = vmatpush1.msra.mxu0 %v1610
        %2415 = vmatprep.subr.mxu0 0.0
        %2416 = vmatpush2.msra.mxu0 0.0
        %2417 = vmatprep.subr.mxu0 0.0
        %2418 = vmatpush2.msra.mxu0 0.0
        %2419 = vmatprep.subr.mxu0 0.0
        %2420 = vmatpush2.msra.mxu0 0.0
        %2421 = vmatprep.subr.mxu0 0.0
        %2422 = vmatpush2.msra.mxu0 0.0
        %2423 = vmatprep.subr.mxu0 0.0
        %2424 = vmatpush2.msra.mxu0 0.0
        %2425 = vmatprep.subr.mxu0 0.0
        %2426 = vmatpush2.msra.mxu0 0.0
        %2427 = vmatprep.subr.mxu0 0.0
        %2428 = vmatpush2.msra.mxu0 0.0
        %2429 = vmatprep.subr.mxu0 0.0
        %2430 = vmatpush2.msra.mxu0 0.0
        %2431 = vmatprep.subr.mxu0 0.0
        %2432 = vmatpush2.msra.mxu0 0.0
        %2433 = vmatprep.subr.mxu0 0.0
        %2434 = vmatpush2.msra.mxu0 0.0
        %2435 = vmatprep.subr.mxu0 0.0
        %2436 = vmatpush2.msra.mxu0 0.0
        %2437 = vmatprep.subr.mxu0 0.0
        %2438 = vmatpush2.msra.mxu0 0.0
        %2439 = vmatprep.subr.mxu0 0.0
        %2440 = vmatpush2.msra.mxu0 0.0
        %2441 = vmatprep.subr.mxu0 0.0
        %2442 = vmatpush2.msra.mxu0 0.0
        %2443 = vmatprep.subr.mxu0 0.0
        %2444 = vmatpush2.msra.mxu0 0.0
        %2445 = vmatprep.subr.mxu0 0.0
        %2446 = vmatpush2.msra.mxu0 0.0
        %2447 = vmatprep.mubr.f32.mxu0 0.0
        %2448 = vmatmul.mubr.f32.gmra.mxu0 %v2381
        %v2449 = vpop.f32.mrf.mxu0
        %v2450 = vadd.f32 0.0, %v2449
        %v2451 = vpop.f32.mrf.mxu0
        %2452 = vdwg.mxu0
        %v2454 = vsel %vm2291, %v2373, 0
        %2456 = vmatprep.subr.mxu0 0.0
        %2457 = vmatpush1.msra.mxu0 0.0
        %2458 = vmatprep.subr.mxu0 0.0
        %2459 = vmatpush1.msra.mxu0 0.0
        %2460 = vmatprep.subr.mxu0 0.0
        %2461 = vmatpush1.msra.mxu0 0.0
        %2462 = vmatprep.subr.mxu0 0.0
        %2463 = vmatpush1.msra.mxu0 0.0
        %2464 = vmatprep.subr.mxu0 0.0
        %2465 = vmatpush1.msra.mxu0 0.0
        %2466 = vmatprep.subr.mxu0 0.0
        %2467 = vmatpush1.msra.mxu0 0.0
        %2468 = vmatprep.subr.mxu0 0.0
        %2469 = vmatpush1.msra.mxu0 0.0
        %2470 = vmatprep.subr.mxu0 0.0
        %2471 = vmatpush1.msra.mxu0 0.0
        %2472 = vmatprep.subr.mxu0 0.0
        %2473 = vmatpush1.msra.mxu0 0.0
        %2474 = vmatprep.subr.mxu0 0.0
        %2475 = vmatpush1.msra.mxu0 0.0
        %2476 = vmatprep.subr.mxu0 0.0
        %2477 = vmatpush1.msra.mxu0 0.0
        %2478 = vmatprep.subr.mxu0 0.0
        %2479 = vmatpush1.msra.mxu0 0.0
        %2480 = vmatprep.subr.mxu0 0.0
        %2481 = vmatpush1.msra.mxu0 0.0
        %2482 = vmatprep.subr.mxu0 0.0
        %2483 = vmatpush1.msra.mxu0 0.0
        %2484 = vmatprep.subr.mxu0 0.0
        %2485 = vmatpush1.msra.mxu0 0.0
        %2486 = vmatprep.subr.mxu0 0.0
        %2487 = vmatpush1.msra.mxu0 %v1611
        %2488 = vmatprep.subr.mxu0 0.0
        %2489 = vmatpush2.msra.mxu0 0.0
        %2490 = vmatprep.subr.mxu0 0.0
        %2491 = vmatpush2.msra.mxu0 0.0
        %2492 = vmatprep.subr.mxu0 0.0
        %2493 = vmatpush2.msra.mxu0 0.0
        %2494 = vmatprep.subr.mxu0 0.0
        %2495 = vmatpush2.msra.mxu0 0.0
        %2496 = vmatprep.subr.mxu0 0.0
        %2497 = vmatpush2.msra.mxu0 0.0
        %2498 = vmatprep.subr.mxu0 0.0
        %2499 = vmatpush2.msra.mxu0 0.0
        %2500 = vmatprep.subr.mxu0 0.0
        %2501 = vmatpush2.msra.mxu0 0.0
        %2502 = vmatprep.subr.mxu0 0.0
        %2503 = vmatpush2.msra.mxu0 0.0
        %2504 = vmatprep.subr.mxu0 0.0
        %2505 = vmatpush2.msra.mxu0 0.0
        %2506 = vmatprep.subr.mxu0 0.0
        %2507 = vmatpush2.msra.mxu0 0.0
        %2508 = vmatprep.subr.mxu0 0.0
        %2509 = vmatpush2.msra.mxu0 0.0
        %2510 = vmatprep.subr.mxu0 0.0
        %2511 = vmatpush2.msra.mxu0 0.0
        %2512 = vmatprep.subr.mxu0 0.0
        %2513 = vmatpush2.msra.mxu0 0.0
        %2514 = vmatprep.subr.mxu0 0.0
        %2515 = vmatpush2.msra.mxu0 0.0
        %2516 = vmatprep.subr.mxu0 0.0
        %2517 = vmatpush2.msra.mxu0 0.0
        %2518 = vmatprep.subr.mxu0 0.0
        %2519 = vmatpush2.msra.mxu0 0.0
        %2520 = vmatprep.mubr.f32.mxu0 0.0
        %2521 = vmatmul.mubr.f32.gmra.mxu0 %v2454
        %v2522 = vpop.f32.mrf.mxu0
        %v2523 = vadd.f32 0.0, %v2522
        %v2524 = vpop.f32.mrf.mxu0
        %2525 = vdwg.mxu0
        %v2527 = vsel %vm2291, %v2374, 0
        %2529 = vmatprep.subr.mxu0 0.0
        %2530 = vmatpush1.msra.mxu0 0.0
        %2531 = vmatprep.subr.mxu0 0.0
        %2532 = vmatpush1.msra.mxu0 0.0
        %2533 = vmatprep.subr.mxu0 0.0
        %2534 = vmatpush1.msra.mxu0 0.0
        %2535 = vmatprep.subr.mxu0 0.0
        %2536 = vmatpush1.msra.mxu0 0.0
        %2537 = vmatprep.subr.mxu0 0.0
        %2538 = vmatpush1.msra.mxu0 0.0
        %2539 = vmatprep.subr.mxu0 0.0
        %2540 = vmatpush1.msra.mxu0 0.0
        %2541 = vmatprep.subr.mxu0 0.0
        %2542 = vmatpush1.msra.mxu0 0.0
        %2543 = vmatprep.subr.mxu0 0.0
        %2544 = vmatpush1.msra.mxu0 0.0
        %2545 = vmatprep.subr.mxu0 0.0
        %2546 = vmatpush1.msra.mxu0 0.0
        %2547 = vmatprep.subr.mxu0 0.0
        %2548 = vmatpush1.msra.mxu0 0.0
        %2549 = vmatprep.subr.mxu0 0.0
        %2550 = vmatpush1.msra.mxu0 0.0
        %2551 = vmatprep.subr.mxu0 0.0
        %2552 = vmatpush1.msra.mxu0 0.0
        %2553 = vmatprep.subr.mxu0 0.0
        %2554 = vmatpush1.msra.mxu0 0.0
        %2555 = vmatprep.subr.mxu0 0.0
        %2556 = vmatpush1.msra.mxu0 0.0
        %2557 = vmatprep.subr.mxu0 0.0
        %2558 = vmatpush1.msra.mxu0 0.0
        %2559 = vmatprep.subr.mxu0 0.0
        %2560 = vmatpush1.msra.mxu0 %v1612
        %2561 = vmatprep.subr.mxu0 0.0
        %2562 = vmatpush2.msra.mxu0 0.0
        %2563 = vmatprep.subr.mxu0 0.0
        %2564 = vmatpush2.msra.mxu0 0.0
        %2565 = vmatprep.subr.mxu0 0.0
        %2566 = vmatpush2.msra.mxu0 0.0
        %2567 = vmatprep.subr.mxu0 0.0
        %2568 = vmatpush2.msra.mxu0 0.0
        %2569 = vmatprep.subr.mxu0 0.0
        %2570 = vmatpush2.msra.mxu0 0.0
        %2571 = vmatprep.subr.mxu0 0.0
        %2572 = vmatpush2.msra.mxu0 0.0
        %2573 = vmatprep.subr.mxu0 0.0
        %2574 = vmatpush2.msra.mxu0 0.0
        %2575 = vmatprep.subr.mxu0 0.0
        %2576 = vmatpush2.msra.mxu0 0.0
        %2577 = vmatprep.subr.mxu0 0.0
        %2578 = vmatpush2.msra.mxu0 0.0
        %2579 = vmatprep.subr.mxu0 0.0
        %2580 = vmatpush2.msra.mxu0 0.0
        %2581 = vmatprep.subr.mxu0 0.0
        %2582 = vmatpush2.msra.mxu0 0.0
        %2583 = vmatprep.subr.mxu0 0.0
        %2584 = vmatpush2.msra.mxu0 0.0
        %2585 = vmatprep.subr.mxu0 0.0
        %2586 = vmatpush2.msra.mxu0 0.0
        %2587 = vmatprep.subr.mxu0 0.0
        %2588 = vmatpush2.msra.mxu0 0.0
        %2589 = vmatprep.subr.mxu0 0.0
        %2590 = vmatpush2.msra.mxu0 0.0
        %2591 = vmatprep.subr.mxu0 0.0
        %2592 = vmatpush2.msra.mxu0 0.0
        %2593 = vmatprep.mubr.f32.mxu0 0.0
        %2594 = vmatmul.mubr.f32.gmra.mxu0 %v2527
        %v2595 = vpop.f32.mrf.mxu0
        %v2596 = vadd.f32 0.0, %v2595
        %v2597 = vpop.f32.mrf.mxu0
        %2598 = vdwg.mxu0
        %v2600 = vsel %vm2291, %v2375, 0
        %2602 = vmatprep.subr.mxu0 0.0
        %2603 = vmatpush1.msra.mxu0 0.0
        %2604 = vmatprep.subr.mxu0 0.0
        %2605 = vmatpush1.msra.mxu0 0.0
        %2606 = vmatprep.subr.mxu0 0.0
        %2607 = vmatpush1.msra.mxu0 0.0
        %2608 = vmatprep.subr.mxu0 0.0
        %2609 = vmatpush1.msra.mxu0 0.0
        %2610 = vmatprep.subr.mxu0 0.0
        %2611 = vmatpush1.msra.mxu0 0.0
        %2612 = vmatprep.subr.mxu0 0.0
        %2613 = vmatpush1.msra.mxu0 0.0
        %2614 = vmatprep.subr.mxu0 0.0
        %2615 = vmatpush1.msra.mxu0 0.0
        %2616 = vmatprep.subr.mxu0 0.0
        %2617 = vmatpush1.msra.mxu0 0.0
        %2618 = vmatprep.subr.mxu0 0.0
        %2619 = vmatpush1.msra.mxu0 0.0
        %2620 = vmatprep.subr.mxu0 0.0
        %2621 = vmatpush1.msra.mxu0 0.0
        %2622 = vmatprep.subr.mxu0 0.0
        %2623 = vmatpush1.msra.mxu0 0.0
        %2624 = vmatprep.subr.mxu0 0.0
        %2625 = vmatpush1.msra.mxu0 0.0
        %2626 = vmatprep.subr.mxu0 0.0
        %2627 = vmatpush1.msra.mxu0 0.0
        %2628 = vmatprep.subr.mxu0 0.0
        %2629 = vmatpush1.msra.mxu0 0.0
        %2630 = vmatprep.subr.mxu0 0.0
        %2631 = vmatpush1.msra.mxu0 0.0
        %2632 = vmatprep.subr.mxu0 0.0
        %2633 = vmatpush1.msra.mxu0 %v1613
        %2634 = vmatprep.subr.mxu0 0.0
        %2635 = vmatpush2.msra.mxu0 0.0
        %2636 = vmatprep.subr.mxu0 0.0
        %2637 = vmatpush2.msra.mxu0 0.0
        %2638 = vmatprep.subr.mxu0 0.0
        %2639 = vmatpush2.msra.mxu0 0.0
        %2640 = vmatprep.subr.mxu0 0.0
        %2641 = vmatpush2.msra.mxu0 0.0
        %2642 = vmatprep.subr.mxu0 0.0
        %2643 = vmatpush2.msra.mxu0 0.0
        %2644 = vmatprep.subr.mxu0 0.0
        %2645 = vmatpush2.msra.mxu0 0.0
        %2646 = vmatprep.subr.mxu0 0.0
        %2647 = vmatpush2.msra.mxu0 0.0
        %2648 = vmatprep.subr.mxu0 0.0
        %2649 = vmatpush2.msra.mxu0 0.0
        %2650 = vmatprep.subr.mxu0 0.0
        %2651 = vmatpush2.msra.mxu0 0.0
        %2652 = vmatprep.subr.mxu0 0.0
        %2653 = vmatpush2.msra.mxu0 0.0
        %2654 = vmatprep.subr.mxu0 0.0
        %2655 = vmatpush2.msra.mxu0 0.0
        %2656 = vmatprep.subr.mxu0 0.0
        %2657 = vmatpush2.msra.mxu0 0.0
        %2658 = vmatprep.subr.mxu0 0.0
        %2659 = vmatpush2.msra.mxu0 0.0
        %2660 = vmatprep.subr.mxu0 0.0
        %2661 = vmatpush2.msra.mxu0 0.0
        %2662 = vmatprep.subr.mxu0 0.0
        %2663 = vmatpush2.msra.mxu0 0.0
        %2664 = vmatprep.subr.mxu0 0.0
        %2665 = vmatpush2.msra.mxu0 0.0
        %2666 = vmatprep.mubr.f32.mxu0 0.0
        %2667 = vmatmul.mubr.f32.gmra.mxu0 %v2600
        %v2668 = vpop.f32.mrf.mxu0
        %v2669 = vadd.f32 0.0, %v2668
        %v2670 = vpop.f32.mrf.mxu0
        %2671 = vdwg.mxu0
        %v2673 = vsel %vm2291, %v2376, 0
        %2675 = vmatprep.subr.mxu0 0.0
        %2676 = vmatpush1.msra.mxu0 0.0
        %2677 = vmatprep.subr.mxu0 0.0
        %2678 = vmatpush1.msra.mxu0 0.0
        %2679 = vmatprep.subr.mxu0 0.0
        %2680 = vmatpush1.msra.mxu0 0.0
        %2681 = vmatprep.subr.mxu0 0.0
        %2682 = vmatpush1.msra.mxu0 0.0
        %2683 = vmatprep.subr.mxu0 0.0
        %2684 = vmatpush1.msra.mxu0 0.0
        %2685 = vmatprep.subr.mxu0 0.0
        %2686 = vmatpush1.msra.mxu0 0.0
        %2687 = vmatprep.subr.mxu0 0.0
        %2688 = vmatpush1.msra.mxu0 0.0
        %2689 = vmatprep.subr.mxu0 0.0
        %2690 = vmatpush1.msra.mxu0 0.0
        %2691 = vmatprep.subr.mxu0 0.0
        %2692 = vmatpush1.msra.mxu0 0.0
        %2693 = vmatprep.subr.mxu0 0.0
        %2694 = vmatpush1.msra.mxu0 0.0
        %2695 = vmatprep.subr.mxu0 0.0
        %2696 = vmatpush1.msra.mxu0 0.0
        %2697 = vmatprep.subr.mxu0 0.0
        %2698 = vmatpush1.msra.mxu0 0.0
        %2699 = vmatprep.subr.mxu0 0.0
        %2700 = vmatpush1.msra.mxu0 0.0
        %2701 = vmatprep.subr.mxu0 0.0
        %2702 = vmatpush1.msra.mxu0 0.0
        %2703 = vmatprep.subr.mxu0 0.0
        %2704 = vmatpush1.msra.mxu0 0.0
        %2705 = vmatprep.subr.mxu0 0.0
        %2706 = vmatpush1.msra.mxu0 %v1678
        %2707 = vmatprep.subr.mxu0 0.0
        %2708 = vmatpush2.msra.mxu0 0.0
        %2709 = vmatprep.subr.mxu0 0.0
        %2710 = vmatpush2.msra.mxu0 0.0
        %2711 = vmatprep.subr.mxu0 0.0
        %2712 = vmatpush2.msra.mxu0 0.0
        %2713 = vmatprep.subr.mxu0 0.0
        %2714 = vmatpush2.msra.mxu0 0.0
        %2715 = vmatprep.subr.mxu0 0.0
        %2716 = vmatpush2.msra.mxu0 0.0
        %2717 = vmatprep.subr.mxu0 0.0
        %2718 = vmatpush2.msra.mxu0 0.0
        %2719 = vmatprep.subr.mxu0 0.0
        %2720 = vmatpush2.msra.mxu0 0.0
        %2721 = vmatprep.subr.mxu0 0.0
        %2722 = vmatpush2.msra.mxu0 0.0
        %2723 = vmatprep.subr.mxu0 0.0
        %2724 = vmatpush2.msra.mxu0 0.0
        %2725 = vmatprep.subr.mxu0 0.0
        %2726 = vmatpush2.msra.mxu0 0.0
        %2727 = vmatprep.subr.mxu0 0.0
        %2728 = vmatpush2.msra.mxu0 0.0
        %2729 = vmatprep.subr.mxu0 0.0
        %2730 = vmatpush2.msra.mxu0 0.0
        %2731 = vmatprep.subr.mxu0 0.0
        %2732 = vmatpush2.msra.mxu0 0.0
        %2733 = vmatprep.subr.mxu0 0.0
        %2734 = vmatpush2.msra.mxu0 0.0
        %2735 = vmatprep.subr.mxu0 0.0
        %2736 = vmatpush2.msra.mxu0 0.0
        %2737 = vmatprep.subr.mxu0 0.0
        %2738 = vmatpush2.msra.mxu0 0.0
        %2739 = vmatprep.mubr.f32.mxu0 0.0
        %2740 = vmatmul.mubr.f32.gmra.mxu0 %v2673
        %v2741 = vpop.f32.mrf.mxu0
        %v2742 = vadd.f32 0.0, %v2741
        %v2743 = vpop.f32.mrf.mxu0
        %2744 = vdwg.mxu0
        %v2746 = vsel %vm2291, %v2377, 0
        %2748 = vmatprep.subr.mxu0 0.0
        %2749 = vmatpush1.msra.mxu0 0.0
        %2750 = vmatprep.subr.mxu0 0.0
        %2751 = vmatpush1.msra.mxu0 0.0
        %2752 = vmatprep.subr.mxu0 0.0
        %2753 = vmatpush1.msra.mxu0 0.0
        %2754 = vmatprep.subr.mxu0 0.0
        %2755 = vmatpush1.msra.mxu0 0.0
        %2756 = vmatprep.subr.mxu0 0.0
        %2757 = vmatpush1.msra.mxu0 0.0
        %2758 = vmatprep.subr.mxu0 0.0
        %2759 = vmatpush1.msra.mxu0 0.0
        %2760 = vmatprep.subr.mxu0 0.0
        %2761 = vmatpush1.msra.mxu0 0.0
        %2762 = vmatprep.subr.mxu0 0.0
        %2763 = vmatpush1.msra.mxu0 0.0
        %2764 = vmatprep.subr.mxu0 0.0
        %2765 = vmatpush1.msra.mxu0 0.0
        %2766 = vmatprep.subr.mxu0 0.0
        %2767 = vmatpush1.msra.mxu0 0.0
        %2768 = vmatprep.subr.mxu0 0.0
        %2769 = vmatpush1.msra.mxu0 0.0
        %2770 = vmatprep.subr.mxu0 0.0
        %2771 = vmatpush1.msra.mxu0 0.0
        %2772 = vmatprep.subr.mxu0 0.0
        %2773 = vmatpush1.msra.mxu0 0.0
        %2774 = vmatprep.subr.mxu0 0.0
        %2775 = vmatpush1.msra.mxu0 0.0
        %2776 = vmatprep.subr.mxu0 0.0
        %2777 = vmatpush1.msra.mxu0 0.0
        %2778 = vmatprep.subr.mxu0 0.0
        %2779 = vmatpush1.msra.mxu0 %v1679
        %2780 = vmatprep.subr.mxu0 0.0
        %2781 = vmatpush2.msra.mxu0 0.0
        %2782 = vmatprep.subr.mxu0 0.0
        %2783 = vmatpush2.msra.mxu0 0.0
        %2784 = vmatprep.subr.mxu0 0.0
        %2785 = vmatpush2.msra.mxu0 0.0
        %2786 = vmatprep.subr.mxu0 0.0
        %2787 = vmatpush2.msra.mxu0 0.0
        %2788 = vmatprep.subr.mxu0 0.0
        %2789 = vmatpush2.msra.mxu0 0.0
        %2790 = vmatprep.subr.mxu0 0.0
        %2791 = vmatpush2.msra.mxu0 0.0
        %2792 = vmatprep.subr.mxu0 0.0
        %2793 = vmatpush2.msra.mxu0 0.0
        %2794 = vmatprep.subr.mxu0 0.0
        %2795 = vmatpush2.msra.mxu0 0.0
        %2796 = vmatprep.subr.mxu0 0.0
        %2797 = vmatpush2.msra.mxu0 0.0
        %2798 = vmatprep.subr.mxu0 0.0
        %2799 = vmatpush2.msra.mxu0 0.0
        %2800 = vmatprep.subr.mxu0 0.0
        %2801 = vmatpush2.msra.mxu0 0.0
        %2802 = vmatprep.subr.mxu0 0.0
        %2803 = vmatpush2.msra.mxu0 0.0
        %2804 = vmatprep.subr.mxu0 0.0
        %2805 = vmatpush2.msra.mxu0 0.0
        %2806 = vmatprep.subr.mxu0 0.0
        %2807 = vmatpush2.msra.mxu0 0.0
        %2808 = vmatprep.subr.mxu0 0.0
        %2809 = vmatpush2.msra.mxu0 0.0
        %2810 = vmatprep.subr.mxu0 0.0
        %2811 = vmatpush2.msra.mxu0 0.0
        %2812 = vmatprep.mubr.f32.mxu0 0.0
        %2813 = vmatmul.mubr.f32.gmra.mxu0 %v2746
        %v2814 = vpop.f32.mrf.mxu0
        %v2815 = vadd.f32 0.0, %v2814
        %v2816 = vpop.f32.mrf.mxu0
        %2817 = vdwg.mxu0
        %v2819 = vsel %vm2291, %v2378, 0
        %2821 = vmatprep.subr.mxu0 0.0
        %2822 = vmatpush1.msra.mxu0 0.0
        %2823 = vmatprep.subr.mxu0 0.0
        %2824 = vmatpush1.msra.mxu0 0.0
        %2825 = vmatprep.subr.mxu0 0.0
        %2826 = vmatpush1.msra.mxu0 0.0
        %2827 = vmatprep.subr.mxu0 0.0
        %2828 = vmatpush1.msra.mxu0 0.0
        %2829 = vmatprep.subr.mxu0 0.0
        %2830 = vmatpush1.msra.mxu0 0.0
        %2831 = vmatprep.subr.mxu0 0.0
        %2832 = vmatpush1.msra.mxu0 0.0
        %2833 = vmatprep.subr.mxu0 0.0
        %2834 = vmatpush1.msra.mxu0 0.0
        %2835 = vmatprep.subr.mxu0 0.0
        %2836 = vmatpush1.msra.mxu0 0.0
        %2837 = vmatprep.subr.mxu0 0.0
        %2838 = vmatpush1.msra.mxu0 0.0
        %2839 = vmatprep.subr.mxu0 0.0
        %2840 = vmatpush1.msra.mxu0 0.0
        %2841 = vmatprep.subr.mxu0 0.0
        %2842 = vmatpush1.msra.mxu0 0.0
        %2843 = vmatprep.subr.mxu0 0.0
        %2844 = vmatpush1.msra.mxu0 0.0
        %2845 = vmatprep.subr.mxu0 0.0
        %2846 = vmatpush1.msra.mxu0 0.0
        %2847 = vmatprep.subr.mxu0 0.0
        %2848 = vmatpush1.msra.mxu0 0.0
        %2849 = vmatprep.subr.mxu0 0.0
        %2850 = vmatpush1.msra.mxu0 0.0
        %2851 = vmatprep.subr.mxu0 0.0
        %2852 = vmatpush1.msra.mxu0 %v1680
        %2853 = vmatprep.subr.mxu0 0.0
        %2854 = vmatpush2.msra.mxu0 0.0
        %2855 = vmatprep.subr.mxu0 0.0
        %2856 = vmatpush2.msra.mxu0 0.0
        %2857 = vmatprep.subr.mxu0 0.0
        %2858 = vmatpush2.msra.mxu0 0.0
        %2859 = vmatprep.subr.mxu0 0.0
        %2860 = vmatpush2.msra.mxu0 0.0
        %2861 = vmatprep.subr.mxu0 0.0
        %2862 = vmatpush2.msra.mxu0 0.0
        %2863 = vmatprep.subr.mxu0 0.0
        %2864 = vmatpush2.msra.mxu0 0.0
        %2865 = vmatprep.subr.mxu0 0.0
        %2866 = vmatpush2.msra.mxu0 0.0
        %2867 = vmatprep.subr.mxu0 0.0
        %2868 = vmatpush2.msra.mxu0 0.0
        %2869 = vmatprep.subr.mxu0 0.0
        %2870 = vmatpush2.msra.mxu0 0.0
        %2871 = vmatprep.subr.mxu0 0.0
        %2872 = vmatpush2.msra.mxu0 0.0
        %2873 = vmatprep.subr.mxu0 0.0
        %2874 = vmatpush2.msra.mxu0 0.0
        %2875 = vmatprep.subr.mxu0 0.0
        %2876 = vmatpush2.msra.mxu0 0.0
        %2877 = vmatprep.subr.mxu0 0.0
        %2878 = vmatpush2.msra.mxu0 0.0
        %2879 = vmatprep.subr.mxu0 0.0
        %2880 = vmatpush2.msra.mxu0 0.0
        %2881 = vmatprep.subr.mxu0 0.0
        %2882 = vmatpush2.msra.mxu0 0.0
        %2883 = vmatprep.subr.mxu0 0.0
        %2884 = vmatpush2.msra.mxu0 0.0
        %2885 = vmatprep.mubr.f32.mxu0 0.0
        %2886 = vmatmul.mubr.f32.gmra.mxu0 %v2819
        %v2887 = vpop.f32.mrf.mxu0
        %v2888 = vadd.f32 0.0, %v2887
        %v2889 = vpop.f32.mrf.mxu0
        %2890 = vdwg.mxu0
        %v2892 = vsel %vm2291, %v2379, 0
        %2894 = vmatprep.subr.mxu0 0.0
        %2895 = vmatpush1.msra.mxu0 0.0
        %2896 = vmatprep.subr.mxu0 0.0
        %2897 = vmatpush1.msra.mxu0 0.0
        %2898 = vmatprep.subr.mxu0 0.0
        %2899 = vmatpush1.msra.mxu0 0.0
        %2900 = vmatprep.subr.mxu0 0.0
        %2901 = vmatpush1.msra.mxu0 0.0
        %2902 = vmatprep.subr.mxu0 0.0
        %2903 = vmatpush1.msra.mxu0 0.0
        %2904 = vmatprep.subr.mxu0 0.0
        %2905 = vmatpush1.msra.mxu0 0.0
        %2906 = vmatprep.subr.mxu0 0.0
        %2907 = vmatpush1.msra.mxu0 0.0
        %2908 = vmatprep.subr.mxu0 0.0
        %2909 = vmatpush1.msra.mxu0 0.0
        %2910 = vmatprep.subr.mxu0 0.0
        %2911 = vmatpush1.msra.mxu0 0.0
        %2912 = vmatprep.subr.mxu0 0.0
        %2913 = vmatpush1.msra.mxu0 0.0
        %2914 = vmatprep.subr.mxu0 0.0
        %2915 = vmatpush1.msra.mxu0 0.0
        %2916 = vmatprep.subr.mxu0 0.0
        %2917 = vmatpush1.msra.mxu0 0.0
        %2918 = vmatprep.subr.mxu0 0.0
        %2919 = vmatpush1.msra.mxu0 0.0
        %2920 = vmatprep.subr.mxu0 0.0
        %2921 = vmatpush1.msra.mxu0 0.0
        %2922 = vmatprep.subr.mxu0 0.0
        %2923 = vmatpush1.msra.mxu0 0.0
        %2924 = vmatprep.subr.mxu0 0.0
        %2925 = vmatpush1.msra.mxu0 %v1681
        %2926 = vmatprep.subr.mxu0 0.0
        %2927 = vmatpush2.msra.mxu0 0.0
        %2928 = vmatprep.subr.mxu0 0.0
        %2929 = vmatpush2.msra.mxu0 0.0
        %2930 = vmatprep.subr.mxu0 0.0
        %2931 = vmatpush2.msra.mxu0 0.0
        %2932 = vmatprep.subr.mxu0 0.0
        %2933 = vmatpush2.msra.mxu0 0.0
        %2934 = vmatprep.subr.mxu0 0.0
        %2935 = vmatpush2.msra.mxu0 0.0
        %2936 = vmatprep.subr.mxu0 0.0
        %2937 = vmatpush2.msra.mxu0 0.0
        %2938 = vmatprep.subr.mxu0 0.0
        %2939 = vmatpush2.msra.mxu0 0.0
        %2940 = vmatprep.subr.mxu0 0.0
        %2941 = vmatpush2.msra.mxu0 0.0
        %2942 = vmatprep.subr.mxu0 0.0
        %2943 = vmatpush2.msra.mxu0 0.0
        %2944 = vmatprep.subr.mxu0 0.0
        %2945 = vmatpush2.msra.mxu0 0.0
        %2946 = vmatprep.subr.mxu0 0.0
        %2947 = vmatpush2.msra.mxu0 0.0
        %2948 = vmatprep.subr.mxu0 0.0
        %2949 = vmatpush2.msra.mxu0 0.0
        %2950 = vmatprep.subr.mxu0 0.0
        %2951 = vmatpush2.msra.mxu0 0.0
        %2952 = vmatprep.subr.mxu0 0.0
        %2953 = vmatpush2.msra.mxu0 0.0
        %2954 = vmatprep.subr.mxu0 0.0
        %2955 = vmatpush2.msra.mxu0 0.0
        %2956 = vmatprep.subr.mxu0 0.0
        %2957 = vmatpush2.msra.mxu0 0.0
        %2958 = vmatprep.mubr.f32.mxu0 0.0
        %2959 = vmatmul.mubr.f32.gmra.mxu0 %v2892
        %v2960 = vpop.f32.mrf.mxu0
        %v2961 = vadd.f32 0.0, %v2960
        %v2962 = vpop.f32.mrf.mxu0
        %2963 = vdwg.mxu0
        %v2964 = vcombine.low %v2450, %v2596
        %v2965 = vcombine.high %v2450, %v2596
        %v2967 = vunpack.c.l.s4 1983009808
        %v2968 = vunpack.c.0.s8 %v2967
        %v2969 = vlaneseq
        %v2970 = vshrl.u32 %v2969, 7
        %v2971 = vsub.s32 %v2968, %v2970
        %v2972 = vrot.slane %v2964, %v2971
        %v2974 = vunpack.c.l.s4 1983009808
        %v2975 = vunpack.c.0.s8 %v2974
        %v2976 = vlaneseq
        %v2977 = vshrl.u32 %v2976, 7
        %v2978 = vsub.s32 %v2975, %v2977
        %v2979 = vrot.slane %v2965, %v2978
        %v2980 = vcombine.low %v2523, %v2669
        %v2981 = vcombine.high %v2523, %v2669
        %v2983 = vunpack.c.l.s4 1983009808
        %v2984 = vunpack.c.0.s8 %v2983
        %v2985 = vlaneseq
        %v2986 = vshrl.u32 %v2985, 7
        %v2987 = vsub.s32 %v2984, %v2986
        %v2988 = vrot.slane %v2980, %v2987
        %v2990 = vunpack.c.l.s4 1983009808
        %v2991 = vunpack.c.0.s8 %v2990
        %v2992 = vlaneseq
        %v2993 = vshrl.u32 %v2992, 7
        %v2994 = vsub.s32 %v2991, %v2993
        %v2995 = vrot.slane %v2981, %v2994
        %v2996 = vcombine.low %v2972, %v2988
        %v2997 = vcombine.high %v2972, %v2988
        %v2999 = vunpack.c.l.s4 1934713408
        %v3000 = vunpack.c.0.s8 %v2999
        %v3001 = vlaneseq
        %v3002 = vshrl.u32 %v3001, 7
        %v3003 = vsub.s32 %v3000, %v3002
        %v3004 = vrot.slane %v2996, %v3003
        %v3006 = vunpack.c.l.s4 1934713408
        %v3007 = vunpack.c.0.s8 %v3006
        %v3008 = vlaneseq
        %v3009 = vshrl.u32 %v3008, 7
        %v3010 = vsub.s32 %v3007, %v3009
        %v3011 = vrot.slane %v2997, %v3010
        %v3012 = vcombine.low %v2979, %v2995
        %v3013 = vcombine.high %v2979, %v2995
        %v3015 = vunpack.c.l.s4 1934713408
        %v3016 = vunpack.c.0.s8 %v3015
        %v3017 = vlaneseq
        %v3018 = vshrl.u32 %v3017, 7
        %v3019 = vsub.s32 %v3016, %v3018
        %v3020 = vrot.slane %v3012, %v3019
        %v3022 = vunpack.c.l.s4 1934713408
        %v3023 = vunpack.c.0.s8 %v3022
        %v3024 = vlaneseq
        %v3025 = vshrl.u32 %v3024, 7
        %v3026 = vsub.s32 %v3023, %v3025
        %v3027 = vrot.slane %v3013, %v3026
        %v3028 = vcombine.high %v3004, 0.0
        %v3029 = vcombine.high %v3011, 0.0
        %v3030 = vcombine.high %v3020, 0.0
        %v3031 = vcombine.high %v3027, 0.0
        %v3032 = vcombine.low %v2742, %v2888
        %v3033 = vcombine.high %v2742, %v2888
        %v3035 = vunpack.c.l.s4 1983009808
        %v3036 = vunpack.c.0.s8 %v3035
        %v3037 = vlaneseq
        %v3038 = vshrl.u32 %v3037, 7
        %v3039 = vsub.s32 %v3036, %v3038
        %v3040 = vrot.slane %v3032, %v3039
        %v3042 = vunpack.c.l.s4 1983009808
        %v3043 = vunpack.c.0.s8 %v3042
        %v3044 = vlaneseq
        %v3045 = vshrl.u32 %v3044, 7
        %v3046 = vsub.s32 %v3043, %v3045
        %v3047 = vrot.slane %v3033, %v3046
        %v3048 = vcombine.low %v2815, %v2961
        %v3049 = vcombine.high %v2815, %v2961
        %v3051 = vunpack.c.l.s4 1983009808
        %v3052 = vunpack.c.0.s8 %v3051
        %v3053 = vlaneseq
        %v3054 = vshrl.u32 %v3053, 7
        %v3055 = vsub.s32 %v3052, %v3054
        %v3056 = vrot.slane %v3048, %v3055
        %v3058 = vunpack.c.l.s4 1983009808
        %v3059 = vunpack.c.0.s8 %v3058
        %v3060 = vlaneseq
        %v3061 = vshrl.u32 %v3060, 7
        %v3062 = vsub.s32 %v3059, %v3061
        %v3063 = vrot.slane %v3049, %v3062
        %v3064 = vcombine.low %v3040, %v3056
        %v3065 = vcombine.high %v3040, %v3056
        %v3067 = vunpack.c.l.s4 1934713408
        %v3068 = vunpack.c.0.s8 %v3067
        %v3069 = vlaneseq
        %v3070 = vshrl.u32 %v3069, 7
        %v3071 = vsub.s32 %v3068, %v3070
        %v3072 = vrot.slane %v3064, %v3071
        %v3074 = vunpack.c.l.s4 1934713408
        %v3075 = vunpack.c.0.s8 %v3074
        %v3076 = vlaneseq
        %v3077 = vshrl.u32 %v3076, 7
        %v3078 = vsub.s32 %v3075, %v3077
        %v3079 = vrot.slane %v3065, %v3078
        %v3080 = vcombine.low %v3047, %v3063
        %v3081 = vcombine.high %v3047, %v3063
        %v3083 = vunpack.c.l.s4 1934713408
        %v3084 = vunpack.c.0.s8 %v3083
        %v3085 = vlaneseq
        %v3086 = vshrl.u32 %v3085, 7
        %v3087 = vsub.s32 %v3084, %v3086
        %v3088 = vrot.slane %v3080, %v3087
        %v3090 = vunpack.c.l.s4 1934713408
        %v3091 = vunpack.c.0.s8 %v3090
        %v3092 = vlaneseq
        %v3093 = vshrl.u32 %v3092, 7
        %v3094 = vsub.s32 %v3091, %v3093
        %v3095 = vrot.slane %v3081, %v3094
        %v3096 = vcombine.high %v3072, 0.0
        %v3097 = vcombine.high %v3079, 0.0
        %v3098 = vcombine.high %v3088, 0.0
        %v3099 = vcombine.high %v3095, 0.0
        %v3100 = vcombine.low %v3004, %v3011
        %v3102 = vunpack.c.l.s4 1983009808
        %v3103 = vunpack.c.0.s8 %v3102
        %v3104 = vlaneseq
        %v3105 = vshrl.u32 %v3104, 7
        %v3106 = vsub.s32 %v3103, %v3105
        %v3107 = vrot.slane %v3100, %v3106
        %v3108 = vcombine.low %v3028, %v3029
        %v3110 = vunpack.c.l.s4 1983009808
        %v3111 = vunpack.c.0.s8 %v3110
        %v3112 = vlaneseq
        %v3113 = vshrl.u32 %v3112, 7
        %v3114 = vsub.s32 %v3111, %v3113
        %v3115 = vrot.slane %v3108, %v3114
        %v3116 = vcombine.low %v3020, %v3027
        %v3118 = vunpack.c.l.s4 1983009808
        %v3119 = vunpack.c.0.s8 %v3118
        %v3120 = vlaneseq
        %v3121 = vshrl.u32 %v3120, 7
        %v3122 = vsub.s32 %v3119, %v3121
        %v3123 = vrot.slane %v3116, %v3122
        %v3124 = vcombine.low %v3030, %v3031
        %v3126 = vunpack.c.l.s4 1983009808
        %v3127 = vunpack.c.0.s8 %v3126
        %v3128 = vlaneseq
        %v3129 = vshrl.u32 %v3128, 7
        %v3130 = vsub.s32 %v3127, %v3129
        %v3131 = vrot.slane %v3124, %v3130
        %v3132 = vcombine.low %v3107, %v3115
        %v3133 = vcombine.high %v3107, %v3115
        %v3135 = vunpack.c.l.s4 1934713408
        %v3136 = vunpack.c.0.s8 %v3135
        %v3137 = vlaneseq
        %v3138 = vshrl.u32 %v3137, 7
        %v3139 = vsub.s32 %v3136, %v3138
        %v3140 = vrot.slane %v3132, %v3139
        %v3142 = vunpack.c.l.s4 1934713408
        %v3143 = vunpack.c.0.s8 %v3142
        %v3144 = vlaneseq
        %v3145 = vshrl.u32 %v3144, 7
        %v3146 = vsub.s32 %v3143, %v3145
        %v3147 = vrot.slane %v3133, %v3146
        %v3148 = vcombine.low %v3123, %v3131
        %v3149 = vcombine.high %v3123, %v3131
        %v3151 = vunpack.c.l.s4 1934713408
        %v3152 = vunpack.c.0.s8 %v3151
        %v3153 = vlaneseq
        %v3154 = vshrl.u32 %v3153, 7
        %v3155 = vsub.s32 %v3152, %v3154
        %v3156 = vrot.slane %v3148, %v3155
        %v3158 = vunpack.c.l.s4 1934713408
        %v3159 = vunpack.c.0.s8 %v3158
        %v3160 = vlaneseq
        %v3161 = vshrl.u32 %v3160, 7
        %v3162 = vsub.s32 %v3159, %v3161
        %v3163 = vrot.slane %v3149, %v3162
        %v3164 = vcombine.low %v3140, %v3156
        %v3165 = vcombine.high %v3140, %v3156
        %v3166 = vcombine.low %v3147, %v3163
        %v3167 = vcombine.high %v3147, %v3163
        %v3168 = vcombine.low %v3072, %v3079
        %v3170 = vunpack.c.l.s4 1983009808
        %v3171 = vunpack.c.0.s8 %v3170
        %v3172 = vlaneseq
        %v3173 = vshrl.u32 %v3172, 7
        %v3174 = vsub.s32 %v3171, %v3173
        %v3175 = vrot.slane %v3168, %v3174
        %v3176 = vcombine.low %v3096, %v3097
        %v3178 = vunpack.c.l.s4 1983009808
        %v3179 = vunpack.c.0.s8 %v3178
        %v3180 = vlaneseq
        %v3181 = vshrl.u32 %v3180, 7
        %v3182 = vsub.s32 %v3179, %v3181
        %v3183 = vrot.slane %v3176, %v3182
        %v3184 = vcombine.low %v3088, %v3095
        %v3186 = vunpack.c.l.s4 1983009808
        %v3187 = vunpack.c.0.s8 %v3186
        %v3188 = vlaneseq
        %v3189 = vshrl.u32 %v3188, 7
        %v3190 = vsub.s32 %v3187, %v3189
        %v3191 = vrot.slane %v3184, %v3190
        %v3192 = vcombine.low %v3098, %v3099
        %v3194 = vunpack.c.l.s4 1983009808
        %v3195 = vunpack.c.0.s8 %v3194
        %v3196 = vlaneseq
        %v3197 = vshrl.u32 %v3196, 7
        %v3198 = vsub.s32 %v3195, %v3197
        %v3199 = vrot.slane %v3192, %v3198
        %v3200 = vcombine.low %v3175, %v3183
        %v3201 = vcombine.high %v3175, %v3183
        %v3203 = vunpack.c.l.s4 1934713408
        %v3204 = vunpack.c.0.s8 %v3203
        %v3205 = vlaneseq
        %v3206 = vshrl.u32 %v3205, 7
        %v3207 = vsub.s32 %v3204, %v3206
        %v3208 = vrot.slane %v3200, %v3207
        %v3210 = vunpack.c.l.s4 1934713408
        %v3211 = vunpack.c.0.s8 %v3210
        %v3212 = vlaneseq
        %v3213 = vshrl.u32 %v3212, 7
        %v3214 = vsub.s32 %v3211, %v3213
        %v3215 = vrot.slane %v3201, %v3214
        %v3216 = vcombine.low %v3191, %v3199
        %v3217 = vcombine.high %v3191, %v3199
        %v3219 = vunpack.c.l.s4 1934713408
        %v3220 = vunpack.c.0.s8 %v3219
        %v3221 = vlaneseq
        %v3222 = vshrl.u32 %v3221, 7
        %v3223 = vsub.s32 %v3220, %v3222
        %v3224 = vrot.slane %v3216, %v3223
        %v3226 = vunpack.c.l.s4 1934713408
        %v3227 = vunpack.c.0.s8 %v3226
        %v3228 = vlaneseq
        %v3229 = vshrl.u32 %v3228, 7
        %v3230 = vsub.s32 %v3227, %v3229
        %v3231 = vrot.slane %v3217, %v3230
        %v3232 = vcombine.low %v3208, %v3224
        %v3233 = vcombine.high %v3208, %v3224
        %v3234 = vcombine.low %v3215, %v3231
        %v3235 = vcombine.high %v3215, %v3231
        %3238 = vrot.lane.b32.xlu0 %v3165, 32
        %v3239 = vpop.permute.xlu0 %3238
        %3240 = vrot.lane.b32.xlu0 %v3233, 32
        %v3241 = vpop.permute.xlu0 %3240
        %3246 = vrot.lane.b32.xlu0 %v3166, 64
        %v3247 = vpop.permute.xlu0 %3246
        %3248 = vrot.lane.b32.xlu0 %v3234, 64
        %v3249 = vpop.permute.xlu0 %3248
        %3254 = vrot.lane.b32.xlu0 %v3167, 96
        %v3255 = vpop.permute.xlu0 %3254
        %3256 = vrot.lane.b32.xlu0 %v3235, 96
        %v3257 = vpop.permute.xlu0 %3256
        %v3260 = vsel %vm1682, %v3164, %v3239
        %v3261 = vsel %vm1682, %v3232, %v3241
        %vm3262 = vcmask 523264
        %v3263 = vsel %vm3262, %v3260, %v3247
        %v3264 = vsel %vm3262, %v3261, %v3249
        %vm3265 = vcmask 785408
        %v3266 = vsel %vm3265, %v3263, %v3255
        %v3267 = vsel %vm3265, %v3264, %v3257
        %v3268 = vld [vmem:[#allocation8] sm:$0xff]
        %v3269 = vld [vmem:[#allocation8 + $0x8] sm:$0xff]
        %v3270 = vld [vmem:[#allocation8 + $0x10] sm:$0xff]
        %v3271 = vld [vmem:[#allocation8 + $0x18] sm:$0xff]
        %v3272 = vld [vmem:[#allocation8 + $0x20] sm:$0xff]
        %v3273 = vld [vmem:[#allocation8 + $0x28] sm:$0xff]
        %v3274 = vld [vmem:[#allocation8 + $0x30] sm:$0xff]
        %v3275 = vld [vmem:[#allocation8 + $0x38] sm:$0xff]
        %v3276 = vld [vmem:[#allocation8 + $0x40] sm:$0xff]
        %v3277 = vld [vmem:[#allocation8 + $0x48] sm:$0xff]
        %v3278 = vld [vmem:[#allocation8 + $0x50] sm:$0xff]
        %v3279 = vld [vmem:[#allocation8 + $0x58] sm:$0xff]
        %v3280 = vld [vmem:[#allocation8 + $0x60] sm:$0xff]
        %v3281 = vld [vmem:[#allocation8 + $0x68] sm:$0xff]
        %v3282 = vld [vmem:[#allocation8 + $0x70] sm:$0xff]
        %v3283 = vld [vmem:[#allocation8 + $0x78] sm:$0xff]
        %v3284 = vld [vmem:[%s6] sm:$0x1]
        %v3286 = vlaneseq
        %v3287 = vshrl.u32 %v3286, 7
        %v3288 = vsub.s32 0, %v3287
        %v3289 = vrot.slane %v3284, %v3288
        %3291 = vmatprep.subr.mxu0 0.0
        %3292 = vmatpush1.msra.mxu0 %v3283
        %3293 = vmatprep.subr.mxu0 0.0
        %3294 = vmatpush1.msra.mxu0 %v3282
        %3295 = vmatprep.subr.mxu0 0.0
        %3296 = vmatpush1.msra.mxu0 %v3281
        %3297 = vmatprep.subr.mxu0 0.0
        %3298 = vmatpush1.msra.mxu0 %v3280
        %3299 = vmatprep.subr.mxu0 0.0
        %3300 = vmatpush1.msra.mxu0 %v3279
        %3301 = vmatprep.subr.mxu0 0.0
        %3302 = vmatpush1.msra.mxu0 %v3278
        %3303 = vmatprep.subr.mxu0 0.0
        %3304 = vmatpush1.msra.mxu0 %v3277
        %3305 = vmatprep.subr.mxu0 0.0
        %3306 = vmatpush1.msra.mxu0 %v3276
        %3307 = vmatprep.subr.mxu0 0.0
        %3308 = vmatpush1.msra.mxu0 %v3275
        %3309 = vmatprep.subr.mxu0 0.0
        %3310 = vmatpush1.msra.mxu0 %v3274
        %3311 = vmatprep.subr.mxu0 0.0
        %3312 = vmatpush1.msra.mxu0 %v3273
        %3313 = vmatprep.subr.mxu0 0.0
        %3314 = vmatpush1.msra.mxu0 %v3272
        %3315 = vmatprep.subr.mxu0 0.0
        %3316 = vmatpush1.msra.mxu0 %v3271
        %3317 = vmatprep.subr.mxu0 0.0
        %3318 = vmatpush1.msra.mxu0 %v3270
        %3319 = vmatprep.subr.mxu0 0.0
        %3320 = vmatpush1.msra.mxu0 %v3269
        %3321 = vmatprep.subr.mxu0 0.0
        %3322 = vmatpush1.msra.mxu0 %v3268
        %3323 = vmatprep.subr.mxu0 0.0
        %3324 = vmatpush2.msra.mxu0 0.0
        %3325 = vmatprep.subr.mxu0 0.0
        %3326 = vmatpush2.msra.mxu0 0.0
        %3327 = vmatprep.subr.mxu0 0.0
        %3328 = vmatpush2.msra.mxu0 0.0
        %3329 = vmatprep.subr.mxu0 0.0
        %3330 = vmatpush2.msra.mxu0 0.0
        %3331 = vmatprep.subr.mxu0 0.0
        %3332 = vmatpush2.msra.mxu0 0.0
        %3333 = vmatprep.subr.mxu0 0.0
        %3334 = vmatpush2.msra.mxu0 0.0
        %3335 = vmatprep.subr.mxu0 0.0
        %3336 = vmatpush2.msra.mxu0 0.0
        %3337 = vmatprep.subr.mxu0 0.0
        %3338 = vmatpush2.msra.mxu0 0.0
        %3339 = vmatprep.subr.mxu0 0.0
        %3340 = vmatpush2.msra.mxu0 0.0
        %3341 = vmatprep.subr.mxu0 0.0
        %3342 = vmatpush2.msra.mxu0 0.0
        %3343 = vmatprep.subr.mxu0 0.0
        %3344 = vmatpush2.msra.mxu0 0.0
        %3345 = vmatprep.subr.mxu0 0.0
        %3346 = vmatpush2.msra.mxu0 0.0
        %3347 = vmatprep.subr.mxu0 0.0
        %3348 = vmatpush2.msra.mxu0 0.0
        %3349 = vmatprep.subr.mxu0 0.0
        %3350 = vmatpush2.msra.mxu0 0.0
        %3351 = vmatprep.subr.mxu0 0.0
        %3352 = vmatpush2.msra.mxu0 0.0
        %3353 = vmatprep.subr.mxu0 0.0
        %3354 = vmatpush2.msra.mxu0 0.0
        %3355 = vmatprep.mubr.f32.mxu0 0.0
        %3356 = vmatmul.mubr.f32.gmra.mxu0 %v3266
        %v3357 = vpop.f32.mrf.mxu0
        %v3358 = vadd.f32 %v3289, %v3357
        %v3359 = vpop.f32.mrf.mxu0
        %3360 = vmatprep.mubr.f32.mxu0 0.0
        %3361 = vmatmul.mubr.f32.gmra.mxu0 %v3267
        %v3362 = vpop.f32.mrf.mxu0
        %v3363 = vadd.f32 %v3289, %v3362
        %v3364 = vpop.f32.mrf.mxu0
        %3365 = vdwg.mxu0
        %v3366 = vld [vmem:[#allocation10] sm:$0xff]
        %v3367 = vld [vmem:[#allocation10 + $0x8] sm:$0xff]
        %v3368 = vld [vmem:[#allocation10 + $0x10] sm:$0xff]
        %v3369 = vld [vmem:[#allocation10 + $0x18] sm:$0xff]
        %v3370 = vld [vmem:[#allocation10 + $0x20] sm:$0xff]
        %v3371 = vld [vmem:[#allocation10 + $0x28] sm:$0xff]
        %v3372 = vld [vmem:[#allocation10 + $0x30] sm:$0xff]
        %v3373 = vld [vmem:[#allocation10 + $0x38] sm:$0xff]
        %v3374 = vld [vmem:[#allocation10 + $0x40] sm:$0xff]
        %v3375 = vld [vmem:[#allocation10 + $0x48] sm:$0xff]
        %v3376 = vld [vmem:[#allocation10 + $0x50] sm:$0xff]
        %v3377 = vld [vmem:[#allocation10 + $0x58] sm:$0xff]
        %v3378 = vld [vmem:[#allocation10 + $0x60] sm:$0xff]
        %v3379 = vld [vmem:[#allocation10 + $0x68] sm:$0xff]
        %v3380 = vld [vmem:[#allocation10 + $0x70] sm:$0xff]
        %v3381 = vld [vmem:[#allocation10 + $0x78] sm:$0xff]
        %v3382 = vld [vmem:[#allocation11] sm:$0xff]
        %v3383 = vld [vmem:[#allocation11 + $0x8] sm:$0xff]
        %v3384 = vld [vmem:[#allocation11 + $0x10] sm:$0xff]
        %v3385 = vld [vmem:[#allocation11 + $0x18] sm:$0xff]
        %v3386 = vld [vmem:[#allocation11 + $0x20] sm:$0xff]
        %v3387 = vld [vmem:[#allocation11 + $0x28] sm:$0xff]
        %v3388 = vld [vmem:[#allocation11 + $0x30] sm:$0xff]
        %v3389 = vld [vmem:[#allocation11 + $0x38] sm:$0xff]
        %v3390 = vld [vmem:[#allocation11 + $0x40] sm:$0xff]
        %v3391 = vld [vmem:[#allocation11 + $0x48] sm:$0xff]
        %v3392 = vld [vmem:[#allocation11 + $0x50] sm:$0xff]
        %v3393 = vld [vmem:[#allocation11 + $0x58] sm:$0xff]
        %v3394 = vld [vmem:[#allocation11 + $0x60] sm:$0xff]
        %v3395 = vld [vmem:[#allocation11 + $0x68] sm:$0xff]
        %v3396 = vld [vmem:[#allocation11 + $0x70] sm:$0xff]
        %v3397 = vld [vmem:[#allocation11 + $0x78] sm:$0xff]
        %3398 = vmatprep.subr.mxu0 0.0
        %3399 = vmatpush1.msra.mxu0 %v3397
        %3400 = vmatprep.subr.mxu0 0.0
        %3401 = vmatpush1.msra.mxu0 %v3396
        %3402 = vmatprep.subr.mxu0 0.0
        %3403 = vmatpush1.msra.mxu0 %v3395
        %3404 = vmatprep.subr.mxu0 0.0
        %3405 = vmatpush1.msra.mxu0 %v3394
        %3406 = vmatprep.subr.mxu0 0.0
        %3407 = vmatpush1.msra.mxu0 %v3393
        %3408 = vmatprep.subr.mxu0 0.0
        %3409 = vmatpush1.msra.mxu0 %v3392
        %3410 = vmatprep.subr.mxu0 0.0
        %3411 = vmatpush1.msra.mxu0 %v3391
        %3412 = vmatprep.subr.mxu0 0.0
        %3413 = vmatpush1.msra.mxu0 %v3390
        %3414 = vmatprep.subr.mxu0 0.0
        %3415 = vmatpush1.msra.mxu0 %v3389
        %3416 = vmatprep.subr.mxu0 0.0
        %3417 = vmatpush1.msra.mxu0 %v3388
        %3418 = vmatprep.subr.mxu0 0.0
        %3419 = vmatpush1.msra.mxu0 %v3387
        %3420 = vmatprep.subr.mxu0 0.0
        %3421 = vmatpush1.msra.mxu0 %v3386
        %3422 = vmatprep.subr.mxu0 0.0
        %3423 = vmatpush1.msra.mxu0 %v3385
        %3424 = vmatprep.subr.mxu0 0.0
        %3425 = vmatpush1.msra.mxu0 %v3384
        %3426 = vmatprep.subr.mxu0 0.0
        %3427 = vmatpush1.msra.mxu0 %v3383
        %3428 = vmatprep.subr.mxu0 0.0
        %3429 = vmatpush1.msra.mxu0 %v3382
        %3430 = vmatprep.subr.mxu0 0.0
        %3431 = vmatpush2.msra.mxu0 0.0
        %3432 = vmatprep.subr.mxu0 0.0
        %3433 = vmatpush2.msra.mxu0 0.0
        %3434 = vmatprep.subr.mxu0 0.0
        %3435 = vmatpush2.msra.mxu0 0.0
        %3436 = vmatprep.subr.mxu0 0.0
        %3437 = vmatpush2.msra.mxu0 0.0
        %3438 = vmatprep.subr.mxu0 0.0
        %3439 = vmatpush2.msra.mxu0 0.0
        %3440 = vmatprep.subr.mxu0 0.0
        %3441 = vmatpush2.msra.mxu0 0.0
        %3442 = vmatprep.subr.mxu0 0.0
        %3443 = vmatpush2.msra.mxu0 0.0
        %3444 = vmatprep.subr.mxu0 0.0
        %3445 = vmatpush2.msra.mxu0 0.0
        %3446 = vmatprep.subr.mxu0 0.0
        %3447 = vmatpush2.msra.mxu0 0.0
        %3448 = vmatprep.subr.mxu0 0.0
        %3449 = vmatpush2.msra.mxu0 0.0
        %3450 = vmatprep.subr.mxu0 0.0
        %3451 = vmatpush2.msra.mxu0 0.0
        %3452 = vmatprep.subr.mxu0 0.0
        %3453 = vmatpush2.msra.mxu0 0.0
        %3454 = vmatprep.subr.mxu0 0.0
        %3455 = vmatpush2.msra.mxu0 0.0
        %3456 = vmatprep.subr.mxu0 0.0
        %3457 = vmatpush2.msra.mxu0 0.0
        %3458 = vmatprep.subr.mxu0 0.0
        %3459 = vmatpush2.msra.mxu0 0.0
        %3460 = vmatprep.subr.mxu0 0.0
        %3461 = vmatpush2.msra.mxu0 0.0
        %3462 = vmatprep.mubr.f32.mxu0 0.0
        %3463 = vmatmul.mubr.f32.gmra.mxu0 %v3358
        %v3464 = vpop.f32.mrf.mxu0
        %v3465 = vadd.f32 0.0, %v3464
        %v3466 = vpop.f32.mrf.mxu0
        %3467 = vmatprep.mubr.f32.mxu0 0.0
        %3468 = vmatmul.mubr.f32.gmra.mxu0 %v3363
        %v3469 = vpop.f32.mrf.mxu0
        %v3470 = vadd.f32 0.0, %v3469
        %v3471 = vpop.f32.mrf.mxu0
        %3472 = vdwg.mxu0
        %3473 = vmatprep.subr.mxu0 0.0
        %3474 = vmatpush1.msra.mxu0 %v3381
        %3475 = vmatprep.subr.mxu0 0.0
        %3476 = vmatpush1.msra.mxu0 %v3380
        %3477 = vmatprep.subr.mxu0 0.0
        %3478 = vmatpush1.msra.mxu0 %v3379
        %3479 = vmatprep.subr.mxu0 0.0
        %3480 = vmatpush1.msra.mxu0 %v3378
        %3481 = vmatprep.subr.mxu0 0.0
        %3482 = vmatpush1.msra.mxu0 %v3377
        %3483 = vmatprep.subr.mxu0 0.0
        %3484 = vmatpush1.msra.mxu0 %v3376
        %3485 = vmatprep.subr.mxu0 0.0
        %3486 = vmatpush1.msra.mxu0 %v3375
        %3487 = vmatprep.subr.mxu0 0.0
        %3488 = vmatpush1.msra.mxu0 %v3374
        %3489 = vmatprep.subr.mxu0 0.0
        %3490 = vmatpush1.msra.mxu0 %v3373
        %3491 = vmatprep.subr.mxu0 0.0
        %3492 = vmatpush1.msra.mxu0 %v3372
        %3493 = vmatprep.subr.mxu0 0.0
        %3494 = vmatpush1.msra.mxu0 %v3371
        %3495 = vmatprep.subr.mxu0 0.0
        %3496 = vmatpush1.msra.mxu0 %v3370
        %3497 = vmatprep.subr.mxu0 0.0
        %3498 = vmatpush1.msra.mxu0 %v3369
        %3499 = vmatprep.subr.mxu0 0.0
        %3500 = vmatpush1.msra.mxu0 %v3368
        %3501 = vmatprep.subr.mxu0 0.0
        %3502 = vmatpush1.msra.mxu0 %v3367
        %3503 = vmatprep.subr.mxu0 0.0
        %3504 = vmatpush1.msra.mxu0 %v3366
        %3505 = vmatprep.subr.mxu0 0.0
        %3506 = vmatpush2.msra.mxu0 0.0
        %3507 = vmatprep.subr.mxu0 0.0
        %3508 = vmatpush2.msra.mxu0 0.0
        %3509 = vmatprep.subr.mxu0 0.0
        %3510 = vmatpush2.msra.mxu0 0.0
        %3511 = vmatprep.subr.mxu0 0.0
        %3512 = vmatpush2.msra.mxu0 0.0
        %3513 = vmatprep.subr.mxu0 0.0
        %3514 = vmatpush2.msra.mxu0 0.0
        %3515 = vmatprep.subr.mxu0 0.0
        %3516 = vmatpush2.msra.mxu0 0.0
        %3517 = vmatprep.subr.mxu0 0.0
        %3518 = vmatpush2.msra.mxu0 0.0
        %3519 = vmatprep.subr.mxu0 0.0
        %3520 = vmatpush2.msra.mxu0 0.0
        %3521 = vmatprep.subr.mxu0 0.0
        %3522 = vmatpush2.msra.mxu0 0.0
        %3523 = vmatprep.subr.mxu0 0.0
        %3524 = vmatpush2.msra.mxu0 0.0
        %3525 = vmatprep.subr.mxu0 0.0
        %3526 = vmatpush2.msra.mxu0 0.0
        %3527 = vmatprep.subr.mxu0 0.0
        %3528 = vmatpush2.msra.mxu0 0.0
        %3529 = vmatprep.subr.mxu0 0.0
        %3530 = vmatpush2.msra.mxu0 0.0
        %3531 = vmatprep.subr.mxu0 0.0
        %3532 = vmatpush2.msra.mxu0 0.0
        %3533 = vmatprep.subr.mxu0 0.0
        %3534 = vmatpush2.msra.mxu0 0.0
        %3535 = vmatprep.subr.mxu0 0.0
        %3536 = vmatpush2.msra.mxu0 0.0
        %3537 = vmatprep.mubr.f32.mxu0 0.0
        %3538 = vmatmul.mubr.f32.gmra.mxu0 %v587
        %v3539 = vpop.f32.mrf.mxu0
        %v3540 = vadd.f32 %v3465, %v3539
        %v3541 = vpop.f32.mrf.mxu0
        %3542 = vmatprep.mubr.f32.mxu0 0.0
        %3543 = vmatmul.mubr.f32.gmra.mxu0 %v588
        %v3544 = vpop.f32.mrf.mxu0
        %v3545 = vadd.f32 %v3470, %v3544
        %v3546 = vpop.f32.mrf.mxu0
        %3547 = vdwg.mxu0
        %v3548 = vld [vmem:[%s9] sm:$0x1]
        %v3550 = vlaneseq
        %v3551 = vshrl.u32 %v3550, 7
        %v3552 = vsub.s32 0, %v3551
        %v3553 = vrot.slane %v3548, %v3552
        %v3555 = vadd.f32 %v3540, %v3553
        %v3556 = vadd.f32 %v3545, %v3553
        %v3557 = vxor.u32 %v3555, 2147483648
        %v3558 = vxor.u32 %v3556, 2147483648
        %v3559 = vmul.f32 %v3557, 1.442695
        %v3560 = vpow.pop %v3559
        %v3561 = vmul.f32 %v3558, 1.442695
        %v3562 = vpow.pop %v3561
        %v3563 = vadd.f32 %v3560, 1.0
        %v3564 = vadd.f32 %v3562, 1.0
        %v3565 = vrcp.pop %v3563
        %v3566 = vmul.f32 1.0, %v3565
        %v3567 = vrcp.pop %v3564
        %v3568 = vmul.f32 1.0, %v3567
        %v3569 = vmul.f32 %v3566, %v3358
        %v3570 = vmul.f32 %v3568, %v3363
        %v3571 = vadd.f32 %v587, %v3569
        %v3572 = vadd.f32 %v588, %v3570
        %v3573 = vmul.f32 %v3571, %v3571
        %v3574 = vmul.f32 %v3572, %v3572
        %v3575 = vrot.slane %v3573, 4
        %v3576 = vadd.f32 %v3573, %v3575
        %v3577 = vrot.slane %v3576, 2
        %v3578 = vadd.f32 %v3576, %v3577
        %v3579 = vrot.slane %v3578, 1
        %v3580 = vadd.f32 %v3578, %v3579
        %v3581 = vrot.slane %v3574, 4
        %v3582 = vadd.f32 %v3574, %v3581
        %v3583 = vrot.slane %v3582, 2
        %v3584 = vadd.f32 %v3582, %v3583
        %v3585 = vrot.slane %v3584, 1
        %v3586 = vadd.f32 %v3584, %v3585
        %v3587 = vrsqrt.pop %v3580
        %v3588 = vmul.f32 %v3580, %v3587
        %vm3589 = vcmp.eq.f32.partialorder %v3580, inf
        %v3590 = vsel %vm3589, %v3580, %v3588
        %vm3591 = vcmp.eq.f32.partialorder %v3580, 0.0
        %v3592 = vand.u32 %v3580, 2147483648
        %v3593 = vsel %vm3591, %v3592, %v3590
        %v3594 = vrsqrt.pop %v3586
        %v3595 = vmul.f32 %v3586, %v3594
        %vm3596 = vcmp.eq.f32.partialorder %v3586, inf
        %v3597 = vsel %vm3596, %v3586, %v3595
        %vm3598 = vcmp.eq.f32.partialorder %v3586, 0.0
        %v3599 = vand.u32 %v3586, 2147483648
        %v3600 = vsel %vm3598, %v3599, %v3597
        %v3601 = vadd.f32 %v3593, 1e-08
        %v3602 = vadd.f32 %v3600, 1e-08
        %v3603 = vrcp.pop %v3601
        %v3604 = vmul.f32 1.0, %v3603
        %v3605 = vrcp.pop %v3602
        %v3606 = vmul.f32 1.0, %v3605
        %v3607 = vmul.f32 %v3571, %v3604
        %v3608 = vmul.f32 %v3572, %v3606
        %3609 = vst [vmem:[%s450] sm:$0xff] %v3607
        %3610 = vst [vmem:[%s450 + $0x8] sm:$0xff] %v3608
        %s3611 = sand.u32 %s253, 1
        %s3612 = scalar_lea.sflag [#allocation4], %s3611
        %s3613 = sand.u32 %s253, 1
        %s3614 = smul.addr %s3613, 16
        %s3615 = scalar_lea.vmem [#allocation13], %s3614
        // Predicated region
        $region85: #{tpu_custom_call.1} parent=59 // pred_check
          %p3616 = pneg %p263
        $region86: #{tpu_custom_call.1} parent=59 // pred_check_branch
          %3618 = sbr.rel (%p3616) target = $region88
        $region87: #{tpu_custom_call.1} parent=59 // pred_region
          %s3619 = smul.u32 2, %s30
          %s3621 = ssub.s32 256, 256
          %3622 = vsyncadd %s3612, %s3621
          %s3623 = smul.addr %s3619, 128
          %s3624 = scalar_lea.hbm %s10, %s3623
          %s3625 = sshll.u32 %s3615, 4
          %s3626 = int_to_ptr.vmem [resolvable:$true] %s3625
          %3631 = dma.vmem_to_hbm [thread:$0]  %s3626, 256, %s3624, %s3612, 128, 128, 8
        $region88: #{tpu_custom_call.1} parent=59 // pred_fallthru
          _
      $region60: #{tpu_custom_call.1} parent=5 // pred_fallthru
        _
      %p3632 = scmp.le.s32.totalorder 2, %s25
      // Predicated region
      $region89: #{tpu_custom_call.1} parent=5 // pred_check
        %p3633 = pneg %p3632
      $region90: #{tpu_custom_call.1} parent=5 // pred_check_branch
        %3635 = sbr.rel (%p3633) target = $region92
      $region91: #{tpu_custom_call.1} parent=5 // pred_region
        %s3636 = ssub.s32 %s25, 2
        // Predicated region
        $region93: #{tpu_custom_call.1} parent=91 // pred_check
          %p3637 = pneg %p269
        $region94: #{tpu_custom_call.1} parent=91 // pred_check_branch
          %3639 = sbr.rel (%p3637) target = $region96
        $region95: #{tpu_custom_call.1} parent=91 // pred_region
          %s3640 = sand.u32 %s254, 1
          %s3641 = scalar_lea.sflag [#allocation4], %s3640
          %s3642 = sand.u32 %s254, 1
          %s3643 = smul.addr %s3642, 16
          %s3644 = scalar_lea.vmem [#allocation13], %s3643
          %3645 = dma.done %s3641, 256
        $region96: #{tpu_custom_call.1} parent=91 // pred_fallthru
          _
      $region92: #{tpu_custom_call.1} parent=5 // pred_fallthru
        _
    $region6: #{tpu_custom_call.1} parent=1 // loop_footer
      %s29 = sadd.s32 1, %s25
    $region7: #{tpu_custom_call.1} parent=1 // loop_footer_branch
      %24 = sbr.rel target = $region3
    $region8: #{tpu_custom_call.1} parent=1 // loop_exit
      _
    %3646 = vsyncpa [#allocation3], 1
    %s3647 = scalar_lea.sflag [#allocation3], 1
    %3648 = vsyncpa %s3647, 1
    %3649 = vsyncpa [#allocation6], 1
    %3650 = vsyncpa [#allocation9], 1
    %3651 = vsyncpa [#allocation12], 1
    %3652 = vsyncpa [#allocation4], 1
    %s3653 = scalar_lea.sflag [#allocation4], 1
    %3654 = vsyncpa %s3653, 1

</llo_original>
